<compile_context>
chip_gen: v7x
topology: tpu7x:2x2x1
jax: 0.10.0
libtpu: 0.0.40
codegen_flags: <defaults>
</compile_context>

<pallas_src>
import math
import functools

import jax
import jax.numpy as jnp
from jax.experimental import pallas as pl
from jax.experimental.pallas import tpu as pltpu


# ----------------------------- in-kernel helpers -----------------------------

def _layer_norm(x, g, b, eps):
    mu = jnp.mean(x, axis=-1, keepdims=True)
    xc = x - mu
    var = jnp.mean(xc * xc, axis=-1, keepdims=True)
    return xc * jax.lax.rsqrt(var + eps) * g + b


def _mha_fused(q, k, v, *, bblk, s_q, s_kv, nhead, dh):
    """Multi-head attention, batched over (head, batch-block).

    Head-major layout built with one reshape + one transpose per tensor (no per-head
    Python loops).  q (scale already folded), k, v: (bblk*seq, E) f32.
    Returns (context (bblk*s_q, E) f32, head-averaged probs (bblk, s_q, s_kv) f32).
    """
    rows_q = bblk * s_q
    hb = nhead * bblk

    def split(x, s):
        # (bblk*s, nhead*dh) -> (nhead*bblk, s, dh)
        xh = jnp.transpose(x.reshape(bblk * s, nhead, dh), (1, 0, 2))
        return xh.reshape(hb, s, dh)

    qh, kh, vh = split(q, s_q), split(k, s_kv), split(v, s_kv)

    s = jnp.einsum('bqd,bkd->bqk', qh.astype(jnp.bfloat16), kh.astype(jnp.bfloat16),
                   preferred_element_type=jnp.float32)               # (H*B, s_q, s_kv)
    s = s - jnp.max(s, axis=-1, keepdims=True)
    e = jnp.exp(s)
    p = e * pl.reciprocal(jnp.sum(e, axis=-1, keepdims=True), approx=True)

    ctx = jnp.einsum('bqk,bkd->bqd', p.astype(jnp.bfloat16), vh.astype(jnp.bfloat16),
                     preferred_element_type=jnp.float32)             # (H*B, s_q, dh)
    ctx = jnp.transpose(ctx.reshape(nhead, rows_q, dh), (1, 0, 2)).reshape(rows_q, nhead * dh)

    # head-averaged attention weights (PyTorch average_attn_weights=True)
    attn_w = jnp.mean(p.reshape(nhead, bblk, s_q, s_kv), axis=0)     # (B, s_q, s_kv)
    return ctx, attn_w


def _mha_loop(q, k, v, *, bblk, s_q, s_kv, nhead, dh):
    """Conservative fallback (previously validated lane-slice + concat layout)."""
    E = nhead * dh
    q3 = q.reshape(bblk, s_q, E)
    k3 = k.reshape(bblk, s_kv, E)
    v3 = v.reshape(bblk, s_kv, E)
    qh = jnp.concatenate([q3[:, :, h * dh:(h + 1) * dh] for h in range(nhead)], axis=0)
    kh = jnp.concatenate([k3[:, :, h * dh:(h + 1) * dh] for h in range(nhead)], axis=0)
    vh = jnp.concatenate([v3[:, :, h * dh:(h + 1) * dh] for h in range(nhead)], axis=0)

    s = jnp.einsum('bqd,bkd->bqk', qh.astype(jnp.bfloat16), kh.astype(jnp.bfloat16),
                   preferred_element_type=jnp.float32)
    s = s - jnp.max(s, axis=-1, keepdims=True)
    e = jnp.exp(s)
    p = e * pl.reciprocal(jnp.sum(e, axis=-1, keepdims=True), approx=True)

    ctx = jnp.einsum('bqk,bkd->bqd', p.astype(jnp.bfloat16), vh.astype(jnp.bfloat16),
                     preferred_element_type=jnp.float32)
    out = jnp.concatenate(
        [ctx[h * bblk:(h + 1) * bblk].reshape(bblk * s_q, dh) for h in range(nhead)],
        axis=-1)
    attn_w = jnp.mean(p.reshape(nhead, bblk, s_q, s_kv), axis=0)
    return out, attn_w


# --------------------------------- kernel ------------------------------------

def _decoder_kernel(
        tgt_ref, qpos_ref, mem_ref, mpos_ref,
        sa_w_ref, sa_b_ref, sa_ow_ref, sa_ob_ref,
        ca_w_ref, ca_b_ref, ca_ow_ref, ca_ob_ref,
        w1_ref, b1_ref, w2_ref, b2_ref,
        ln1g_ref, ln1b_ref, ln2g_ref, ln2b_ref, ln3g_ref, ln3b_ref,
        fng_ref, fnb_ref,
        out_ref, sa_att_ref, ca_att_ref,
        x_sc, memk_sc, memv_sc,
        *, nhead, d_model, bblk, s_q, s_kv, has_final_norm,
        fused_heads, flat_attn, eps=1e-5):
    E = d_model
    dh = E // nhead
    rows_q = bblk * s_q
    rows_kv = bblk * s_kv
    layer = pl.program_id(1)
    n_layers = pl.num_programs(1)

    mha = functools.partial(_mha_fused if fused_heads else _mha_loop,
                            bblk=bblk, nhead=nhead, dh=dh)

    @pl.when(layer == 0)
    def _init():
        x_sc[...] = tgt_ref[...].reshape(rows_q, E).astype(jnp.float32)
        mem = mem_ref[...].reshape(rows_kv, E).astype(jnp.float32)
        mpos = mpos_ref[...].reshape(rows_kv, E).astype(jnp.float32)
        # layer-invariant cross-attention inputs, hoisted once per batch block
        memk_sc[...] = (mem + mpos).astype(jnp.bfloat16)
        memv_sc[...] = mem.astype(jnp.bfloat16)

    x = x_sc[...]                                                    # (rows_q, E) f32
    qpos = qpos_ref[...].reshape(rows_q, E).astype(jnp.float32)

    def store_attn(ref, p_avg, s_k):
        if flat_attn:
            ref[...] = p_avg.reshape(bblk, 1, s_q * s_k).astype(ref.dtype)
        else:
            ref[...] = p_avg.reshape(bblk, 1, s_q, s_k).astype(ref.dtype)

    # ----- self-attention: q = k = x + query_pos, v = x ---------------------
    w_sa = sa_w_ref[0]                                               # (E, 3E) bf16
    b_sa = sa_b_ref[0]                                               # (1, 3E) f32
    qk = jnp.dot((x + qpos).astype(jnp.bfloat16), w_sa[:, :2 * E],
                 preferred_element_type=jnp.float32) + b_sa[:, :2 * E]
    v_s = jnp.dot(x.astype(jnp.bfloat16), w_sa[:, 2 * E:],
                  preferred_element_type=jnp.float32) + b_sa[:, 2 * E:]
    sa_ctx, sa_p = mha(qk[:, :E], qk[:, E:], v_s, s_q=s_q, s_kv=s_q)
    sa_out = jnp.dot(sa_ctx.astype(jnp.bfloat16), sa_ow_ref[0],
                     preferred_element_type=jnp.float32) + sa_ob_ref[0]
    x1 = _layer_norm(x + sa_out, ln1g_ref[0], ln1b_ref[0], eps)
    store_attn(sa_att_ref, sa_p, s_q)

    # ----- cross-attention: q = x1 + query_pos, k = mem + pos, v = mem ------
    w_ca = ca_w_ref[0]
    b_ca = ca_b_ref[0]
    q_c = jnp.dot((x1 + qpos).astype(jnp.bfloat16), w_ca[:, :E],
                  preferred_element_type=jnp.float32) + b_ca[:, :E]
    k_c = jnp.dot(memk_sc[...], w_ca[:, E:2 * E],
                  preferred_element_type=jnp.float32) + b_ca[:, E:2 * E]
    v_c = jnp.dot(memv_sc[...], w_ca[:, 2 * E:],
                  preferred_element_type=jnp.float32) + b_ca[:, 2 * E:]
    ca_ctx, ca_p = mha(q_c, k_c, v_c, s_q=s_q, s_kv=s_kv)
    ca_out = jnp.dot(ca_ctx.astype(jnp.bfloat16), ca_ow_ref[0],
                     preferred_element_type=jnp.float32) + ca_ob_ref[0]
    x2 = _layer_norm(x1 + ca_out, ln2g_ref[0], ln2b_ref[0], eps)
    store_attn(ca_att_ref, ca_p, s_kv)

    # ----- FFN: linear1 -> relu -> linear2 ----------------------------------
    h1 = jnp.dot(x2.astype(jnp.bfloat16), w1_ref[0],
                 preferred_element_type=jnp.float32) + b1_ref[0]
    h1 = jnp.maximum(h1, 0.0)
    h2 = jnp.dot(h1.astype(jnp.bfloat16), w2_ref[0],
                 preferred_element_type=jnp.float32) + b2_ref[0]
    x3 = _layer_norm(x2 + h2, ln3g_ref[0], ln3b_ref[0], eps)

    x_sc[...] = x3                                                   # carry to next layer

    @pl.when(layer == n_layers - 1)
    def _finalize():
        y = x3
        if has_final_norm:
            y = _layer_norm(y, fng_ref[...], fnb_ref[...], eps)
        out_ref[...] = y.reshape(bblk, s_q, E).astype(out_ref.dtype)


# ----------------------------- wrapper: sizing --------------------------------

def _vmem_bytes_estimate(bblk, S, Sm, E, FF, nhead, in_bytes=4):
    """Rough per-grid-step VMEM footprint (double-buffered blocks + live intermediates)."""
    rows_q, rows_kv = bblk * S, bblk * Sm
    act_in = 2 * 2 * (rows_q + rows_kv) * E * in_bytes                    # tgt/qpos, mem/mpos
    weights = 2 * 2 * (2 * E * 3 * E + 2 * E * E + 2 * E * FF)            # bf16 weight slabs
    outs = 2 * (rows_q * E * in_bytes + rows_q * (S + Sm) * 2)            # out + bf16 attn maps
    scratch = rows_q * E * 4 + 2 * rows_kv * E * 2                        # x_sc, memk/memv
    live = (2 * nhead * bblk * S * (S + Sm)) * 4 \
        + rows_q * FF * 4 + (rows_q + rows_kv) * 3 * E * 4 + 6 * rows_q * E * 4
    return act_in + weights + outs + scratch + live


def _pick_batch_block(N, S, Sm, E, FF, nhead, *, target_rows=256,
                      vmem_budget=40 * 1024 * 1024):
    # Keep >= 2 steps on the "parallel" batch axis when possible (v7x has 2 TensorCores).
    max_b = max(1, N // 2) if N > 1 else 1
    best = 1
    for b in range(1, max_b + 1):
        if N % b:
            continue
        if _vmem_bytes_estimate(b, S, Sm, E, FF, nhead) > vmem_budget:
            break
        best = b
        if b * S >= target_rows:
            break
    return best


# ------------------------- one-time weight preparation -------------------------

def prepare_decoder_params(layer_params, nhead, norm_params=None,
                           compute_dtype=jnp.bfloat16):
    """One-time prep: stack per-layer weights, transpose to (in, out), fold 1/sqrt(dh)
    into the Q projection, cast matmul weights to bf16.  Call once, reuse per forward."""
    L = len(layer_params)
    E = layer_params[0]['sa_out_w'].shape[0]
    FF = layer_params[0]['w1'].shape[0]
    dh = E // nhead
    scale = 1.0 / math.sqrt(dh)

    def stack(name):
        return jnp.stack([p[name] for p in layer_params], axis=0)

    def prep_attn_w(w_stack, b_stack):
        # PyTorch in_proj_weight (3E, E) -> (E, 3E); fold scale into Q columns/bias.
        w_t = jnp.transpose(w_stack, (0, 2, 1))
        w_t = w_t.at[:, :, :E].multiply(scale)
        b = b_stack.reshape(L, 1, 3 * E)
        b = b.at[:, :, :E].multiply(scale)
        return w_t.astype(compute_dtype), b.astype(jnp.float32)

    sa_w, sa_b = prep_attn_w(stack('sa_in_w'), stack('sa_in_b'))
    ca_w, ca_b = prep_attn_w(stack('ca_in_w'), stack('ca_in_b'))

    prepared = {
        'nhead': nhead, 'E': E, 'FF': FF, 'L': L,
        'sa_w': sa_w, 'sa_b': sa_b,
        'sa_ow': jnp.transpose(stack('sa_out_w'), (0, 2, 1)).astype(compute_dtype),
        'sa_ob': stack('sa_out_b').reshape(L, 1, E).astype(jnp.float32),
        'ca_w': ca_w, 'ca_b': ca_b,
        'ca_ow': jnp.transpose(stack('ca_out_w'), (0, 2, 1)).astype(compute_dtype),
        'ca_ob': stack('ca_out_b').reshape(L, 1, E).astype(jnp.float32),
        'w1': jnp.transpose(stack('w1'), (0, 2, 1)).astype(compute_dtype),
        'b1': stack('b1').reshape(L, 1, FF).astype(jnp.float32),
        'w2': jnp.transpose(stack('w2'), (0, 2, 1)).astype(compute_dtype),
        'b2': stack('b2').reshape(L, 1, E).astype(jnp.float32),
    }
    for k in ('ln1_g', 'ln1_b', 'ln2_g', 'ln2_b', 'ln3_g', 'ln3_b'):
        prepared[k] = stack(k).reshape(L, 1, E).astype(jnp.float32)

    prepared['has_final_norm'] = norm_params is not None
    if norm_params is not None:
        prepared['fng'] = norm_params['g'].reshape(1, E).astype(jnp.float32)
        prepared['fnb'] = norm_params['b'].reshape(1, E).astype(jnp.float32)
    else:
        prepared['fng'] = jnp.ones((1, E), jnp.float32)
        prepared['fnb'] = jnp.zeros((1, E), jnp.float32)
    return prepared


# --------------------------------- pallas call ---------------------------------

def _decoder_call(p, tgt_b, qpos_b, mem_b, mpos_b, *,
                  attn_dtype, fused, bblk, vmem_limit_bytes):
    N, S, E = tgt_b.shape
    Sm = mem_b.shape[1]
    L, FF, nhead = p['L'], p['FF'], p['nhead']
    grid = (N // bblk, L)

    def bmap(blk):   # batch-blocked activations (same block across the layer axis)
        return pl.BlockSpec(blk, lambda b, l: (b, 0, 0))

    def lmap(blk):   # per-layer weight slabs
        return pl.BlockSpec(blk, lambda b, l: (l,) + (0,) * (len(blk) - 1))

    def fmap(blk):   # shared (final-norm) params
        return pl.BlockSpec(blk, lambda b, l: (0,) * len(blk))

    in_specs = [
        bmap((bblk, S, E)), bmap((bblk, S, E)),
        bmap((bblk, Sm, E)), bmap((bblk, Sm, E)),
        lmap((1, E, 3 * E)), lmap((1, 1, 3 * E)), lmap((1, E, E)), lmap((1, 1, E)),
        lmap((1, E, 3 * E)), lmap((1, 1, 3 * E)), lmap((1, E, E)), lmap((1, 1, E)),
        lmap((1, E, FF)), lmap((1, 1, FF)), lmap((1, FF, E)), lmap((1, 1, E)),
        lmap((1, 1, E)), lmap((1, 1, E)), lmap((1, 1, E)), lmap((1, 1, E)),
        lmap((1, 1, E)), lmap((1, 1, E)),
        fmap((1, E)), fmap((1, E)),
    ]

    if fused:
        # lane-dense flattened attention-map slabs (reshaped back in the wrapper for free)
        att_shapes = ((N, L, S * S), (N, L, S * Sm))
        att_specs = (pl.BlockSpec((bblk, 1, S * S), lambda b, l: (b, l, 0)),
                     pl.BlockSpec((bblk, 1, S * Sm), lambda b, l: (b, l, 0)))
    else:
        att_shapes = ((N, L, S, S), (N, L, S, Sm))
        att_specs = (pl.BlockSpec((bblk, 1, S, S), lambda b, l: (b, l, 0, 0)),
                     pl.BlockSpec((bblk, 1, S, Sm), lambda b, l: (b, l, 0, 0)))

    out_specs = (pl.BlockSpec((bblk, S, E), lambda b, l: (b, 0, 0)),) + att_specs
    out_shape = (jax.ShapeDtypeStruct((N, S, E), tgt_b.dtype),
                 jax.ShapeDtypeStruct(att_shapes[0], attn_dtype),
                 jax.ShapeDtypeStruct(att_shapes[1], attn_dtype))

    kernel = functools.partial(
        _decoder_kernel, nhead=nhead, d_model=E, bblk=bblk, s_q=S, s_kv=Sm,
        has_final_norm=p['has_final_norm'], fused_heads=fused, flat_attn=fused)

    out_b, sa_att, ca_att = pl.pallas_call(
        kernel,
        out_shape=out_shape,
        grid_spec=pltpu.PrefetchScalarGridSpec(
            num_scalar_prefetch=0,
            grid=grid,
            in_specs=in_specs,
            out_specs=out_specs,
            scratch_shapes=[pltpu.VMEM((bblk * S, E), jnp.float32),    # running activation
                            pltpu.VMEM((bblk * Sm, E), jnp.bfloat16),  # mem + pos (hoisted)
                            pltpu.VMEM((bblk * Sm, E), jnp.bfloat16)]  # mem (hoisted)
        ),
        compiler_params=pltpu.CompilerParams(
            dimension_semantics=("parallel", "arbitrary"),
            vmem_limit_bytes=vmem_limit_bytes),
    )(tgt_b, qpos_b, mem_b, mpos_b,
      p['sa_w'], p['sa_b'], p['sa_ow'], p['sa_ob'],
      p['ca_w'], p['ca_b'], p['ca_ow'], p['ca_ob'],
      p['w1'], p['b1'], p['w2'], p['b2'],
      p['ln1_g'], p['ln1_b'], p['ln2_g'], p['ln2_b'], p['ln3_g'], p['ln3_b'],
      p['fng'], p['fnb'])

    sa_att = sa_att.reshape(N, L, S, S)
    ca_att = ca_att.reshape(N, L, S, Sm)
    return out_b, [sa_att, ca_att]


def transformer_decoder_batch_major(prepared, tgt_b, memory_b,
                                    query_pos_b=None, pos_b=None, *,
                                    attn_dtype=jnp.bfloat16, fused_heads=None,
                                    target_rows=256,
                                    vmem_budget_bytes=40 * 1024 * 1024):
    """Batch-major entry point: tgt_b (N, S, E), memory_b (N, Sm, E).
    Returns (out_b (N, S, E), [self_att (N, L, S, S), cross_att (N, L, S, Sm)])."""
    N, S, E = tgt_b.shape
    Sm = memory_b.shape[1]
    if query_pos_b is None:
        query_pos_b = jnp.zeros_like(tgt_b)
    if pos_b is None:
        pos_b = jnp.zeros_like(memory_b)

    bblk = _pick_batch_block(N, S, Sm, E, prepared['FF'], prepared['nhead'],
                             target_rows=target_rows, vmem_budget=vmem_budget_bytes)
    est = _vmem_bytes_estimate(bblk, S, Sm, E, prepared['FF'], prepared['nhead'])
    vmem_limit = int(min(max(32 * 1024 * 1024, 2 * est), 64 * 1024 * 1024))

    call = functools.partial(_decoder_call, prepared, tgt_b, query_pos_b, memory_b, pos_b,
                             attn_dtype=attn_dtype, bblk=bblk, vmem_limit_bytes=vmem_limit)
    if fused_heads is None:
        try:
            return call(fused=True)
        except Exception:
            # Conservative fallback (previously validated head layout) if Mosaic rejects
            # the fused reshape/transpose layout; only reachable in eager mode.
            return call(fused=False)
    return call(fused=fused_heads)


def transformer_decoder(tgt, memory, layer_params, *, nhead,
                        pos=None, query_pos=None, norm_params=None,
                        prepared=None, attn_dtype=jnp.bfloat16):
    """tgt: (S, N, E), memory: (Sm, N, E) — PyTorch seq-first convention.

    Returns (output (1, S, N, E), [self_att (N, L, S, S), cross_att (N, L, S, Sm)]),
    mirroring TransformerDecoder.forward with return_intermediate=False.
    Attention maps are returned in bf16 (inference; halves HBM writeback traffic).
    """
    if prepared is None:
        prepared = prepare_decoder_params(layer_params, nhead, norm_params)
    if pos is None:
        pos = jnp.zeros_like(memory)
    if query_pos is None:
        query_pos = jnp.zeros_like(tgt)

    tgt_b = jnp.transpose(tgt, (1, 0, 2))
    qpos_b = jnp.transpose(query_pos, (1, 0, 2))
    mem_b = jnp.transpose(memory, (1, 0, 2))
    mpos_b = jnp.transpose(pos, (1, 0, 2))

    out_b, atts = transformer_decoder_batch_major(
        prepared, tgt_b, mem_b, qpos_b, mpos_b, attn_dtype=attn_dtype)

    output = jnp.transpose(out_b, (1, 0, 2))[None]      # (1, S, N, E) == output.unsqueeze(0)
    return output, atts


# ---------------------------- pure-JAX reference ------------------------------

def _reference(tgt, memory, layer_params, nhead, pos, query_pos, norm_params, eps=1e-5):
    S, N, E = tgt.shape
    dh = E // nhead

    def ln(x, g, b):
        mu = jnp.mean(x, axis=-1, keepdims=True)
        var = jnp.mean((x - mu) ** 2, axis=-1, keepdims=True)
        return (x - mu) * jax.lax.rsqrt(var + eps) * g + b

    def mha(q_in, k_in, v_in, wi, bi, wo, bo):
        q = q_in @ wi[:E].T + bi[:E]
        k = k_in @ wi[E:2 * E].T + bi[E:2 * E]
        v = v_in @ wi[2 * E:].T + bi[2 * E:]
        outs, ws = [], []
        for h in range(nhead):
            sl = slice(h * dh, (h + 1) * dh)
            s = (q[:, sl] / math.sqrt(dh)) @ k[:, sl].T
            a = jax.nn.softmax(s, axis=-1)
            ws.append(a)
            outs.append(a @ v[:, sl])
        out = jnp.concatenate(outs, -1) @ wo.T + bo
        return out, sum(ws) / nhead

    outs, sa_mats, ca_mats = [], [], []
    for n in range(N):
        x = tgt[:, n]
        m = memory[:, n]
        qp = query_pos[:, n]
        mp = pos[:, n]
        sa_per_layer, ca_per_layer = [], []
        for p in layer_params:
            sa, sa_w = mha(x + qp, x + qp, x, p['sa_in_w'], p['sa_in_b'],
                           p['sa_out_w'], p['sa_out_b'])
            x1 = ln(x + sa, p['ln1_g'], p['ln1_b'])
            ca, ca_w = mha(x1 + qp, m + mp, m, p['ca_in_w'], p['ca_in_b'],
                           p['ca_out_w'], p['ca_out_b'])
            x2 = ln(x1 + ca, p['ln2_g'], p['ln2_b'])
            h = jnp.maximum(x2 @ p['w1'].T + p['b1'], 0.0) @ p['w2'].T + p['b2']
            x = ln(x2 + h, p['ln3_g'], p['ln3_b'])
            sa_per_layer.append(sa_w)
            ca_per_layer.append(ca_w)
        if norm_params is not None:
            x = ln(x, norm_params['g'], norm_params['b'])
        outs.append(x)
        sa_mats.append(jnp.stack(sa_per_layer))
        ca_mats.append(jnp.stack(ca_per_layer))
    output = jnp.stack(outs, axis=1)[None]
    return output, [jnp.stack(sa_mats), jnp.stack(ca_mats)]


# ----------------------------------- test -------------------------------------

if __name__ == "__main__":
    S, Sm, N, E, NHEAD, FF, L = 8, 16, 2, 32, 4, 64, 2

    key = jax.random.PRNGKey(0)
    k_iter = iter(jax.random.split(key, 64))
    std = 0.05

    def rnd(shape):
        return std * jax.random.normal(next(k_iter), shape, jnp.float32)

    layer_params = []
    for _ in range(L):
        layer_params.append({
            'sa_in_w': rnd((3 * E, E)), 'sa_in_b': rnd((3 * E,)),
            'sa_out_w': rnd((E, E)), 'sa_out_b': rnd((E,)),
            'ca_in_w': rnd((3 * E, E)), 'ca_in_b': rnd((3 * E,)),
            'ca_out_w': rnd((E, E)), 'ca_out_b': rnd((E,)),
            'w1': rnd((FF, E)), 'b1': rnd((FF,)),
            'w2': rnd((E, FF)), 'b2': rnd((E,)),
            'ln1_g': jnp.ones((E,), jnp.float32), 'ln1_b': jnp.zeros((E,), jnp.float32),
            'ln2_g': jnp.ones((E,), jnp.float32), 'ln2_b': jnp.zeros((E,), jnp.float32),
            'ln3_g': jnp.ones((E,), jnp.float32), 'ln3_b': jnp.zeros((E,), jnp.float32),
        })
    norm_params = {'g': jnp.ones((E,), jnp.float32), 'b': jnp.zeros((E,), jnp.float32)}

    tgt = jax.random.normal(next(k_iter), (S, N, E), jnp.float32)
    memory = jax.random.normal(next(k_iter), (Sm, N, E), jnp.float32)
    query_pos = jax.random.normal(next(k_iter), (S, N, E), jnp.float32)
    pos = jax.random.normal(next(k_iter), (Sm, N, E), jnp.float32)

    # One-time weight preparation (stack / transpose / scale-fold / bf16 cast).
    prepared = prepare_decoder_params(layer_params, NHEAD, norm_params)

    out, att_mats = transformer_decoder(
        tgt, memory, layer_params, nhead=NHEAD,
        pos=pos, query_pos=query_pos, norm_params=norm_params, prepared=prepared)
    out = jax.block_until_ready(out)

    ref_out, ref_atts = _reference(tgt, memory, layer_params, NHEAD,
                                   pos, query_pos, norm_params)

    assert out.shape == (1, S, N, E), out.shape
    err = float(jnp.max(jnp.abs(out - ref_out)))
    # bf16 matmul inputs + approx reciprocal + bf16 attention maps -> loosened tolerance
    assert jnp.allclose(out, ref_out, atol=3e-2, rtol=3e-2), err
    for a, r in zip(att_mats, ref_atts):
        assert a.shape == r.shape, (a.shape, r.shape)
        a32 = a.astype(jnp.float32)
        aerr = float(jnp.max(jnp.abs(a32 - r)))
        assert jnp.allclose(a32, r, atol=3e-2, rtol=3e-2), aerr

    print("KERNEL_OK")
</pallas_src>

<mosaic_0001>
module attributes {stable_mosaic.version = 11 : i64} {
  func.func @_decoder_kernel(%arg0: i32, %arg1: i32, %arg2: memref<1x8x32xf32, #tpu.memory_space<vmem>>, %arg3: memref<1x8x32xf32, #tpu.memory_space<vmem>>, %arg4: memref<1x16x32xf32, #tpu.memory_space<vmem>>, %arg5: memref<1x16x32xf32, #tpu.memory_space<vmem>>, %arg6: memref<1x32x96xbf16, #tpu.memory_space<vmem>>, %arg7: memref<1x1x96xf32, #tpu.memory_space<vmem>>, %arg8: memref<1x32x32xbf16, #tpu.memory_space<vmem>>, %arg9: memref<1x1x32xf32, #tpu.memory_space<vmem>>, %arg10: memref<1x32x96xbf16, #tpu.memory_space<vmem>>, %arg11: memref<1x1x96xf32, #tpu.memory_space<vmem>>, %arg12: memref<1x32x32xbf16, #tpu.memory_space<vmem>>, %arg13: memref<1x1x32xf32, #tpu.memory_space<vmem>>, %arg14: memref<1x32x64xbf16, #tpu.memory_space<vmem>>, %arg15: memref<1x1x64xf32, #tpu.memory_space<vmem>>, %arg16: memref<1x64x32xbf16, #tpu.memory_space<vmem>>, %arg17: memref<1x1x32xf32, #tpu.memory_space<vmem>>, %arg18: memref<1x1x32xf32, #tpu.memory_space<vmem>>, %arg19: memref<1x1x32xf32, #tpu.memory_space<vmem>>, %arg20: memref<1x1x32xf32, #tpu.memory_space<vmem>>, %arg21: memref<1x1x32xf32, #tpu.memory_space<vmem>>, %arg22: memref<1x1x32xf32, #tpu.memory_space<vmem>>, %arg23: memref<1x1x32xf32, #tpu.memory_space<vmem>>, %arg24: memref<1x32xf32, #tpu.memory_space<vmem>>, %arg25: memref<1x32xf32, #tpu.memory_space<vmem>>, %arg26: memref<1x8x32xf32, #tpu.memory_space<vmem>>, %arg27: memref<1x1x8x8xbf16, #tpu.memory_space<vmem>>, %arg28: memref<1x1x8x16xbf16, #tpu.memory_space<vmem>>, %arg29: memref<8x32xf32, #tpu.memory_space<vmem>>, %arg30: memref<16x32xbf16, #tpu.memory_space<vmem>>, %arg31: memref<16x32xbf16, #tpu.memory_space<vmem>>) attributes {dimension_semantics = [#tpu.dimension_semantics<parallel>, #tpu.dimension_semantics<arbitrary>], iteration_bounds = array<i64: 2, 2>, scalar_prefetch = 0 : i64, scratch_operands = 3 : i64, tpu.core_type = #tpu.core_type<tc>, window_params = [{transform_indices = @transform_0, window_bounds = array<i64: 1, 8, 32>}, {transform_indices = @transform_1, window_bounds = array<i64: 1, 8, 32>}, {transform_indices = @transform_2, window_bounds = array<i64: 1, 16, 32>}, {transform_indices = @transform_3, window_bounds = array<i64: 1, 16, 32>}, {transform_indices = @transform_4, window_bounds = array<i64: 1, 32, 96>}, {transform_indices = @transform_5, window_bounds = array<i64: 1, 1, 96>}, {transform_indices = @transform_6, window_bounds = array<i64: 1, 32, 32>}, {transform_indices = @transform_7, window_bounds = array<i64: 1, 1, 32>}, {transform_indices = @transform_8, window_bounds = array<i64: 1, 32, 96>}, {transform_indices = @transform_9, window_bounds = array<i64: 1, 1, 96>}, {transform_indices = @transform_10, window_bounds = array<i64: 1, 32, 32>}, {transform_indices = @transform_11, window_bounds = array<i64: 1, 1, 32>}, {transform_indices = @transform_12, window_bounds = array<i64: 1, 32, 64>}, {transform_indices = @transform_13, window_bounds = array<i64: 1, 1, 64>}, {transform_indices = @transform_14, window_bounds = array<i64: 1, 64, 32>}, {transform_indices = @transform_15, window_bounds = array<i64: 1, 1, 32>}, {transform_indices = @transform_16, window_bounds = array<i64: 1, 1, 32>}, {transform_indices = @transform_17, window_bounds = array<i64: 1, 1, 32>}, {transform_indices = @transform_18, window_bounds = array<i64: 1, 1, 32>}, {transform_indices = @transform_19, window_bounds = array<i64: 1, 1, 32>}, {transform_indices = @transform_20, window_bounds = array<i64: 1, 1, 32>}, {transform_indices = @transform_21, window_bounds = array<i64: 1, 1, 32>}, {pipeline_mode = #tpu.pipeline_mode<synchronous>, transform_indices = @transform_22, window_bounds = array<i64: 1, 32>}, {pipeline_mode = #tpu.pipeline_mode<synchronous>, transform_indices = @transform_23, window_bounds = array<i64: 1, 32>}, {transform_indices = @transform_24, window_bounds = array<i64: 1, 8, 32>}, {transform_indices = @transform_25, window_bounds = array<i64: 1, 1, 8, 8>}, {transform_indices = @transform_26, window_bounds = array<i64: 1, 1, 8, 16>}]} {
    %c0_i32 = arith.constant 0 : i32
    %0 = arith.cmpi eq, %arg1, %c0_i32 : i32
    %1 = arith.extui %0 : i1 to i32
    %c0_i32_0 = arith.constant 0 : i32
    %2 = arith.cmpi ne, %1, %c0_i32_0 : i32
    scf.if %2 {
      %c0_110 = arith.constant 0 : index
      %c0_111 = arith.constant 0 : index
      %c0_112 = arith.constant 0 : index
      %261 = vector.load %arg2[%c0_110, %c0_111, %c0_112] : memref<1x8x32xf32, #tpu.memory_space<vmem>>, vector<1x8x32xf32>
      %262 = vector.shape_cast %261 : vector<1x8x32xf32> to vector<8x32xf32>
      %c0_113 = arith.constant 0 : index
      %c0_114 = arith.constant 0 : index
      %263 = vector.load %arg29[%c0_113, %c0_114] : memref<8x32xf32, #tpu.memory_space<vmem>>, vector<8x32xf32>
      tpu.vector_store %arg29[%c0_113, %c0_114], %262 {strides = array<i32>} : memref<8x32xf32, #tpu.memory_space<vmem>>, vector<8x32xf32>,
      %c0_115 = arith.constant 0 : index
      %c0_116 = arith.constant 0 : index
      %c0_117 = arith.constant 0 : index
      %264 = vector.load %arg4[%c0_115, %c0_116, %c0_117] : memref<1x16x32xf32, #tpu.memory_space<vmem>>, vector<1x16x32xf32>
      %265 = vector.shape_cast %264 : vector<1x16x32xf32> to vector<16x32xf32>
      %c0_118 = arith.constant 0 : index
      %c0_119 = arith.constant 0 : index
      %c0_120 = arith.constant 0 : index
      %266 = vector.load %arg5[%c0_118, %c0_119, %c0_120] : memref<1x16x32xf32, #tpu.memory_space<vmem>>, vector<1x16x32xf32>
      %267 = vector.shape_cast %266 : vector<1x16x32xf32> to vector<16x32xf32>
      %268 = arith.addf %265, %267 : vector<16x32xf32>
      %269 = arith.truncf %268 : vector<16x32xf32> to vector<16x32xbf16>
      %c0_121 = arith.constant 0 : index
      %c0_122 = arith.constant 0 : index
      %270 = vector.load %arg30[%c0_121, %c0_122] : memref<16x32xbf16, #tpu.memory_space<vmem>>, vector<16x32xbf16>
      tpu.vector_store %arg30[%c0_121, %c0_122], %269 {strides = array<i32>} : memref<16x32xbf16, #tpu.memory_space<vmem>>, vector<16x32xbf16>,
      %271 = arith.truncf %265 : vector<16x32xf32> to vector<16x32xbf16>
      %c0_123 = arith.constant 0 : index
      %c0_124 = arith.constant 0 : index
      %272 = vector.load %arg31[%c0_123, %c0_124] : memref<16x32xbf16, #tpu.memory_space<vmem>>, vector<16x32xbf16>
      tpu.vector_store %arg31[%c0_123, %c0_124], %271 {strides = array<i32>} : memref<16x32xbf16, #tpu.memory_space<vmem>>, vector<16x32xbf16>,
    } else {
    }
    %c0 = arith.constant 0 : index
    %c0_1 = arith.constant 0 : index
    %3 = vector.load %arg29[%c0, %c0_1] : memref<8x32xf32, #tpu.memory_space<vmem>>, vector<8x32xf32>
    %c0_2 = arith.constant 0 : index
    %c0_3 = arith.constant 0 : index
    %c0_4 = arith.constant 0 : index
    %4 = vector.load %arg3[%c0_2, %c0_3, %c0_4] : memref<1x8x32xf32, #tpu.memory_space<vmem>>, vector<1x8x32xf32>
    %5 = vector.shape_cast %4 : vector<1x8x32xf32> to vector<8x32xf32>
    %c0_5 = arith.constant 0 : index
    %c0_6 = arith.constant 0 : index
    %c0_7 = arith.constant 0 : index
    %6 = vector.load %arg6[%c0_5, %c0_6, %c0_7] : memref<1x32x96xbf16, #tpu.memory_space<vmem>>, vector<1x32x96xbf16>
    %7 = vector.shape_cast %6 : vector<1x32x96xbf16> to vector<32x96xbf16>
    %c0_8 = arith.constant 0 : index
    %c0_9 = arith.constant 0 : index
    %c0_10 = arith.constant 0 : index
    %8 = vector.load %arg7[%c0_8, %c0_9, %c0_10] : memref<1x1x96xf32, #tpu.memory_space<vmem>>, vector<1x1x96xf32>
    %9 = vector.shape_cast %8 : vector<1x1x96xf32> to vector<1x96xf32>
    %10 = arith.addf %3, %5 : vector<8x32xf32>
    %11 = arith.truncf %10 : vector<8x32xf32> to vector<8x32xbf16>
    %12 = vector.extract_strided_slice %7 {offsets = [0, 0], sizes = [32, 64], strides = [1, 1]} : vector<32x96xbf16> to vector<32x64xbf16>
    %cst = arith.constant dense<0.000000e+00> : vector<8x64xf32>
    %13 = tpu.matmul %11, %12, %cst {dimension_numbers = #tpu.dot_dimension_numbers<[1], [0], [0], [1], [0, 0, 1, 1], [], []>} : vector<8x32xbf16>, vector<32x64xbf16>, vector<8x64xf32> -> vector<8x64xf32>
    %14 = vector.extract_strided_slice %9 {offsets = [0, 0], sizes = [1, 64], strides = [1, 1]} : vector<1x96xf32> to vector<1x64xf32>
    %15 = vector.broadcast %14 : vector<1x64xf32> to vector<8x64xf32>
    %16 = arith.addf %13, %15 : vector<8x64xf32>
    %17 = arith.truncf %3 : vector<8x32xf32> to vector<8x32xbf16>
    %18 = vector.extract_strided_slice %7 {offsets = [0, 64], sizes = [32, 32], strides = [1, 1]} : vector<32x96xbf16> to vector<32x32xbf16>
    %cst_11 = arith.constant dense<0.000000e+00> : vector<8x32xf32>
    %19 = tpu.matmul %17, %18, %cst_11 {dimension_numbers = #tpu.dot_dimension_numbers<[1], [0], [0], [1], [0, 0, 1, 1], [], []>} : vector<8x32xbf16>, vector<32x32xbf16>, vector<8x32xf32> -> vector<8x32xf32>
    %20 = vector.extract_strided_slice %9 {offsets = [0, 64], sizes = [1, 32], strides = [1, 1]} : vector<1x96xf32> to vector<1x32xf32>
    %21 = vector.broadcast %20 : vector<1x32xf32> to vector<8x32xf32>
    %22 = arith.addf %19, %21 : vector<8x32xf32>
    %23 = vector.extract_strided_slice %16 {offsets = [0, 0], sizes = [8, 32], strides = [1, 1]} : vector<8x64xf32> to vector<8x32xf32>
    %24 = vector.extract_strided_slice %16 {offsets = [0, 32], sizes = [8, 32], strides = [1, 1]} : vector<8x64xf32> to vector<8x32xf32>
    %25 = vector.shape_cast %23 : vector<8x32xf32> to vector<1x8x32xf32>
    %26 = vector.shape_cast %24 : vector<8x32xf32> to vector<1x8x32xf32>
    %27 = vector.shape_cast %22 : vector<8x32xf32> to vector<1x8x32xf32>
    %28 = vector.extract_strided_slice %25 {offsets = [0, 0, 0], sizes = [1, 8, 8], strides = [1, 1, 1]} : vector<1x8x32xf32> to vector<1x8x8xf32>
    %29 = vector.extract_strided_slice %25 {offsets = [0, 0, 8], sizes = [1, 8, 8], strides = [1, 1, 1]} : vector<1x8x32xf32> to vector<1x8x8xf32>
    %30 = vector.extract_strided_slice %25 {offsets = [0, 0, 16], sizes = [1, 8, 8], strides = [1, 1, 1]} : vector<1x8x32xf32> to vector<1x8x8xf32>
    %31 = vector.extract_strided_slice %25 {offsets = [0, 0, 24], sizes = [1, 8, 8], strides = [1, 1, 1]} : vector<1x8x32xf32> to vector<1x8x8xf32>
    %32 = tpu.concatenate %28, %29, %30, %31 in 0 : vector<1x8x8xf32>, vector<1x8x8xf32>, vector<1x8x8xf32>, vector<1x8x8xf32> -> vector<4x8x8xf32>
    %33 = vector.extract_strided_slice %26 {offsets = [0, 0, 0], sizes = [1, 8, 8], strides = [1, 1, 1]} : vector<1x8x32xf32> to vector<1x8x8xf32>
    %34 = vector.extract_strided_slice %26 {offsets = [0, 0, 8], sizes = [1, 8, 8], strides = [1, 1, 1]} : vector<1x8x32xf32> to vector<1x8x8xf32>
    %35 = vector.extract_strided_slice %26 {offsets = [0, 0, 16], sizes = [1, 8, 8], strides = [1, 1, 1]} : vector<1x8x32xf32> to vector<1x8x8xf32>
    %36 = vector.extract_strided_slice %26 {offsets = [0, 0, 24], sizes = [1, 8, 8], strides = [1, 1, 1]} : vector<1x8x32xf32> to vector<1x8x8xf32>
    %37 = tpu.concatenate %33, %34, %35, %36 in 0 : vector<1x8x8xf32>, vector<1x8x8xf32>, vector<1x8x8xf32>, vector<1x8x8xf32> -> vector<4x8x8xf32>
    %38 = vector.extract_strided_slice %27 {offsets = [0, 0, 0], sizes = [1, 8, 8], strides = [1, 1, 1]} : vector<1x8x32xf32> to vector<1x8x8xf32>
    %39 = vector.extract_strided_slice %27 {offsets = [0, 0, 8], sizes = [1, 8, 8], strides = [1, 1, 1]} : vector<1x8x32xf32> to vector<1x8x8xf32>
    %40 = vector.extract_strided_slice %27 {offsets = [0, 0, 16], sizes = [1, 8, 8], strides = [1, 1, 1]} : vector<1x8x32xf32> to vector<1x8x8xf32>
    %41 = vector.extract_strided_slice %27 {offsets = [0, 0, 24], sizes = [1, 8, 8], strides = [1, 1, 1]} : vector<1x8x32xf32> to vector<1x8x8xf32>
    %42 = tpu.concatenate %38, %39, %40, %41 in 0 : vector<1x8x8xf32>, vector<1x8x8xf32>, vector<1x8x8xf32>, vector<1x8x8xf32> -> vector<4x8x8xf32>
    %43 = arith.truncf %32 : vector<4x8x8xf32> to vector<4x8x8xbf16>
    %44 = arith.truncf %37 : vector<4x8x8xf32> to vector<4x8x8xbf16>
    "tpu.trace_start"() <{level = 10 : i32, message = "bqd,bkd->bqk"}> : () -> ()
    %cst_12 = arith.constant dense<0.000000e+00> : vector<4x8x8xf32>
    %45 = tpu.matmul %43, %44, %cst_12 {dimension_numbers = #tpu.dot_dimension_numbers<[2], [2], [1], [1], [0, 0, 0, 1, 1, 1], [0], [0]>} : vector<4x8x8xbf16>, vector<4x8x8xbf16>, vector<4x8x8xf32> -> vector<4x8x8xf32>
    "tpu.trace_stop"() : () -> ()
    %cst_13 = arith.constant dense<0xFF800000> : vector<4x8xf32>
    %46 = vector.multi_reduction <maximumf>, %45, %cst_13 [2] : vector<4x8x8xf32> to vector<4x8xf32>
    %47 = vector.shape_cast %46 : vector<4x8xf32> to vector<4x8x1xf32>
    %48 = vector.broadcast %47 : vector<4x8x1xf32> to vector<4x8x8xf32>
    %49 = arith.subf %45, %48 : vector<4x8x8xf32>
    %50 = math.exp %49 : vector<4x8x8xf32>
    %cst_14 = arith.constant dense<0.000000e+00> : vector<4x8xf32>
    %51 = vector.multi_reduction <add>, %50, %cst_14 [2] : vector<4x8x8xf32> to vector<4x8xf32>
    %52 = vector.shape_cast %51 : vector<4x8xf32> to vector<4x8x1xf32>
    %53 = tpu.reciprocal %52 {approx = true} : vector<4x8x1xf32> -> vector<4x8x1xf32>
    %54 = vector.broadcast %53 : vector<4x8x1xf32> to vector<4x8x8xf32>
    %55 = arith.mulf %50, %54 : vector<4x8x8xf32>
    %56 = arith.truncf %55 : vector<4x8x8xf32> to vector<4x8x8xbf16>
    %57 = arith.truncf %42 : vector<4x8x8xf32> to vector<4x8x8xbf16>
    "tpu.trace_start"() <{level = 10 : i32, message = "bqk,bkd->bqd"}> : () -> ()
    %cst_15 = arith.constant dense<0.000000e+00> : vector<4x8x8xf32>
    %58 = tpu.matmul %56, %57, %cst_15 {dimension_numbers = #tpu.dot_dimension_numbers<[2], [1], [1], [2], [0, 0, 0, 1, 1, 2], [0], [0]>} : vector<4x8x8xbf16>, vector<4x8x8xbf16>, vector<4x8x8xf32> -> vector<4x8x8xf32>
    "tpu.trace_stop"() : () -> ()
    %59 = vector.extract_strided_slice %58 {offsets = [0, 0, 0], sizes = [1, 8, 8], strides = [1, 1, 1]} : vector<4x8x8xf32> to vector<1x8x8xf32>
    %60 = vector.shape_cast %59 : vector<1x8x8xf32> to vector<8x8xf32>
    %61 = vector.extract_strided_slice %58 {offsets = [1, 0, 0], sizes = [1, 8, 8], strides = [1, 1, 1]} : vector<4x8x8xf32> to vector<1x8x8xf32>
    %62 = vector.shape_cast %61 : vector<1x8x8xf32> to vector<8x8xf32>
    %63 = vector.extract_strided_slice %58 {offsets = [2, 0, 0], sizes = [1, 8, 8], strides = [1, 1, 1]} : vector<4x8x8xf32> to vector<1x8x8xf32>
    %64 = vector.shape_cast %63 : vector<1x8x8xf32> to vector<8x8xf32>
    %65 = vector.extract_strided_slice %58 {offsets = [3, 0, 0], sizes = [1, 8, 8], strides = [1, 1, 1]} : vector<4x8x8xf32> to vector<1x8x8xf32>
    %66 = vector.shape_cast %65 : vector<1x8x8xf32> to vector<8x8xf32>
    %67 = tpu.concatenate %60, %62, %64, %66 in 1 : vector<8x8xf32>, vector<8x8xf32>, vector<8x8xf32>, vector<8x8xf32> -> vector<8x32xf32>
    %68 = vector.shape_cast %55 : vector<4x8x8xf32> to vector<4x1x8x8xf32>
    %cst_16 = arith.constant dense<0.000000e+00> : vector<1x8x8xf32>
    %69 = vector.multi_reduction <add>, %68, %cst_16 [0] : vector<4x1x8x8xf32> to vector<1x8x8xf32>
    %cst_17 = arith.constant 4.000000e+00 : f32
    %70 = vector.broadcast %cst_17 : f32 to vector<1x8x8xf32>
    %71 = arith.divf %69, %70 : vector<1x8x8xf32>
    %72 = arith.truncf %67 : vector<8x32xf32> to vector<8x32xbf16>
    %c0_18 = arith.constant 0 : index
    %c0_19 = arith.constant 0 : index
    %c0_20 = arith.constant 0 : index
    %73 = vector.load %arg8[%c0_18, %c0_19, %c0_20] : memref<1x32x32xbf16, #tpu.memory_space<vmem>>, vector<1x32x32xbf16>
    %74 = vector.shape_cast %73 : vector<1x32x32xbf16> to vector<32x32xbf16>
    %cst_21 = arith.constant dense<0.000000e+00> : vector<8x32xf32>
    %75 = tpu.matmul %72, %74, %cst_21 {dimension_numbers = #tpu.dot_dimension_numbers<[1], [0], [0], [1], [0, 0, 1, 1], [], []>} : vector<8x32xbf16>, vector<32x32xbf16>, vector<8x32xf32> -> vector<8x32xf32>
    %c0_22 = arith.constant 0 : index
    %c0_23 = arith.constant 0 : index
    %c0_24 = arith.constant 0 : index
    %76 = vector.load %arg9[%c0_22, %c0_23, %c0_24] : memref<1x1x32xf32, #tpu.memory_space<vmem>>, vector<1x1x32xf32>
    %77 = vector.shape_cast %76 : vector<1x1x32xf32> to vector<1x32xf32>
    %78 = vector.broadcast %77 : vector<1x32xf32> to vector<8x32xf32>
    %79 = arith.addf %75, %78 : vector<8x32xf32>
    %80 = arith.addf %3, %79 : vector<8x32xf32>
    %c0_25 = arith.constant 0 : index
    %c0_26 = arith.constant 0 : index
    %c0_27 = arith.constant 0 : index
    %81 = vector.load %arg18[%c0_25, %c0_26, %c0_27] : memref<1x1x32xf32, #tpu.memory_space<vmem>>, vector<1x1x32xf32>
    %82 = vector.shape_cast %81 : vector<1x1x32xf32> to vector<1x32xf32>
    %c0_28 = arith.constant 0 : index
    %c0_29 = arith.constant 0 : index
    %c0_30 = arith.constant 0 : index
    %83 = vector.load %arg19[%c0_28, %c0_29, %c0_30] : memref<1x1x32xf32, #tpu.memory_space<vmem>>, vector<1x1x32xf32>
    %84 = vector.shape_cast %83 : vector<1x1x32xf32> to vector<1x32xf32>
    %cst_31 = arith.constant dense<0.000000e+00> : vector<8xf32>
    %85 = vector.multi_reduction <add>, %80, %cst_31 [1] : vector<8x32xf32> to vector<8xf32>
    %86 = vector.shape_cast %85 : vector<8xf32> to vector<8x1xf32>
    %cst_32 = arith.constant 3.200000e+01 : f32
    %87 = vector.broadcast %cst_32 : f32 to vector<8x1xf32>
    %88 = arith.divf %86, %87 : vector<8x1xf32>
    %89 = vector.broadcast %88 : vector<8x1xf32> to vector<8x32xf32>
    %90 = arith.subf %80, %89 : vector<8x32xf32>
    %91 = arith.mulf %90, %90 : vector<8x32xf32>
    %cst_33 = arith.constant dense<0.000000e+00> : vector<8xf32>
    %92 = vector.multi_reduction <add>, %91, %cst_33 [1] : vector<8x32xf32> to vector<8xf32>
    %93 = vector.shape_cast %92 : vector<8xf32> to vector<8x1xf32>
    %cst_34 = arith.constant 3.200000e+01 : f32
    %94 = vector.broadcast %cst_34 : f32 to vector<8x1xf32>
    %95 = arith.divf %93, %94 : vector<8x1xf32>
    %cst_35 = arith.constant 9.99999974E-6 : f32
    %96 = vector.broadcast %cst_35 : f32 to vector<8x1xf32>
    %97 = arith.addf %95, %96 : vector<8x1xf32>
    %98 = math.rsqrt %97 : vector<8x1xf32>
    %99 = vector.broadcast %98 : vector<8x1xf32> to vector<8x32xf32>
    %100 = arith.mulf %90, %99 : vector<8x32xf32>
    %101 = vector.broadcast %82 : vector<1x32xf32> to vector<8x32xf32>
    %102 = arith.mulf %100, %101 : vector<8x32xf32>
    %103 = vector.broadcast %84 : vector<1x32xf32> to vector<8x32xf32>
    %104 = arith.addf %102, %103 : vector<8x32xf32>
    %105 = vector.shape_cast %71 : vector<1x8x8xf32> to vector<1x1x8x8xf32>
    %106 = arith.truncf %105 : vector<1x1x8x8xf32> to vector<1x1x8x8xbf16>
    %c0_36 = arith.constant 0 : index
    %c0_37 = arith.constant 0 : index
    %c0_38 = arith.constant 0 : index
    %c0_39 = arith.constant 0 : index
    %107 = vector.load %arg27[%c0_36, %c0_37, %c0_38, %c0_39] : memref<1x1x8x8xbf16, #tpu.memory_space<vmem>>, vector<1x1x8x8xbf16>
    tpu.vector_store %arg27[%c0_36, %c0_37, %c0_38, %c0_39], %106 {strides = array<i32>} : memref<1x1x8x8xbf16, #tpu.memory_space<vmem>>, vector<1x1x8x8xbf16>,
    %c0_40 = arith.constant 0 : index
    %c0_41 = arith.constant 0 : index
    %c0_42 = arith.constant 0 : index
    %108 = vector.load %arg10[%c0_40, %c0_41, %c0_42] : memref<1x32x96xbf16, #tpu.memory_space<vmem>>, vector<1x32x96xbf16>
    %109 = vector.shape_cast %108 : vector<1x32x96xbf16> to vector<32x96xbf16>
    %c0_43 = arith.constant 0 : index
    %c0_44 = arith.constant 0 : index
    %c0_45 = arith.constant 0 : index
    %110 = vector.load %arg11[%c0_43, %c0_44, %c0_45] : memref<1x1x96xf32, #tpu.memory_space<vmem>>, vector<1x1x96xf32>
    %111 = vector.shape_cast %110 : vector<1x1x96xf32> to vector<1x96xf32>
    %112 = arith.addf %104, %5 : vector<8x32xf32>
    %113 = arith.truncf %112 : vector<8x32xf32> to vector<8x32xbf16>
    %114 = vector.extract_strided_slice %109 {offsets = [0, 0], sizes = [32, 32], strides = [1, 1]} : vector<32x96xbf16> to vector<32x32xbf16>
    %cst_46 = arith.constant dense<0.000000e+00> : vector<8x32xf32>
    %115 = tpu.matmul %113, %114, %cst_46 {dimension_numbers = #tpu.dot_dimension_numbers<[1], [0], [0], [1], [0, 0, 1, 1], [], []>} : vector<8x32xbf16>, vector<32x32xbf16>, vector<8x32xf32> -> vector<8x32xf32>
    %116 = vector.extract_strided_slice %111 {offsets = [0, 0], sizes = [1, 32], strides = [1, 1]} : vector<1x96xf32> to vector<1x32xf32>
    %117 = vector.broadcast %116 : vector<1x32xf32> to vector<8x32xf32>
    %118 = arith.addf %115, %117 : vector<8x32xf32>
    %c0_47 = arith.constant 0 : index
    %c0_48 = arith.constant 0 : index
    %119 = vector.load %arg30[%c0_47, %c0_48] : memref<16x32xbf16, #tpu.memory_space<vmem>>, vector<16x32xbf16>
    %120 = vector.extract_strided_slice %109 {offsets = [0, 32], sizes = [32, 32], strides = [1, 1]} : vector<32x96xbf16> to vector<32x32xbf16>
    %cst_49 = arith.constant dense<0.000000e+00> : vector<16x32xf32>
    %121 = tpu.matmul %119, %120, %cst_49 {dimension_numbers = #tpu.dot_dimension_numbers<[1], [0], [0], [1], [0, 0, 1, 1], [], []>} : vector<16x32xbf16>, vector<32x32xbf16>, vector<16x32xf32> -> vector<16x32xf32>
    %122 = vector.extract_strided_slice %111 {offsets = [0, 32], sizes = [1, 32], strides = [1, 1]} : vector<1x96xf32> to vector<1x32xf32>
    %123 = vector.broadcast %122 : vector<1x32xf32> to vector<16x32xf32>
    %124 = arith.addf %121, %123 : vector<16x32xf32>
    %c0_50 = arith.constant 0 : index
    %c0_51 = arith.constant 0 : index
    %125 = vector.load %arg31[%c0_50, %c0_51] : memref<16x32xbf16, #tpu.memory_space<vmem>>, vector<16x32xbf16>
    %126 = vector.extract_strided_slice %109 {offsets = [0, 64], sizes = [32, 32], strides = [1, 1]} : vector<32x96xbf16> to vector<32x32xbf16>
    %cst_52 = arith.constant dense<0.000000e+00> : vector<16x32xf32>
    %127 = tpu.matmul %125, %126, %cst_52 {dimension_numbers = #tpu.dot_dimension_numbers<[1], [0], [0], [1], [0, 0, 1, 1], [], []>} : vector<16x32xbf16>, vector<32x32xbf16>, vector<16x32xf32> -> vector<16x32xf32>
    %128 = vector.extract_strided_slice %111 {offsets = [0, 64], sizes = [1, 32], strides = [1, 1]} : vector<1x96xf32> to vector<1x32xf32>
    %129 = vector.broadcast %128 : vector<1x32xf32> to vector<16x32xf32>
    %130 = arith.addf %127, %129 : vector<16x32xf32>
    %131 = vector.shape_cast %118 : vector<8x32xf32> to vector<1x8x32xf32>
    %132 = vector.shape_cast %124 : vector<16x32xf32> to vector<1x16x32xf32>
    %133 = vector.shape_cast %130 : vector<16x32xf32> to vector<1x16x32xf32>
    %134 = vector.extract_strided_slice %131 {offsets = [0, 0, 0], sizes = [1, 8, 8], strides = [1, 1, 1]} : vector<1x8x32xf32> to vector<1x8x8xf32>
    %135 = vector.extract_strided_slice %131 {offsets = [0, 0, 8], sizes = [1, 8, 8], strides = [1, 1, 1]} : vector<1x8x32xf32> to vector<1x8x8xf32>
    %136 = vector.extract_strided_slice %131 {offsets = [0, 0, 16], sizes = [1, 8, 8], strides = [1, 1, 1]} : vector<1x8x32xf32> to vector<1x8x8xf32>
    %137 = vector.extract_strided_slice %131 {offsets = [0, 0, 24], sizes = [1, 8, 8], strides = [1, 1, 1]} : vector<1x8x32xf32> to vector<1x8x8xf32>
    %138 = tpu.concatenate %134, %135, %136, %137 in 0 : vector<1x8x8xf32>, vector<1x8x8xf32>, vector<1x8x8xf32>, vector<1x8x8xf32> -> vector<4x8x8xf32>
    %139 = vector.extract_strided_slice %132 {offsets = [0, 0, 0], sizes = [1, 16, 8], strides = [1, 1, 1]} : vector<1x16x32xf32> to vector<1x16x8xf32>
    %140 = vector.extract_strided_slice %132 {offsets = [0, 0, 8], sizes = [1, 16, 8], strides = [1, 1, 1]} : vector<1x16x32xf32> to vector<1x16x8xf32>
    %141 = vector.extract_strided_slice %132 {offsets = [0, 0, 16], sizes = [1, 16, 8], strides = [1, 1, 1]} : vector<1x16x32xf32> to vector<1x16x8xf32>
    %142 = vector.extract_strided_slice %132 {offsets = [0, 0, 24], sizes = [1, 16, 8], strides = [1, 1, 1]} : vector<1x16x32xf32> to vector<1x16x8xf32>
    %143 = tpu.concatenate %139, %140, %141, %142 in 0 : vector<1x16x8xf32>, vector<1x16x8xf32>, vector<1x16x8xf32>, vector<1x16x8xf32> -> vector<4x16x8xf32>
    %144 = vector.extract_strided_slice %133 {offsets = [0, 0, 0], sizes = [1, 16, 8], strides = [1, 1, 1]} : vector<1x16x32xf32> to vector<1x16x8xf32>
    %145 = vector.extract_strided_slice %133 {offsets = [0, 0, 8], sizes = [1, 16, 8], strides = [1, 1, 1]} : vector<1x16x32xf32> to vector<1x16x8xf32>
    %146 = vector.extract_strided_slice %133 {offsets = [0, 0, 16], sizes = [1, 16, 8], strides = [1, 1, 1]} : vector<1x16x32xf32> to vector<1x16x8xf32>
    %147 = vector.extract_strided_slice %133 {offsets = [0, 0, 24], sizes = [1, 16, 8], strides = [1, 1, 1]} : vector<1x16x32xf32> to vector<1x16x8xf32>
    %148 = tpu.concatenate %144, %145, %146, %147 in 0 : vector<1x16x8xf32>, vector<1x16x8xf32>, vector<1x16x8xf32>, vector<1x16x8xf32> -> vector<4x16x8xf32>
    %149 = arith.truncf %138 : vector<4x8x8xf32> to vector<4x8x8xbf16>
    %150 = arith.truncf %143 : vector<4x16x8xf32> to vector<4x16x8xbf16>
    "tpu.trace_start"() <{level = 10 : i32, message = "bqd,bkd->bqk"}> : () -> ()
    %cst_53 = arith.constant dense<0.000000e+00> : vector<4x8x16xf32>
    %151 = tpu.matmul %149, %150, %cst_53 {dimension_numbers = #tpu.dot_dimension_numbers<[2], [2], [1], [1], [0, 0, 0, 1, 1, 1], [0], [0]>} : vector<4x8x8xbf16>, vector<4x16x8xbf16>, vector<4x8x16xf32> -> vector<4x8x16xf32>
    "tpu.trace_stop"() : () -> ()
    %cst_54 = arith.constant dense<0xFF800000> : vector<4x8xf32>
    %152 = vector.multi_reduction <maximumf>, %151, %cst_54 [2] : vector<4x8x16xf32> to vector<4x8xf32>
    %153 = vector.shape_cast %152 : vector<4x8xf32> to vector<4x8x1xf32>
    %154 = vector.broadcast %153 : vector<4x8x1xf32> to vector<4x8x16xf32>
    %155 = arith.subf %151, %154 : vector<4x8x16xf32>
    %156 = math.exp %155 : vector<4x8x16xf32>
    %cst_55 = arith.constant dense<0.000000e+00> : vector<4x8xf32>
    %157 = vector.multi_reduction <add>, %156, %cst_55 [2] : vector<4x8x16xf32> to vector<4x8xf32>
    %158 = vector.shape_cast %157 : vector<4x8xf32> to vector<4x8x1xf32>
    %159 = tpu.reciprocal %158 {approx = true} : vector<4x8x1xf32> -> vector<4x8x1xf32>
    %160 = vector.broadcast %159 : vector<4x8x1xf32> to vector<4x8x16xf32>
    %161 = arith.mulf %156, %160 : vector<4x8x16xf32>
    %162 = arith.truncf %161 : vector<4x8x16xf32> to vector<4x8x16xbf16>
    %163 = arith.truncf %148 : vector<4x16x8xf32> to vector<4x16x8xbf16>
    "tpu.trace_start"() <{level = 10 : i32, message = "bqk,bkd->bqd"}> : () -> ()
    %cst_56 = arith.constant dense<0.000000e+00> : vector<4x8x8xf32>
    %164 = tpu.matmul %162, %163, %cst_56 {dimension_numbers = #tpu.dot_dimension_numbers<[2], [1], [1], [2], [0, 0, 0, 1, 1, 2], [0], [0]>} : vector<4x8x16xbf16>, vector<4x16x8xbf16>, vector<4x8x8xf32> -> vector<4x8x8xf32>
    "tpu.trace_stop"() : () -> ()
    %165 = vector.extract_strided_slice %164 {offsets = [0, 0, 0], sizes = [1, 8, 8], strides = [1, 1, 1]} : vector<4x8x8xf32> to vector<1x8x8xf32>
    %166 = vector.shape_cast %165 : vector<1x8x8xf32> to vector<8x8xf32>
    %167 = vector.extract_strided_slice %164 {offsets = [1, 0, 0], sizes = [1, 8, 8], strides = [1, 1, 1]} : vector<4x8x8xf32> to vector<1x8x8xf32>
    %168 = vector.shape_cast %167 : vector<1x8x8xf32> to vector<8x8xf32>
    %169 = vector.extract_strided_slice %164 {offsets = [2, 0, 0], sizes = [1, 8, 8], strides = [1, 1, 1]} : vector<4x8x8xf32> to vector<1x8x8xf32>
    %170 = vector.shape_cast %169 : vector<1x8x8xf32> to vector<8x8xf32>
    %171 = vector.extract_strided_slice %164 {offsets = [3, 0, 0], sizes = [1, 8, 8], strides = [1, 1, 1]} : vector<4x8x8xf32> to vector<1x8x8xf32>
    %172 = vector.shape_cast %171 : vector<1x8x8xf32> to vector<8x8xf32>
    %173 = tpu.concatenate %166, %168, %170, %172 in 1 : vector<8x8xf32>, vector<8x8xf32>, vector<8x8xf32>, vector<8x8xf32> -> vector<8x32xf32>
    %174 = vector.shape_cast %161 : vector<4x8x16xf32> to vector<4x1x8x16xf32>
    %cst_57 = arith.constant dense<0.000000e+00> : vector<1x8x16xf32>
    %175 = vector.multi_reduction <add>, %174, %cst_57 [0] : vector<4x1x8x16xf32> to vector<1x8x16xf32>
    %cst_58 = arith.constant 4.000000e+00 : f32
    %176 = vector.broadcast %cst_58 : f32 to vector<1x8x16xf32>
    %177 = arith.divf %175, %176 : vector<1x8x16xf32>
    %178 = arith.truncf %173 : vector<8x32xf32> to vector<8x32xbf16>
    %c0_59 = arith.constant 0 : index
    %c0_60 = arith.constant 0 : index
    %c0_61 = arith.constant 0 : index
    %179 = vector.load %arg12[%c0_59, %c0_60, %c0_61] : memref<1x32x32xbf16, #tpu.memory_space<vmem>>, vector<1x32x32xbf16>
    %180 = vector.shape_cast %179 : vector<1x32x32xbf16> to vector<32x32xbf16>
    %cst_62 = arith.constant dense<0.000000e+00> : vector<8x32xf32>
    %181 = tpu.matmul %178, %180, %cst_62 {dimension_numbers = #tpu.dot_dimension_numbers<[1], [0], [0], [1], [0, 0, 1, 1], [], []>} : vector<8x32xbf16>, vector<32x32xbf16>, vector<8x32xf32> -> vector<8x32xf32>
    %c0_63 = arith.constant 0 : index
    %c0_64 = arith.constant 0 : index
    %c0_65 = arith.constant 0 : index
    %182 = vector.load %arg13[%c0_63, %c0_64, %c0_65] : memref<1x1x32xf32, #tpu.memory_space<vmem>>, vector<1x1x32xf32>
    %183 = vector.shape_cast %182 : vector<1x1x32xf32> to vector<1x32xf32>
    %184 = vector.broadcast %183 : vector<1x32xf32> to vector<8x32xf32>
    %185 = arith.addf %181, %184 : vector<8x32xf32>
    %186 = arith.addf %104, %185 : vector<8x32xf32>
    %c0_66 = arith.constant 0 : index
    %c0_67 = arith.constant 0 : index
    %c0_68 = arith.constant 0 : index
    %187 = vector.load %arg20[%c0_66, %c0_67, %c0_68] : memref<1x1x32xf32, #tpu.memory_space<vmem>>, vector<1x1x32xf32>
    %188 = vector.shape_cast %187 : vector<1x1x32xf32> to vector<1x32xf32>
    %c0_69 = arith.constant 0 : index
    %c0_70 = arith.constant 0 : index
    %c0_71 = arith.constant 0 : index
    %189 = vector.load %arg21[%c0_69, %c0_70, %c0_71] : memref<1x1x32xf32, #tpu.memory_space<vmem>>, vector<1x1x32xf32>
    %190 = vector.shape_cast %189 : vector<1x1x32xf32> to vector<1x32xf32>
    %cst_72 = arith.constant dense<0.000000e+00> : vector<8xf32>
    %191 = vector.multi_reduction <add>, %186, %cst_72 [1] : vector<8x32xf32> to vector<8xf32>
    %192 = vector.shape_cast %191 : vector<8xf32> to vector<8x1xf32>
    %cst_73 = arith.constant 3.200000e+01 : f32
    %193 = vector.broadcast %cst_73 : f32 to vector<8x1xf32>
    %194 = arith.divf %192, %193 : vector<8x1xf32>
    %195 = vector.broadcast %194 : vector<8x1xf32> to vector<8x32xf32>
    %196 = arith.subf %186, %195 : vector<8x32xf32>
    %197 = arith.mulf %196, %196 : vector<8x32xf32>
    %cst_74 = arith.constant dense<0.000000e+00> : vector<8xf32>
    %198 = vector.multi_reduction <add>, %197, %cst_74 [1] : vector<8x32xf32> to vector<8xf32>
    %199 = vector.shape_cast %198 : vector<8xf32> to vector<8x1xf32>
    %cst_75 = arith.constant 3.200000e+01 : f32
    %200 = vector.broadcast %cst_75 : f32 to vector<8x1xf32>
    %201 = arith.divf %199, %200 : vector<8x1xf32>
    %cst_76 = arith.constant 9.99999974E-6 : f32
    %202 = vector.broadcast %cst_76 : f32 to vector<8x1xf32>
    %203 = arith.addf %201, %202 : vector<8x1xf32>
    %204 = math.rsqrt %203 : vector<8x1xf32>
    %205 = vector.broadcast %204 : vector<8x1xf32> to vector<8x32xf32>
    %206 = arith.mulf %196, %205 : vector<8x32xf32>
    %207 = vector.broadcast %188 : vector<1x32xf32> to vector<8x32xf32>
    %208 = arith.mulf %206, %207 : vector<8x32xf32>
    %209 = vector.broadcast %190 : vector<1x32xf32> to vector<8x32xf32>
    %210 = arith.addf %208, %209 : vector<8x32xf32>
    %211 = vector.shape_cast %177 : vector<1x8x16xf32> to vector<1x1x8x16xf32>
    %212 = arith.truncf %211 : vector<1x1x8x16xf32> to vector<1x1x8x16xbf16>
    %c0_77 = arith.constant 0 : index
    %c0_78 = arith.constant 0 : index
    %c0_79 = arith.constant 0 : index
    %c0_80 = arith.constant 0 : index
    %213 = vector.load %arg28[%c0_77, %c0_78, %c0_79, %c0_80] : memref<1x1x8x16xbf16, #tpu.memory_space<vmem>>, vector<1x1x8x16xbf16>
    tpu.vector_store %arg28[%c0_77, %c0_78, %c0_79, %c0_80], %212 {strides = array<i32>} : memref<1x1x8x16xbf16, #tpu.memory_space<vmem>>, vector<1x1x8x16xbf16>,
    %214 = arith.truncf %210 : vector<8x32xf32> to vector<8x32xbf16>
    %c0_81 = arith.constant 0 : index
    %c0_82 = arith.constant 0 : index
    %c0_83 = arith.constant 0 : index
    %215 = vector.load %arg14[%c0_81, %c0_82, %c0_83] : memref<1x32x64xbf16, #tpu.memory_space<vmem>>, vector<1x32x64xbf16>
    %216 = vector.shape_cast %215 : vector<1x32x64xbf16> to vector<32x64xbf16>
    %cst_84 = arith.constant dense<0.000000e+00> : vector<8x64xf32>
    %217 = tpu.matmul %214, %216, %cst_84 {dimension_numbers = #tpu.dot_dimension_numbers<[1], [0], [0], [1], [0, 0, 1, 1], [], []>} : vector<8x32xbf16>, vector<32x64xbf16>, vector<8x64xf32> -> vector<8x64xf32>
    %c0_85 = arith.constant 0 : index
    %c0_86 = arith.constant 0 : index
    %c0_87 = arith.constant 0 : index
    %218 = vector.load %arg15[%c0_85, %c0_86, %c0_87] : memref<1x1x64xf32, #tpu.memory_space<vmem>>, vector<1x1x64xf32>
    %219 = vector.shape_cast %218 : vector<1x1x64xf32> to vector<1x64xf32>
    %220 = vector.broadcast %219 : vector<1x64xf32> to vector<8x64xf32>
    %221 = arith.addf %217, %220 : vector<8x64xf32>
    %cst_88 = arith.constant 0.000000e+00 : f32
    %222 = vector.broadcast %cst_88 : f32 to vector<8x64xf32>
    %223 = arith.maximumf %221, %222 : vector<8x64xf32>
    %224 = arith.truncf %223 : vector<8x64xf32> to vector<8x64xbf16>
    %c0_89 = arith.constant 0 : index
    %c0_90 = arith.constant 0 : index
    %c0_91 = arith.constant 0 : index
    %225 = vector.load %arg16[%c0_89, %c0_90, %c0_91] : memref<1x64x32xbf16, #tpu.memory_space<vmem>>, vector<1x64x32xbf16>
    %226 = vector.shape_cast %225 : vector<1x64x32xbf16> to vector<64x32xbf16>
    %cst_92 = arith.constant dense<0.000000e+00> : vector<8x32xf32>
    %227 = tpu.matmul %224, %226, %cst_92 {dimension_numbers = #tpu.dot_dimension_numbers<[1], [0], [0], [1], [0, 0, 1, 1], [], []>} : vector<8x64xbf16>, vector<64x32xbf16>, vector<8x32xf32> -> vector<8x32xf32>
    %c0_93 = arith.constant 0 : index
    %c0_94 = arith.constant 0 : index
    %c0_95 = arith.constant 0 : index
    %228 = vector.load %arg17[%c0_93, %c0_94, %c0_95] : memref<1x1x32xf32, #tpu.memory_space<vmem>>, vector<1x1x32xf32>
    %229 = vector.shape_cast %228 : vector<1x1x32xf32> to vector<1x32xf32>
    %230 = vector.broadcast %229 : vector<1x32xf32> to vector<8x32xf32>
    %231 = arith.addf %227, %230 : vector<8x32xf32>
    %232 = arith.addf %210, %231 : vector<8x32xf32>
    %c0_96 = arith.constant 0 : index
    %c0_97 = arith.constant 0 : index
    %c0_98 = arith.constant 0 : index
    %233 = vector.load %arg22[%c0_96, %c0_97, %c0_98] : memref<1x1x32xf32, #tpu.memory_space<vmem>>, vector<1x1x32xf32>
    %234 = vector.shape_cast %233 : vector<1x1x32xf32> to vector<1x32xf32>
    %c0_99 = arith.constant 0 : index
    %c0_100 = arith.constant 0 : index
    %c0_101 = arith.constant 0 : index
    %235 = vector.load %arg23[%c0_99, %c0_100, %c0_101] : memref<1x1x32xf32, #tpu.memory_space<vmem>>, vector<1x1x32xf32>
    %236 = vector.shape_cast %235 : vector<1x1x32xf32> to vector<1x32xf32>
    %cst_102 = arith.constant dense<0.000000e+00> : vector<8xf32>
    %237 = vector.multi_reduction <add>, %232, %cst_102 [1] : vector<8x32xf32> to vector<8xf32>
    %238 = vector.shape_cast %237 : vector<8xf32> to vector<8x1xf32>
    %cst_103 = arith.constant 3.200000e+01 : f32
    %239 = vector.broadcast %cst_103 : f32 to vector<8x1xf32>
    %240 = arith.divf %238, %239 : vector<8x1xf32>
    %241 = vector.broadcast %240 : vector<8x1xf32> to vector<8x32xf32>
    %242 = arith.subf %232, %241 : vector<8x32xf32>
    %243 = arith.mulf %242, %242 : vector<8x32xf32>
    %cst_104 = arith.constant dense<0.000000e+00> : vector<8xf32>
    %244 = vector.multi_reduction <add>, %243, %cst_104 [1] : vector<8x32xf32> to vector<8xf32>
    %245 = vector.shape_cast %244 : vector<8xf32> to vector<8x1xf32>
    %cst_105 = arith.constant 3.200000e+01 : f32
    %246 = vector.broadcast %cst_105 : f32 to vector<8x1xf32>
    %247 = arith.divf %245, %246 : vector<8x1xf32>
    %cst_106 = arith.constant 9.99999974E-6 : f32
    %248 = vector.broadcast %cst_106 : f32 to vector<8x1xf32>
    %249 = arith.addf %247, %248 : vector<8x1xf32>
    %250 = math.rsqrt %249 : vector<8x1xf32>
    %251 = vector.broadcast %250 : vector<8x1xf32> to vector<8x32xf32>
    %252 = arith.mulf %242, %251 : vector<8x32xf32>
    %253 = vector.broadcast %234 : vector<1x32xf32> to vector<8x32xf32>
    %254 = arith.mulf %252, %253 : vector<8x32xf32>
    %255 = vector.broadcast %236 : vector<1x32xf32> to vector<8x32xf32>
    %256 = arith.addf %254, %255 : vector<8x32xf32>
    %c0_107 = arith.constant 0 : index
    %c0_108 = arith.constant 0 : index
    %257 = vector.load %arg29[%c0_107, %c0_108] : memref<8x32xf32, #tpu.memory_space<vmem>>, vector<8x32xf32>
    tpu.vector_store %arg29[%c0_107, %c0_108], %256 {strides = array<i32>} : memref<8x32xf32, #tpu.memory_space<vmem>>, vector<8x32xf32>,
    %c1_i32 = arith.constant 1 : i32
    %258 = arith.cmpi eq, %arg1, %c1_i32 : i32
    %259 = arith.extui %258 : i1 to i32
    %c0_i32_109 = arith.constant 0 : i32
    %260 = arith.cmpi ne, %259, %c0_i32_109 : i32
    scf.if %260 {
      %c0_110 = arith.constant 0 : index
      %c0_111 = arith.constant 0 : index
      %261 = vector.load %arg24[%c0_110, %c0_111] : memref<1x32xf32, #tpu.memory_space<vmem>>, vector<1x32xf32>
      %c0_112 = arith.constant 0 : index
      %c0_113 = arith.constant 0 : index
      %262 = vector.load %arg25[%c0_112, %c0_113] : memref<1x32xf32, #tpu.memory_space<vmem>>, vector<1x32xf32>
      %cst_114 = arith.constant dense<0.000000e+00> : vector<8xf32>
      %263 = vector.multi_reduction <add>, %256, %cst_114 [1] : vector<8x32xf32> to vector<8xf32>
      %264 = vector.shape_cast %263 : vector<8xf32> to vector<8x1xf32>
      %cst_115 = arith.constant 3.200000e+01 : f32
      %265 = vector.broadcast %cst_115 : f32 to vector<8x1xf32>
      %266 = arith.divf %264, %265 : vector<8x1xf32>
      %267 = vector.broadcast %266 : vector<8x1xf32> to vector<8x32xf32>
      %268 = arith.subf %256, %267 : vector<8x32xf32>
      %269 = arith.mulf %268, %268 : vector<8x32xf32>
      %cst_116 = arith.constant dense<0.000000e+00> : vector<8xf32>
      %270 = vector.multi_reduction <add>, %269, %cst_116 [1] : vector<8x32xf32> to vector<8xf32>
      %271 = vector.shape_cast %270 : vector<8xf32> to vector<8x1xf32>
      %cst_117 = arith.constant 3.200000e+01 : f32
      %272 = vector.broadcast %cst_117 : f32 to vector<8x1xf32>
      %273 = arith.divf %271, %272 : vector<8x1xf32>
      %cst_118 = arith.constant 9.99999974E-6 : f32
      %274 = vector.broadcast %cst_118 : f32 to vector<8x1xf32>
      %275 = arith.addf %273, %274 : vector<8x1xf32>
      %276 = math.rsqrt %275 : vector<8x1xf32>
      %277 = vector.broadcast %276 : vector<8x1xf32> to vector<8x32xf32>
      %278 = arith.mulf %268, %277 : vector<8x32xf32>
      %279 = vector.broadcast %261 : vector<1x32xf32> to vector<8x32xf32>
      %280 = arith.mulf %278, %279 : vector<8x32xf32>
      %281 = vector.broadcast %262 : vector<1x32xf32> to vector<8x32xf32>
      %282 = arith.addf %280, %281 : vector<8x32xf32>
      %283 = vector.shape_cast %282 : vector<8x32xf32> to vector<1x8x32xf32>
      %c0_119 = arith.constant 0 : index
      %c0_120 = arith.constant 0 : index
      %c0_121 = arith.constant 0 : index
      %284 = vector.load %arg26[%c0_119, %c0_120, %c0_121] : memref<1x8x32xf32, #tpu.memory_space<vmem>>, vector<1x8x32xf32>
      tpu.vector_store %arg26[%c0_119, %c0_120, %c0_121], %283 {strides = array<i32>} : memref<1x8x32xf32, #tpu.memory_space<vmem>>, vector<1x8x32xf32>,
    } else {
    }
    return
  }
  func.func @transform_0(%arg0: i32, %arg1: i32) -> (i32, i32, i32) {
    %c0_i32 = arith.constant 0 : i32
    %c0_i32_0 = arith.constant 0 : i32
    %c0_i32_1 = arith.constant 0 : i32
    return %arg0, %c0_i32, %c0_i32_0 : i32, i32, i32
  }
  func.func @transform_1(%arg0: i32, %arg1: i32) -> (i32, i32, i32) {
    %c0_i32 = arith.constant 0 : i32
    %c0_i32_0 = arith.constant 0 : i32
    %c0_i32_1 = arith.constant 0 : i32
    return %arg0, %c0_i32, %c0_i32_0 : i32, i32, i32
  }
  func.func @transform_2(%arg0: i32, %arg1: i32) -> (i32, i32, i32) {
    %c0_i32 = arith.constant 0 : i32
    %c0_i32_0 = arith.constant 0 : i32
    %c0_i32_1 = arith.constant 0 : i32
    return %arg0, %c0_i32, %c0_i32_0 : i32, i32, i32
  }
  func.func @transform_3(%arg0: i32, %arg1: i32) -> (i32, i32, i32) {
    %c0_i32 = arith.constant 0 : i32
    %c0_i32_0 = arith.constant 0 : i32
    %c0_i32_1 = arith.constant 0 : i32
    return %arg0, %c0_i32, %c0_i32_0 : i32, i32, i32
  }
  func.func @transform_4(%arg0: i32, %arg1: i32) -> (i32, i32, i32) {
    %c0_i32 = arith.constant 0 : i32
    %c0_i32_0 = arith.constant 0 : i32
    %c0_i32_1 = arith.constant 0 : i32
    return %arg1, %c0_i32, %c0_i32_0 : i32, i32, i32
  }
  func.func @transform_5(%arg0: i32, %arg1: i32) -> (i32, i32, i32) {
    %c0_i32 = arith.constant 0 : i32
    %c0_i32_0 = arith.constant 0 : i32
    %c0_i32_1 = arith.constant 0 : i32
    return %arg1, %c0_i32, %c0_i32_0 : i32, i32, i32
  }
  func.func @transform_6(%arg0: i32, %arg1: i32) -> (i32, i32, i32) {
    %c0_i32 = arith.constant 0 : i32
    %c0_i32_0 = arith.constant 0 : i32
    %c0_i32_1 = arith.constant 0 : i32
    return %arg1, %c0_i32, %c0_i32_0 : i32, i32, i32
  }
  func.func @transform_7(%arg0: i32, %arg1: i32) -> (i32, i32, i32) {
    %c0_i32 = arith.constant 0 : i32
    %c0_i32_0 = arith.constant 0 : i32
    %c0_i32_1 = arith.constant 0 : i32
    return %arg1, %c0_i32, %c0_i32_0 : i32, i32, i32
  }
  func.func @transform_8(%arg0: i32, %arg1: i32) -> (i32, i32, i32) {
    %c0_i32 = arith.constant 0 : i32
    %c0_i32_0 = arith.constant 0 : i32
    %c0_i32_1 = arith.constant 0 : i32
    return %arg1, %c0_i32, %c0_i32_0 : i32, i32, i32
  }
  func.func @transform_9(%arg0: i32, %arg1: i32) -> (i32, i32, i32) {
    %c0_i32 = arith.constant 0 : i32
    %c0_i32_0 = arith.constant 0 : i32
    %c0_i32_1 = arith.constant 0 : i32
    return %arg1, %c0_i32, %c0_i32_0 : i32, i32, i32
  }
  func.func @transform_10(%arg0: i32, %arg1: i32) -> (i32, i32, i32) {
    %c0_i32 = arith.constant 0 : i32
    %c0_i32_0 = arith.constant 0 : i32
    %c0_i32_1 = arith.constant 0 : i32
    return %arg1, %c0_i32, %c0_i32_0 : i32, i32, i32
  }
  func.func @transform_11(%arg0: i32, %arg1: i32) -> (i32, i32, i32) {
    %c0_i32 = arith.constant 0 : i32
    %c0_i32_0 = arith.constant 0 : i32
    %c0_i32_1 = arith.constant 0 : i32
    return %arg1, %c0_i32, %c0_i32_0 : i32, i32, i32
  }
  func.func @transform_12(%arg0: i32, %arg1: i32) -> (i32, i32, i32) {
    %c0_i32 = arith.constant 0 : i32
    %c0_i32_0 = arith.constant 0 : i32
    %c0_i32_1 = arith.constant 0 : i32
    return %arg1, %c0_i32, %c0_i32_0 : i32, i32, i32
  }
  func.func @transform_13(%arg0: i32, %arg1: i32) -> (i32, i32, i32) {
    %c0_i32 = arith.constant 0 : i32
    %c0_i32_0 = arith.constant 0 : i32
    %c0_i32_1 = arith.constant 0 : i32
    return %arg1, %c0_i32, %c0_i32_0 : i32, i32, i32
  }
  func.func @transform_14(%arg0: i32, %arg1: i32) -> (i32, i32, i32) {
    %c0_i32 = arith.constant 0 : i32
    %c0_i32_0 = arith.constant 0 : i32
    %c0_i32_1 = arith.constant 0 : i32
    return %arg1, %c0_i32, %c0_i32_0 : i32, i32, i32
  }
  func.func @transform_15(%arg0: i32, %arg1: i32) -> (i32, i32, i32) {
    %c0_i32 = arith.constant 0 : i32
    %c0_i32_0 = arith.constant 0 : i32
    %c0_i32_1 = arith.constant 0 : i32
    return %arg1, %c0_i32, %c0_i32_0 : i32, i32, i32
  }
  func.func @transform_16(%arg0: i32, %arg1: i32) -> (i32, i32, i32) {
    %c0_i32 = arith.constant 0 : i32
    %c0_i32_0 = arith.constant 0 : i32
    %c0_i32_1 = arith.constant 0 : i32
    return %arg1, %c0_i32, %c0_i32_0 : i32, i32, i32
  }
  func.func @transform_17(%arg0: i32, %arg1: i32) -> (i32, i32, i32) {
    %c0_i32 = arith.constant 0 : i32
    %c0_i32_0 = arith.constant 0 : i32
    %c0_i32_1 = arith.constant 0 : i32
    return %arg1, %c0_i32, %c0_i32_0 : i32, i32, i32
  }
  func.func @transform_18(%arg0: i32, %arg1: i32) -> (i32, i32, i32) {
    %c0_i32 = arith.constant 0 : i32
    %c0_i32_0 = arith.constant 0 : i32
    %c0_i32_1 = arith.constant 0 : i32
    return %arg1, %c0_i32, %c0_i32_0 : i32, i32, i32
  }
  func.func @transform_19(%arg0: i32, %arg1: i32) -> (i32, i32, i32) {
    %c0_i32 = arith.constant 0 : i32
    %c0_i32_0 = arith.constant 0 : i32
    %c0_i32_1 = arith.constant 0 : i32
    return %arg1, %c0_i32, %c0_i32_0 : i32, i32, i32
  }
  func.func @transform_20(%arg0: i32, %arg1: i32) -> (i32, i32, i32) {
    %c0_i32 = arith.constant 0 : i32
    %c0_i32_0 = arith.constant 0 : i32
    %c0_i32_1 = arith.constant 0 : i32
    return %arg1, %c0_i32, %c0_i32_0 : i32, i32, i32
  }
  func.func @transform_21(%arg0: i32, %arg1: i32) -> (i32, i32, i32) {
    %c0_i32 = arith.constant 0 : i32
    %c0_i32_0 = arith.constant 0 : i32
    %c0_i32_1 = arith.constant 0 : i32
    return %arg1, %c0_i32, %c0_i32_0 : i32, i32, i32
  }
  func.func @transform_22(%arg0: i32, %arg1: i32) -> (i32, i32) {
    %c0_i32 = arith.constant 0 : i32
    %c0_i32_0 = arith.constant 0 : i32
    %c0_i32_1 = arith.constant 0 : i32
    return %c0_i32, %c0_i32_0 : i32, i32
  }
  func.func @transform_23(%arg0: i32, %arg1: i32) -> (i32, i32) {
    %c0_i32 = arith.constant 0 : i32
    %c0_i32_0 = arith.constant 0 : i32
    %c0_i32_1 = arith.constant 0 : i32
    return %c0_i32, %c0_i32_0 : i32, i32
  }
  func.func @transform_24(%arg0: i32, %arg1: i32) -> (i32, i32, i32) {
    %c0_i32 = arith.constant 0 : i32
    %c0_i32_0 = arith.constant 0 : i32
    %c0_i32_1 = arith.constant 0 : i32
    return %arg0, %c0_i32, %c0_i32_0 : i32, i32, i32
  }
  func.func @transform_25(%arg0: i32, %arg1: i32) -> (i32, i32, i32, i32) {
    %c0_i32 = arith.constant 0 : i32
    %c0_i32_0 = arith.constant 0 : i32
    %c0_i32_1 = arith.constant 0 : i32
    return %arg0, %arg1, %c0_i32, %c0_i32_0 : i32, i32, i32, i32
  }
  func.func @transform_26(%arg0: i32, %arg1: i32) -> (i32, i32, i32, i32) {
    %c0_i32 = arith.constant 0 : i32
    %c0_i32_0 = arith.constant 0 : i32
    %c0_i32_1 = arith.constant 0 : i32
    return %arg0, %arg1, %c0_i32, %c0_i32_0 : i32, i32, i32, i32
  }
}

</mosaic_0001>

<llo_original>
// kernel: tpu_custom_call.1
$region0: #{tpu_custom_call.1}
  #allocation0 [shape = 'u32[]', space=smem, size = 0x4, offset = 0x4, fixed_abs, tag = 'smem constant byte address 0x4 - core index']
  #allocation1 [shape = 'u32[144,128]{1,0:T(1,128)}', space=vmem, size = 0x12000, scoped, tag = 'internal scratch']
  #allocation2 [shape = 'f32[8,32]{1,0:T(8,128)}', space=vmem, size = 0x1000, scoped, tag = 'scratch operand']
  #allocation3 [shape = 'bf16[16,32]{1,0:T(16,128)(2,1)}', space=vmem, size = 0x1000, scoped, tag = 'scratch operand']
  #allocation4 [shape = 'bf16[16,32]{1,0:T(16,128)(2,1)}', space=vmem, size = 0x1000, scoped, tag = 'scratch operand']
  %s0 = inlined_call_operand.hbm [shape: f32[2,8,32], index: 0, kind: input, shape index: {}]
  %s1 = inlined_call_operand.hbm [shape: f32[2,8,32], index: 1, kind: input, shape index: {}]
  %s2 = inlined_call_operand.vmem [shape: f32[2,16,32], index: 2, kind: input, shape index: {}]
  %s3 = inlined_call_operand.vmem [shape: f32[2,16,32], index: 3, kind: input, shape index: {}]
  %s4 = inlined_call_operand.vmem [shape: bf16[2,32,96], index: 4, kind: input, shape index: {}]
  %s5 = inlined_call_operand.vmem [shape: f32[2,1,96], index: 5, kind: input, shape index: {}]
  %s6 = inlined_call_operand.hbm [shape: bf16[2,32,32], index: 6, kind: input, shape index: {}]
  %s7 = inlined_call_operand.vmem [shape: f32[2,1,32], index: 7, kind: input, shape index: {}]
  %s8 = inlined_call_operand.hbm [shape: bf16[2,32,96], index: 8, kind: input, shape index: {}]
  %s9 = inlined_call_operand.vmem [shape: f32[2,1,96], index: 9, kind: input, shape index: {}]
  %s10 = inlined_call_operand.hbm [shape: bf16[2,32,32], index: 10, kind: input, shape index: {}]
  %s11 = inlined_call_operand.vmem [shape: f32[2,1,32], index: 11, kind: input, shape index: {}]
  %s12 = inlined_call_operand.hbm [shape: bf16[2,32,64], index: 12, kind: input, shape index: {}]
  %s13 = inlined_call_operand.vmem [shape: f32[2,1,64], index: 13, kind: input, shape index: {}]
  %s14 = inlined_call_operand.vmem [shape: bf16[2,64,32], index: 14, kind: input, shape index: {}]
  %s15 = inlined_call_operand.vmem [shape: f32[2,1,32], index: 15, kind: input, shape index: {}]
  %s16 = inlined_call_operand.vmem [shape: f32[2,1,32], index: 16, kind: input, shape index: {}]
  %s17 = inlined_call_operand.vmem [shape: f32[2,1,32], index: 17, kind: input, shape index: {}]
  %s18 = inlined_call_operand.vmem [shape: f32[2,1,32], index: 18, kind: input, shape index: {}]
  %s19 = inlined_call_operand.vmem [shape: f32[2,1,32], index: 19, kind: input, shape index: {}]
  %s20 = inlined_call_operand.vmem [shape: f32[2,1,32], index: 20, kind: input, shape index: {}]
  %s21 = inlined_call_operand.vmem [shape: f32[2,1,32], index: 21, kind: input, shape index: {}]
  %s22 = inlined_call_operand.vmem [shape: f32[1,32], index: 22, kind: input, shape index: {}]
  %s23 = inlined_call_operand.vmem [shape: f32[1,32], index: 23, kind: input, shape index: {}]
  %s24 = inlined_call_operand.hbm [shape: f32[2,8,32], index: 24, kind: output, shape index: {0}]
  %s25 = inlined_call_operand.hbm [shape: bf16[2,2,8,8], index: 25, kind: output, shape index: {1}]
  %s26 = inlined_call_operand.hbm [shape: bf16[2,2,8,16], index: 26, kind: output, shape index: {2}]
  %27 = xla_tuple %s24, %s25, %s26
  %s28 = sld [smem:[#allocation0]]
  $region177: #{tpu_custom_call.1} parent=0
    _
  %s30 = ssub.s32 1, %s28
  %s31 = scalar_select 0, %s30, %s28
  $region1: #{tpu_custom_call.1} parent=0
    #allocation5 [shape = 'u8[8192]{0}', space=vmem, size = 0x2000, scoped, tag = 'input window, operand 0']
    #allocation6 [shape = 's32[2]{0}', space=sflag, size = 0x8, scoped, tag = 'scoped memory for tpu_custom_call.1']
    #allocation7 [shape = 's32[2]{0}', space=sflag, size = 0x8, scoped, tag = 'scoped memory for tpu_custom_call.1']
    #allocation8 [shape = 'u8[8192]{0}', space=vmem, size = 0x2000, scoped, tag = 'input window, operand 1']
    #allocation9 [shape = 's32[2]{0}', space=sflag, size = 0x8, scoped, tag = 'scoped memory for tpu_custom_call.1']
    #allocation10 [shape = 'u8[16384]{0}', space=vmem, size = 0x4000, scoped, tag = 'input window, operand 6']
    #allocation11 [shape = 'u8[16384]{0}', space=vmem, size = 0x4000, scoped, tag = 'input window, operand 8']
    #allocation12 [shape = 's32[2]{0}', space=sflag, size = 0x8, scoped, tag = 'scoped memory for tpu_custom_call.1']
    #allocation13 [shape = 'u8[16384]{0}', space=vmem, size = 0x4000, scoped, tag = 'input window, operand 10']
    #allocation14 [shape = 'u8[16384]{0}', space=vmem, size = 0x4000, scoped, tag = 'input window, operand 12']
    #allocation15 [shape = 's32[2]{0}', space=sflag, size = 0x8, scoped, tag = 'scoped memory for tpu_custom_call.1']
    #allocation16 [shape = 'u8[8192]{0}', space=vmem, size = 0x2000, scoped, tag = 'output window, operand 0']
    #allocation17 [shape = 'u8[4096]{0}', space=vmem, size = 0x1000, scoped, tag = 'output window, operand 1']
    #allocation18 [shape = 's32[2]{0}', space=sflag, size = 0x8, scoped, tag = 'scoped memory for tpu_custom_call.1']
    #allocation19 [shape = 'u8[4096]{0}', space=vmem, size = 0x1000, scoped, tag = 'output window, operand 2']
    %32 = vsyncpa [#allocation6], 0
    %s33 = scalar_lea.sflag [#allocation6], 1
    %34 = vsyncpa %s33, 0
    %35 = vsyncpa [#allocation9], 0
    %s36 = scalar_lea.sflag [#allocation9], 1
    %37 = vsyncpa %s36, 0
    %38 = vsyncpa [#allocation12], 0
    %s39 = scalar_lea.sflag [#allocation12], 1
    %40 = vsyncpa %s39, 0
    %41 = vsyncpa [#allocation15], 0
    %s42 = scalar_lea.sflag [#allocation15], 1
    %43 = vsyncpa %s42, 0
    %44 = vsyncpa [#allocation7], 0
    %s45 = scalar_lea.sflag [#allocation7], 1
    %46 = vsyncpa %s45, 0
    %47 = vsyncpa [#allocation18], 0
    %s48 = scalar_lea.sflag [#allocation18], 1
    %49 = vsyncpa %s48, 0
    loop: start=0, step=1, limit=6
    $region2: #{tpu_custom_call.1} parent=1 // loop_pre_header
      _
    $region3: #{tpu_custom_call.1} parent=1 // loop_header
      %s51 = sphi 0, %s55
      %p52 = scmp.ge.s32.totalorder %s51, 6
      %s58 = sphi 0, %s70
      %s59 = sphi 0, %s66
      %s60 = sphi 0, %s58
      %s61 = sphi 0, %s59
      %s62 = sphi 0, %s60
      %s63 = sphi 0, %s61
      %s73 = sphi 0, %s75
      %s76 = sphi 0, %s73
      %s77 = sphi 0, %s76
      %s93 = sphi 0, %s77
      %s99 = sphi 0, %s101
      %s102 = sphi 0, %s99
      %s103 = sphi 0, %s102
      %s119 = sphi 0, %s103
      %s125 = sphi 0, %s127
      %s128 = sphi 0, %s125
      %s129 = sphi 0, %s128
      %s145 = sphi 0, %s129
      %s151 = sphi 0, %s153
      %s154 = sphi 0, %s151
      %s155 = sphi 0, %s154
      %s171 = sphi 0, %s155
      %s177 = sphi 0, %s179
      %s180 = sphi 0, %s177
      %s181 = sphi 0, %s180
      %s197 = sphi 0, %s181
      %s203 = sphi 0, %s205
      %s206 = sphi 0, %s203
      %s207 = sphi 0, %s206
      %s223 = sphi 0, %s207
      %s229 = sphi 0, %s231
      %s232 = sphi 0, %s229
      %s233 = sphi 0, %s232
      %s249 = sphi 0, %s233
      %s255 = sphi 0, %s257
      %s258 = sphi 0, %s255
      %s259 = sphi 0, %s258
      %s275 = sphi 0, %s259
      %s281 = sphi 0, %s283
      %s284 = sphi 0, %s281
      %s285 = sphi 0, %s284
      %s301 = sphi 0, %s285
      %s307 = sphi 0, %s309
      %s310 = sphi 0, %s307
      %s311 = sphi 0, %s310
      %s327 = sphi 0, %s311
      %s333 = sphi 0, %s335
      %s336 = sphi 0, %s333
      %s337 = sphi 0, %s336
      %s353 = sphi 0, %s337
      %s359 = sphi 0, %s361
      %s362 = sphi 0, %s359
      %s363 = sphi 0, %s362
      %s379 = sphi 0, %s363
      %s385 = sphi 0, %s387
      %s388 = sphi 0, %s385
      %s389 = sphi 0, %s388
      %s405 = sphi 0, %s389
      %s411 = sphi 0, %s413
      %s414 = sphi 0, %s411
      %s415 = sphi 0, %s414
      %s431 = sphi 0, %s415
      %s437 = sphi 0, %s439
      %s440 = sphi 0, %s437
      %s441 = sphi 0, %s440
      %s457 = sphi 0, %s441
      %s463 = sphi 0, %s465
      %s466 = sphi 0, %s463
      %s467 = sphi 0, %s466
      %s483 = sphi 0, %s467
      %s489 = sphi 0, %s491
      %s492 = sphi 0, %s489
      %s493 = sphi 0, %s492
      %s509 = sphi 0, %s493
      %s515 = sphi 0, %s517
      %s518 = sphi 0, %s515
      %s519 = sphi 0, %s518
      %s535 = sphi 0, %s519
      %s541 = sphi 0, %s543
      %s544 = sphi 0, %s541
      %s545 = sphi 0, %s544
      %s561 = sphi 0, %s545
      %s567 = sphi 0, %s569
      %s570 = sphi 0, %s567
      %s571 = sphi 0, %s570
      %s587 = sphi 0, %s571
      %s593 = sphi 0, %s595
      %s596 = sphi 0, %s593
      %s597 = sphi 0, %s596
      %s613 = sphi 0, %s597
      %s619 = sphi 0, %s621
      %s622 = sphi 0, %s619
      %s623 = sphi 0, %s622
      %s639 = sphi 0, %s623
      %s643 = sphi 0, %s643
      %s645 = sphi 0, %s643
      %s646 = sphi 0, %s645
      %s660 = sphi 0, %s646
      %s664 = sphi 0, %s664
      %s666 = sphi 0, %s664
      %s667 = sphi 0, %s666
      %s681 = sphi 0, %s667
      %s687 = sphi 0, %s689
      %s690 = sphi 0, %s687
      %s691 = sphi 0, %s690
      %s707 = sphi 0, %s691
      %s715 = sphi 0, %s717
      %s718 = sphi 0, %s715
      %s719 = sphi 0, %s718
      %s735 = sphi 0, %s719
      %s743 = sphi 0, %s745
      %s746 = sphi 0, %s743
      %s747 = sphi 0, %s746
      %s763 = sphi 0, %s747
    $region4: #{tpu_custom_call.1} parent=1 // loop_header_branch
      %54 = sbr.rel (%p52) target = $region8
    $region5: #{tpu_custom_call.1} parent=1 // loop_body
      %s56 = ssub.s32 %s51, 1
      %s57 = ssub.s32 %s51, 2
      %s64 = sadd.s32 1, %s59
      %p65 = scmp.ge.s32.totalorder %s64, 2
      %s66 = scalar_select %p65, 0, %s64
      %s67 = sadd.s32 1, %s58
      %s68 = scalar_select %p65, %s67, %s58
      %p69 = scmp.ge.s32.totalorder %s68, 2
      %s70 = scalar_select %p69, 0, %s68
      %s71 = ssub.s32 %s58, %s70
      %p72 = scmp.eq.s32.totalorder %s71, 0
      %s74 = sadd.s32 %s73, 1
      %s75 = scalar_select %p72, %s73, %s74
      %p78 = pneg %p72
      %p79 = scmp.eq.s32.totalorder %s51, 3
      %p80 = por %p78, %p79
      %p81 = scmp.ne.s32.totalorder %s73, %s76
      %p82 = scmp.eq.s32.totalorder %s51, 0
      %p83 = por %p81, %p82
      %p84 = scmp.ne.s32.totalorder %s73, %s76
      %p85 = scmp.eq.s32.totalorder %s56, 3
      %p86 = por %p84, %p85
      %p87 = scmp.ne.s32.totalorder %s76, %s77
      %p88 = scmp.eq.s32.totalorder %s56, 0
      %p89 = por %p87, %p88
      %p90 = scmp.ne.s32.totalorder %s76, %s77
      %p91 = scmp.eq.s32.totalorder %s57, 3
      %p92 = por %p90, %p91
      %p94 = scmp.ne.s32.totalorder %s77, %s93
      %p95 = scmp.eq.s32.totalorder %s57, 0
      %p96 = por %p94, %p95
      %s97 = ssub.s32 %s58, %s70
      %p98 = scmp.eq.s32.totalorder %s97, 0
      %s100 = sadd.s32 %s99, 1
      %s101 = scalar_select %p98, %s99, %s100
      %p104 = pneg %p98
      %p105 = scmp.eq.s32.totalorder %s51, 3
      %p106 = por %p104, %p105
      %p107 = scmp.ne.s32.totalorder %s99, %s102
      %p108 = scmp.eq.s32.totalorder %s51, 0
      %p109 = por %p107, %p108
      %p110 = scmp.ne.s32.totalorder %s99, %s102
      %p111 = scmp.eq.s32.totalorder %s56, 3
      %p112 = por %p110, %p111
      %p113 = scmp.ne.s32.totalorder %s102, %s103
      %p114 = scmp.eq.s32.totalorder %s56, 0
      %p115 = por %p113, %p114
      %p116 = scmp.ne.s32.totalorder %s102, %s103
      %p117 = scmp.eq.s32.totalorder %s57, 3
      %p118 = por %p116, %p117
      %p120 = scmp.ne.s32.totalorder %s103, %s119
      %p121 = scmp.eq.s32.totalorder %s57, 0
      %p122 = por %p120, %p121
      %s123 = ssub.s32 %s58, %s70
      %p124 = scmp.eq.s32.totalorder %s123, 0
      %s126 = sadd.s32 %s125, 1
      %s127 = scalar_select %p124, %s125, %s126
      %p130 = pneg %p124
      %p131 = scmp.eq.s32.totalorder %s51, 3
      %p132 = por %p130, %p131
      %p133 = scmp.ne.s32.totalorder %s125, %s128
      %p134 = scmp.eq.s32.totalorder %s51, 0
      %p135 = por %p133, %p134
      %p136 = scmp.ne.s32.totalorder %s125, %s128
      %p137 = scmp.eq.s32.totalorder %s56, 3
      %p138 = por %p136, %p137
      %p139 = scmp.ne.s32.totalorder %s128, %s129
      %p140 = scmp.eq.s32.totalorder %s56, 0
      %p141 = por %p139, %p140
      %p142 = scmp.ne.s32.totalorder %s128, %s129
      %p143 = scmp.eq.s32.totalorder %s57, 3
      %p144 = por %p142, %p143
      %p146 = scmp.ne.s32.totalorder %s129, %s145
      %p147 = scmp.eq.s32.totalorder %s57, 0
      %p148 = por %p146, %p147
      %s149 = ssub.s32 %s58, %s70
      %p150 = scmp.eq.s32.totalorder %s149, 0
      %s152 = sadd.s32 %s151, 1
      %s153 = scalar_select %p150, %s151, %s152
      %p156 = pneg %p150
      %p157 = scmp.eq.s32.totalorder %s51, 3
      %p158 = por %p156, %p157
      %p159 = scmp.ne.s32.totalorder %s151, %s154
      %p160 = scmp.eq.s32.totalorder %s51, 0
      %p161 = por %p159, %p160
      %p162 = scmp.ne.s32.totalorder %s151, %s154
      %p163 = scmp.eq.s32.totalorder %s56, 3
      %p164 = por %p162, %p163
      %p165 = scmp.ne.s32.totalorder %s154, %s155
      %p166 = scmp.eq.s32.totalorder %s56, 0
      %p167 = por %p165, %p166
      %p168 = scmp.ne.s32.totalorder %s154, %s155
      %p169 = scmp.eq.s32.totalorder %s57, 3
      %p170 = por %p168, %p169
      %p172 = scmp.ne.s32.totalorder %s155, %s171
      %p173 = scmp.eq.s32.totalorder %s57, 0
      %p174 = por %p172, %p173
      %s175 = ssub.s32 %s59, %s66
      %p176 = scmp.eq.s32.totalorder %s175, 0
      %s178 = sadd.s32 %s177, 1
      %s179 = scalar_select %p176, %s177, %s178
      %p182 = pneg %p176
      %p183 = scmp.eq.s32.totalorder %s51, 3
      %p184 = por %p182, %p183
      %p185 = scmp.ne.s32.totalorder %s177, %s180
      %p186 = scmp.eq.s32.totalorder %s51, 0
      %p187 = por %p185, %p186
      %p188 = scmp.ne.s32.totalorder %s177, %s180
      %p189 = scmp.eq.s32.totalorder %s56, 3
      %p190 = por %p188, %p189
      %p191 = scmp.ne.s32.totalorder %s180, %s181
      %p192 = scmp.eq.s32.totalorder %s56, 0
      %p193 = por %p191, %p192
      %p194 = scmp.ne.s32.totalorder %s180, %s181
      %p195 = scmp.eq.s32.totalorder %s57, 3
      %p196 = por %p194, %p195
      %p198 = scmp.ne.s32.totalorder %s181, %s197
      %p199 = scmp.eq.s32.totalorder %s57, 0
      %p200 = por %p198, %p199
      %s201 = ssub.s32 %s59, %s66
      %p202 = scmp.eq.s32.totalorder %s201, 0
      %s204 = sadd.s32 %s203, 1
      %s205 = scalar_select %p202, %s203, %s204
      %p208 = pneg %p202
      %p209 = scmp.eq.s32.totalorder %s51, 3
      %p210 = por %p208, %p209
      %p211 = scmp.ne.s32.totalorder %s203, %s206
      %p212 = scmp.eq.s32.totalorder %s51, 0
      %p213 = por %p211, %p212
      %p214 = scmp.ne.s32.totalorder %s203, %s206
      %p215 = scmp.eq.s32.totalorder %s56, 3
      %p216 = por %p214, %p215
      %p217 = scmp.ne.s32.totalorder %s206, %s207
      %p218 = scmp.eq.s32.totalorder %s56, 0
      %p219 = por %p217, %p218
      %p220 = scmp.ne.s32.totalorder %s206, %s207
      %p221 = scmp.eq.s32.totalorder %s57, 3
      %p222 = por %p220, %p221
      %p224 = scmp.ne.s32.totalorder %s207, %s223
      %p225 = scmp.eq.s32.totalorder %s57, 0
      %p226 = por %p224, %p225
      %s227 = ssub.s32 %s59, %s66
      %p228 = scmp.eq.s32.totalorder %s227, 0
      %s230 = sadd.s32 %s229, 1
      %s231 = scalar_select %p228, %s229, %s230
      %p234 = pneg %p228
      %p235 = scmp.eq.s32.totalorder %s51, 3
      %p236 = por %p234, %p235
      %p237 = scmp.ne.s32.totalorder %s229, %s232
      %p238 = scmp.eq.s32.totalorder %s51, 0
      %p239 = por %p237, %p238
      %p240 = scmp.ne.s32.totalorder %s229, %s232
      %p241 = scmp.eq.s32.totalorder %s56, 3
      %p242 = por %p240, %p241
      %p243 = scmp.ne.s32.totalorder %s232, %s233
      %p244 = scmp.eq.s32.totalorder %s56, 0
      %p245 = por %p243, %p244
      %p246 = scmp.ne.s32.totalorder %s232, %s233
      %p247 = scmp.eq.s32.totalorder %s57, 3
      %p248 = por %p246, %p247
      %p250 = scmp.ne.s32.totalorder %s233, %s249
      %p251 = scmp.eq.s32.totalorder %s57, 0
      %p252 = por %p250, %p251
      %s253 = ssub.s32 %s59, %s66
      %p254 = scmp.eq.s32.totalorder %s253, 0
      %s256 = sadd.s32 %s255, 1
      %s257 = scalar_select %p254, %s255, %s256
      %p260 = pneg %p254
      %p261 = scmp.eq.s32.totalorder %s51, 3
      %p262 = por %p260, %p261
      %p263 = scmp.ne.s32.totalorder %s255, %s258
      %p264 = scmp.eq.s32.totalorder %s51, 0
      %p265 = por %p263, %p264
      %p266 = scmp.ne.s32.totalorder %s255, %s258
      %p267 = scmp.eq.s32.totalorder %s56, 3
      %p268 = por %p266, %p267
      %p269 = scmp.ne.s32.totalorder %s258, %s259
      %p270 = scmp.eq.s32.totalorder %s56, 0
      %p271 = por %p269, %p270
      %p272 = scmp.ne.s32.totalorder %s258, %s259
      %p273 = scmp.eq.s32.totalorder %s57, 3
      %p274 = por %p272, %p273
      %p276 = scmp.ne.s32.totalorder %s259, %s275
      %p277 = scmp.eq.s32.totalorder %s57, 0
      %p278 = por %p276, %p277
      %s279 = ssub.s32 %s59, %s66
      %p280 = scmp.eq.s32.totalorder %s279, 0
      %s282 = sadd.s32 %s281, 1
      %s283 = scalar_select %p280, %s281, %s282
      %p286 = pneg %p280
      %p287 = scmp.eq.s32.totalorder %s51, 3
      %p288 = por %p286, %p287
      %p289 = scmp.ne.s32.totalorder %s281, %s284
      %p290 = scmp.eq.s32.totalorder %s51, 0
      %p291 = por %p289, %p290
      %p292 = scmp.ne.s32.totalorder %s281, %s284
      %p293 = scmp.eq.s32.totalorder %s56, 3
      %p294 = por %p292, %p293
      %p295 = scmp.ne.s32.totalorder %s284, %s285
      %p296 = scmp.eq.s32.totalorder %s56, 0
      %p297 = por %p295, %p296
      %p298 = scmp.ne.s32.totalorder %s284, %s285
      %p299 = scmp.eq.s32.totalorder %s57, 3
      %p300 = por %p298, %p299
      %p302 = scmp.ne.s32.totalorder %s285, %s301
      %p303 = scmp.eq.s32.totalorder %s57, 0
      %p304 = por %p302, %p303
      %s305 = ssub.s32 %s59, %s66
      %p306 = scmp.eq.s32.totalorder %s305, 0
      %s308 = sadd.s32 %s307, 1
      %s309 = scalar_select %p306, %s307, %s308
      %p312 = pneg %p306
      %p313 = scmp.eq.s32.totalorder %s51, 3
      %p314 = por %p312, %p313
      %p315 = scmp.ne.s32.totalorder %s307, %s310
      %p316 = scmp.eq.s32.totalorder %s51, 0
      %p317 = por %p315, %p316
      %p318 = scmp.ne.s32.totalorder %s307, %s310
      %p319 = scmp.eq.s32.totalorder %s56, 3
      %p320 = por %p318, %p319
      %p321 = scmp.ne.s32.totalorder %s310, %s311
      %p322 = scmp.eq.s32.totalorder %s56, 0
      %p323 = por %p321, %p322
      %p324 = scmp.ne.s32.totalorder %s310, %s311
      %p325 = scmp.eq.s32.totalorder %s57, 3
      %p326 = por %p324, %p325
      %p328 = scmp.ne.s32.totalorder %s311, %s327
      %p329 = scmp.eq.s32.totalorder %s57, 0
      %p330 = por %p328, %p329
      %s331 = ssub.s32 %s59, %s66
      %p332 = scmp.eq.s32.totalorder %s331, 0
      %s334 = sadd.s32 %s333, 1
      %s335 = scalar_select %p332, %s333, %s334
      %p338 = pneg %p332
      %p339 = scmp.eq.s32.totalorder %s51, 3
      %p340 = por %p338, %p339
      %p341 = scmp.ne.s32.totalorder %s333, %s336
      %p342 = scmp.eq.s32.totalorder %s51, 0
      %p343 = por %p341, %p342
      %p344 = scmp.ne.s32.totalorder %s333, %s336
      %p345 = scmp.eq.s32.totalorder %s56, 3
      %p346 = por %p344, %p345
      %p347 = scmp.ne.s32.totalorder %s336, %s337
      %p348 = scmp.eq.s32.totalorder %s56, 0
      %p349 = por %p347, %p348
      %p350 = scmp.ne.s32.totalorder %s336, %s337
      %p351 = scmp.eq.s32.totalorder %s57, 3
      %p352 = por %p350, %p351
      %p354 = scmp.ne.s32.totalorder %s337, %s353
      %p355 = scmp.eq.s32.totalorder %s57, 0
      %p356 = por %p354, %p355
      %s357 = ssub.s32 %s59, %s66
      %p358 = scmp.eq.s32.totalorder %s357, 0
      %s360 = sadd.s32 %s359, 1
      %s361 = scalar_select %p358, %s359, %s360
      %p364 = pneg %p358
      %p365 = scmp.eq.s32.totalorder %s51, 3
      %p366 = por %p364, %p365
      %p367 = scmp.ne.s32.totalorder %s359, %s362
      %p368 = scmp.eq.s32.totalorder %s51, 0
      %p369 = por %p367, %p368
      %p370 = scmp.ne.s32.totalorder %s359, %s362
      %p371 = scmp.eq.s32.totalorder %s56, 3
      %p372 = por %p370, %p371
      %p373 = scmp.ne.s32.totalorder %s362, %s363
      %p374 = scmp.eq.s32.totalorder %s56, 0
      %p375 = por %p373, %p374
      %p376 = scmp.ne.s32.totalorder %s362, %s363
      %p377 = scmp.eq.s32.totalorder %s57, 3
      %p378 = por %p376, %p377
      %p380 = scmp.ne.s32.totalorder %s363, %s379
      %p381 = scmp.eq.s32.totalorder %s57, 0
      %p382 = por %p380, %p381
      %s383 = ssub.s32 %s59, %s66
      %p384 = scmp.eq.s32.totalorder %s383, 0
      %s386 = sadd.s32 %s385, 1
      %s387 = scalar_select %p384, %s385, %s386
      %p390 = pneg %p384
      %p391 = scmp.eq.s32.totalorder %s51, 3
      %p392 = por %p390, %p391
      %p393 = scmp.ne.s32.totalorder %s385, %s388
      %p394 = scmp.eq.s32.totalorder %s51, 0
      %p395 = por %p393, %p394
      %p396 = scmp.ne.s32.totalorder %s385, %s388
      %p397 = scmp.eq.s32.totalorder %s56, 3
      %p398 = por %p396, %p397
      %p399 = scmp.ne.s32.totalorder %s388, %s389
      %p400 = scmp.eq.s32.totalorder %s56, 0
      %p401 = por %p399, %p400
      %p402 = scmp.ne.s32.totalorder %s388, %s389
      %p403 = scmp.eq.s32.totalorder %s57, 3
      %p404 = por %p402, %p403
      %p406 = scmp.ne.s32.totalorder %s389, %s405
      %p407 = scmp.eq.s32.totalorder %s57, 0
      %p408 = por %p406, %p407
      %s409 = ssub.s32 %s59, %s66
      %p410 = scmp.eq.s32.totalorder %s409, 0
      %s412 = sadd.s32 %s411, 1
      %s413 = scalar_select %p410, %s411, %s412
      %p416 = pneg %p410
      %p417 = scmp.eq.s32.totalorder %s51, 3
      %p418 = por %p416, %p417
      %p419 = scmp.ne.s32.totalorder %s411, %s414
      %p420 = scmp.eq.s32.totalorder %s51, 0
      %p421 = por %p419, %p420
      %p422 = scmp.ne.s32.totalorder %s411, %s414
      %p423 = scmp.eq.s32.totalorder %s56, 3
      %p424 = por %p422, %p423
      %p425 = scmp.ne.s32.totalorder %s414, %s415
      %p426 = scmp.eq.s32.totalorder %s56, 0
      %p427 = por %p425, %p426
      %p428 = scmp.ne.s32.totalorder %s414, %s415
      %p429 = scmp.eq.s32.totalorder %s57, 3
      %p430 = por %p428, %p429
      %p432 = scmp.ne.s32.totalorder %s415, %s431
      %p433 = scmp.eq.s32.totalorder %s57, 0
      %p434 = por %p432, %p433
      %s435 = ssub.s32 %s59, %s66
      %p436 = scmp.eq.s32.totalorder %s435, 0
      %s438 = sadd.s32 %s437, 1
      %s439 = scalar_select %p436, %s437, %s438
      %p442 = pneg %p436
      %p443 = scmp.eq.s32.totalorder %s51, 3
      %p444 = por %p442, %p443
      %p445 = scmp.ne.s32.totalorder %s437, %s440
      %p446 = scmp.eq.s32.totalorder %s51, 0
      %p447 = por %p445, %p446
      %p448 = scmp.ne.s32.totalorder %s437, %s440
      %p449 = scmp.eq.s32.totalorder %s56, 3
      %p450 = por %p448, %p449
      %p451 = scmp.ne.s32.totalorder %s440, %s441
      %p452 = scmp.eq.s32.totalorder %s56, 0
      %p453 = por %p451, %p452
      %p454 = scmp.ne.s32.totalorder %s440, %s441
      %p455 = scmp.eq.s32.totalorder %s57, 3
      %p456 = por %p454, %p455
      %p458 = scmp.ne.s32.totalorder %s441, %s457
      %p459 = scmp.eq.s32.totalorder %s57, 0
      %p460 = por %p458, %p459
      %s461 = ssub.s32 %s59, %s66
      %p462 = scmp.eq.s32.totalorder %s461, 0
      %s464 = sadd.s32 %s463, 1
      %s465 = scalar_select %p462, %s463, %s464
      %p468 = pneg %p462
      %p469 = scmp.eq.s32.totalorder %s51, 3
      %p470 = por %p468, %p469
      %p471 = scmp.ne.s32.totalorder %s463, %s466
      %p472 = scmp.eq.s32.totalorder %s51, 0
      %p473 = por %p471, %p472
      %p474 = scmp.ne.s32.totalorder %s463, %s466
      %p475 = scmp.eq.s32.totalorder %s56, 3
      %p476 = por %p474, %p475
      %p477 = scmp.ne.s32.totalorder %s466, %s467
      %p478 = scmp.eq.s32.totalorder %s56, 0
      %p479 = por %p477, %p478
      %p480 = scmp.ne.s32.totalorder %s466, %s467
      %p481 = scmp.eq.s32.totalorder %s57, 3
      %p482 = por %p480, %p481
      %p484 = scmp.ne.s32.totalorder %s467, %s483
      %p485 = scmp.eq.s32.totalorder %s57, 0
      %p486 = por %p484, %p485
      %s487 = ssub.s32 %s59, %s66
      %p488 = scmp.eq.s32.totalorder %s487, 0
      %s490 = sadd.s32 %s489, 1
      %s491 = scalar_select %p488, %s489, %s490
      %p494 = pneg %p488
      %p495 = scmp.eq.s32.totalorder %s51, 3
      %p496 = por %p494, %p495
      %p497 = scmp.ne.s32.totalorder %s489, %s492
      %p498 = scmp.eq.s32.totalorder %s51, 0
      %p499 = por %p497, %p498
      %p500 = scmp.ne.s32.totalorder %s489, %s492
      %p501 = scmp.eq.s32.totalorder %s56, 3
      %p502 = por %p500, %p501
      %p503 = scmp.ne.s32.totalorder %s492, %s493
      %p504 = scmp.eq.s32.totalorder %s56, 0
      %p505 = por %p503, %p504
      %p506 = scmp.ne.s32.totalorder %s492, %s493
      %p507 = scmp.eq.s32.totalorder %s57, 3
      %p508 = por %p506, %p507
      %p510 = scmp.ne.s32.totalorder %s493, %s509
      %p511 = scmp.eq.s32.totalorder %s57, 0
      %p512 = por %p510, %p511
      %s513 = ssub.s32 %s59, %s66
      %p514 = scmp.eq.s32.totalorder %s513, 0
      %s516 = sadd.s32 %s515, 1
      %s517 = scalar_select %p514, %s515, %s516
      %p520 = pneg %p514
      %p521 = scmp.eq.s32.totalorder %s51, 3
      %p522 = por %p520, %p521
      %p523 = scmp.ne.s32.totalorder %s515, %s518
      %p524 = scmp.eq.s32.totalorder %s51, 0
      %p525 = por %p523, %p524
      %p526 = scmp.ne.s32.totalorder %s515, %s518
      %p527 = scmp.eq.s32.totalorder %s56, 3
      %p528 = por %p526, %p527
      %p529 = scmp.ne.s32.totalorder %s518, %s519
      %p530 = scmp.eq.s32.totalorder %s56, 0
      %p531 = por %p529, %p530
      %p532 = scmp.ne.s32.totalorder %s518, %s519
      %p533 = scmp.eq.s32.totalorder %s57, 3
      %p534 = por %p532, %p533
      %p536 = scmp.ne.s32.totalorder %s519, %s535
      %p537 = scmp.eq.s32.totalorder %s57, 0
      %p538 = por %p536, %p537
      %s539 = ssub.s32 %s59, %s66
      %p540 = scmp.eq.s32.totalorder %s539, 0
      %s542 = sadd.s32 %s541, 1
      %s543 = scalar_select %p540, %s541, %s542
      %p546 = pneg %p540
      %p547 = scmp.eq.s32.totalorder %s51, 3
      %p548 = por %p546, %p547
      %p549 = scmp.ne.s32.totalorder %s541, %s544
      %p550 = scmp.eq.s32.totalorder %s51, 0
      %p551 = por %p549, %p550
      %p552 = scmp.ne.s32.totalorder %s541, %s544
      %p553 = scmp.eq.s32.totalorder %s56, 3
      %p554 = por %p552, %p553
      %p555 = scmp.ne.s32.totalorder %s544, %s545
      %p556 = scmp.eq.s32.totalorder %s56, 0
      %p557 = por %p555, %p556
      %p558 = scmp.ne.s32.totalorder %s544, %s545
      %p559 = scmp.eq.s32.totalorder %s57, 3
      %p560 = por %p558, %p559
      %p562 = scmp.ne.s32.totalorder %s545, %s561
      %p563 = scmp.eq.s32.totalorder %s57, 0
      %p564 = por %p562, %p563
      %s565 = ssub.s32 %s59, %s66
      %p566 = scmp.eq.s32.totalorder %s565, 0
      %s568 = sadd.s32 %s567, 1
      %s569 = scalar_select %p566, %s567, %s568
      %p572 = pneg %p566
      %p573 = scmp.eq.s32.totalorder %s51, 3
      %p574 = por %p572, %p573
      %p575 = scmp.ne.s32.totalorder %s567, %s570
      %p576 = scmp.eq.s32.totalorder %s51, 0
      %p577 = por %p575, %p576
      %p578 = scmp.ne.s32.totalorder %s567, %s570
      %p579 = scmp.eq.s32.totalorder %s56, 3
      %p580 = por %p578, %p579
      %p581 = scmp.ne.s32.totalorder %s570, %s571
      %p582 = scmp.eq.s32.totalorder %s56, 0
      %p583 = por %p581, %p582
      %p584 = scmp.ne.s32.totalorder %s570, %s571
      %p585 = scmp.eq.s32.totalorder %s57, 3
      %p586 = por %p584, %p585
      %p588 = scmp.ne.s32.totalorder %s571, %s587
      %p589 = scmp.eq.s32.totalorder %s57, 0
      %p590 = por %p588, %p589
      %s591 = ssub.s32 %s59, %s66
      %p592 = scmp.eq.s32.totalorder %s591, 0
      %s594 = sadd.s32 %s593, 1
      %s595 = scalar_select %p592, %s593, %s594
      %p598 = pneg %p592
      %p599 = scmp.eq.s32.totalorder %s51, 3
      %p600 = por %p598, %p599
      %p601 = scmp.ne.s32.totalorder %s593, %s596
      %p602 = scmp.eq.s32.totalorder %s51, 0
      %p603 = por %p601, %p602
      %p604 = scmp.ne.s32.totalorder %s593, %s596
      %p605 = scmp.eq.s32.totalorder %s56, 3
      %p606 = por %p604, %p605
      %p607 = scmp.ne.s32.totalorder %s596, %s597
      %p608 = scmp.eq.s32.totalorder %s56, 0
      %p609 = por %p607, %p608
      %p610 = scmp.ne.s32.totalorder %s596, %s597
      %p611 = scmp.eq.s32.totalorder %s57, 3
      %p612 = por %p610, %p611
      %p614 = scmp.ne.s32.totalorder %s597, %s613
      %p615 = scmp.eq.s32.totalorder %s57, 0
      %p616 = por %p614, %p615
      %s617 = ssub.s32 %s59, %s66
      %p618 = scmp.eq.s32.totalorder %s617, 0
      %s620 = sadd.s32 %s619, 1
      %s621 = scalar_select %p618, %s619, %s620
      %p624 = pneg %p618
      %p625 = scmp.eq.s32.totalorder %s51, 3
      %p626 = por %p624, %p625
      %p627 = scmp.ne.s32.totalorder %s619, %s622
      %p628 = scmp.eq.s32.totalorder %s51, 0
      %p629 = por %p627, %p628
      %p630 = scmp.ne.s32.totalorder %s619, %s622
      %p631 = scmp.eq.s32.totalorder %s56, 3
      %p632 = por %p630, %p631
      %p633 = scmp.ne.s32.totalorder %s622, %s623
      %p634 = scmp.eq.s32.totalorder %s56, 0
      %p635 = por %p633, %p634
      %p636 = scmp.ne.s32.totalorder %s622, %s623
      %p637 = scmp.eq.s32.totalorder %s57, 3
      %p638 = por %p636, %p637
      %p640 = scmp.ne.s32.totalorder %s623, %s639
      %p641 = scmp.eq.s32.totalorder %s57, 0
      %p642 = por %p640, %p641
      %s644 = sadd.s32 %s643, 1
      %p647 = scmp.eq.s32.totalorder %s51, 3
      %p648 = scmp.ne.s32.totalorder %s643, %s645
      %p649 = scmp.eq.s32.totalorder %s51, 0
      %p650 = por %p648, %p649
      %p651 = scmp.ne.s32.totalorder %s643, %s645
      %p652 = scmp.eq.s32.totalorder %s56, 3
      %p653 = por %p651, %p652
      %p654 = scmp.ne.s32.totalorder %s645, %s646
      %p655 = scmp.eq.s32.totalorder %s56, 0
      %p656 = por %p654, %p655
      %p657 = scmp.ne.s32.totalorder %s645, %s646
      %p658 = scmp.eq.s32.totalorder %s57, 3
      %p659 = por %p657, %p658
      %p661 = scmp.ne.s32.totalorder %s646, %s660
      %p662 = scmp.eq.s32.totalorder %s57, 0
      %p663 = por %p661, %p662
      %s665 = sadd.s32 %s664, 1
      %p668 = scmp.eq.s32.totalorder %s51, 3
      %p669 = scmp.ne.s32.totalorder %s664, %s666
      %p670 = scmp.eq.s32.totalorder %s51, 0
      %p671 = por %p669, %p670
      %p672 = scmp.ne.s32.totalorder %s664, %s666
      %p673 = scmp.eq.s32.totalorder %s56, 3
      %p674 = por %p672, %p673
      %p675 = scmp.ne.s32.totalorder %s666, %s667
      %p676 = scmp.eq.s32.totalorder %s56, 0
      %p677 = por %p675, %p676
      %p678 = scmp.ne.s32.totalorder %s666, %s667
      %p679 = scmp.eq.s32.totalorder %s57, 3
      %p680 = por %p678, %p679
      %p682 = scmp.ne.s32.totalorder %s667, %s681
      %p683 = scmp.eq.s32.totalorder %s57, 0
      %p684 = por %p682, %p683
      %s685 = ssub.s32 %s58, %s70
      %p686 = scmp.eq.s32.totalorder %s685, 0
      %s688 = sadd.s32 %s687, 1
      %s689 = scalar_select %p686, %s687, %s688
      %p692 = pneg %p686
      %p693 = scmp.eq.s32.totalorder %s51, 3
      %p694 = por %p692, %p693
      %p695 = scmp.ne.s32.totalorder %s687, %s690
      %p696 = scmp.eq.s32.totalorder %s51, 0
      %p697 = por %p695, %p696
      %p698 = scmp.ne.s32.totalorder %s687, %s690
      %p699 = scmp.eq.s32.totalorder %s56, 3
      %p700 = por %p698, %p699
      %p701 = scmp.ne.s32.totalorder %s690, %s691
      %p702 = scmp.eq.s32.totalorder %s56, 0
      %p703 = por %p701, %p702
      %p704 = scmp.ne.s32.totalorder %s690, %s691
      %p705 = scmp.eq.s32.totalorder %s57, 3
      %p706 = por %p704, %p705
      %p708 = scmp.ne.s32.totalorder %s691, %s707
      %p709 = scmp.eq.s32.totalorder %s57, 0
      %p710 = por %p708, %p709
      %s711 = ssub.s32 %s58, %s70
      %s712 = ssub.s32 %s59, %s66
      %s713 = sor.u32 %s711, %s712
      %p714 = scmp.eq.s32.totalorder %s713, 0
      %s716 = sadd.s32 %s715, 1
      %s717 = scalar_select %p714, %s715, %s716
      %p720 = pneg %p714
      %p721 = scmp.eq.s32.totalorder %s51, 3
      %p722 = por %p720, %p721
      %p723 = scmp.ne.s32.totalorder %s715, %s718
      %p724 = scmp.eq.s32.totalorder %s51, 0
      %p725 = por %p723, %p724
      %p726 = scmp.ne.s32.totalorder %s715, %s718
      %p727 = scmp.eq.s32.totalorder %s56, 3
      %p728 = por %p726, %p727
      %p729 = scmp.ne.s32.totalorder %s718, %s719
      %p730 = scmp.eq.s32.totalorder %s56, 0
      %p731 = por %p729, %p730
      %p732 = scmp.ne.s32.totalorder %s718, %s719
      %p733 = scmp.eq.s32.totalorder %s57, 3
      %p734 = por %p732, %p733
      %p736 = scmp.ne.s32.totalorder %s719, %s735
      %p737 = scmp.eq.s32.totalorder %s57, 0
      %p738 = por %p736, %p737
      %s739 = ssub.s32 %s58, %s70
      %s740 = ssub.s32 %s59, %s66
      %s741 = sor.u32 %s739, %s740
      %p742 = scmp.eq.s32.totalorder %s741, 0
      %s744 = sadd.s32 %s743, 1
      %s745 = scalar_select %p742, %s743, %s744
      %p748 = pneg %p742
      %p749 = scmp.eq.s32.totalorder %s51, 3
      %p750 = por %p748, %p749
      %p751 = scmp.ne.s32.totalorder %s743, %s746
      %p752 = scmp.eq.s32.totalorder %s51, 0
      %p753 = por %p751, %p752
      %p754 = scmp.ne.s32.totalorder %s743, %s746
      %p755 = scmp.eq.s32.totalorder %s56, 3
      %p756 = por %p754, %p755
      %p757 = scmp.ne.s32.totalorder %s746, %s747
      %p758 = scmp.eq.s32.totalorder %s56, 0
      %p759 = por %p757, %p758
      %p760 = scmp.ne.s32.totalorder %s746, %s747
      %p761 = scmp.eq.s32.totalorder %s57, 3
      %p762 = por %p760, %p761
      %p764 = scmp.ne.s32.totalorder %s747, %s763
      %p765 = scmp.eq.s32.totalorder %s57, 0
      %p766 = por %p764, %p765
      %p767 = scmp.le.s32.totalorder 1, %s51
      %p768 = scmp.lt.s32.totalorder %s51, 5
      %p769 = pnand %p767, %p768
      %p770 = pneg %p769
      // Predicated region
      $region9: #{tpu_custom_call.1} parent=5 // pred_check
        _
      $region10: #{tpu_custom_call.1} parent=5 // pred_check_branch
        %772 = sbr.rel (%p769) target = $region12
      $region11: #{tpu_custom_call.1} parent=5 // pred_region
        %s773 = ssub.s32 %s51, 1
        // Predicated region
        $region13: #{tpu_custom_call.1} parent=11 // pred_check
          %p774 = pneg %p656
        $region14: #{tpu_custom_call.1} parent=11 // pred_check_branch
          %776 = sbr.rel (%p774) target = $region16
        $region15: #{tpu_custom_call.1} parent=11 // pred_region
          _
        $region16: #{tpu_custom_call.1} parent=11 // pred_fallthru
          _
        // Predicated region
        $region17: #{tpu_custom_call.1} parent=11 // pred_check
          %p777 = pneg %p677
        $region18: #{tpu_custom_call.1} parent=11 // pred_check_branch
          %779 = sbr.rel (%p777) target = $region20
        $region19: #{tpu_custom_call.1} parent=11 // pred_region
          _
        $region20: #{tpu_custom_call.1} parent=11 // pred_fallthru
          _
      $region12: #{tpu_custom_call.1} parent=5 // pred_fallthru
        _
      %p780 = scmp.lt.s32.totalorder %s51, 4
      // Predicated region
      $region21: #{tpu_custom_call.1} parent=5 // pred_check
        %p781 = pneg %p780
      $region22: #{tpu_custom_call.1} parent=5 // pred_check_branch
        %783 = sbr.rel (%p781) target = $region24
      $region23: #{tpu_custom_call.1} parent=5 // pred_region
        // Predicated region
        $region25: #{tpu_custom_call.1} parent=23 // pred_check
          %p784 = pneg %p83
        $region26: #{tpu_custom_call.1} parent=23 // pred_check_branch
          %786 = sbr.rel (%p784) target = $region28
        $region27: #{tpu_custom_call.1} parent=23 // pred_region
          %s787 = sand.u32 %s73, 1
          %s788 = scalar_lea.sflag [#allocation6], %s787
          %s789 = sand.u32 %s73, 1
          %s790 = smul.addr %s789, 8
          %s791 = scalar_lea.vmem [#allocation5], %s790
          %s793 = ssub.s32 128, 128
          %794 = vsyncadd %s788, %s793
          %s795 = smul.addr %s58, 128
          %s796 = scalar_lea.hbm %s0, %s795
          %s798 = sshll.u32 %s791, 4
          %s799 = int_to_ptr.vmem [resolvable:$true] %s798
          %801 = dma.hbm_to_vmem [thread:$0]  %s796, 128, %s799, %s788
        $region28: #{tpu_custom_call.1} parent=23 // pred_fallthru
          _
        // Predicated region
        $region29: #{tpu_custom_call.1} parent=23 // pred_check
          %p802 = pneg %p109
        $region30: #{tpu_custom_call.1} parent=23 // pred_check_branch
          %804 = sbr.rel (%p802) target = $region32
        $region31: #{tpu_custom_call.1} parent=23 // pred_region
          %s805 = sand.u32 %s51, 1
          %s806 = scalar_lea.sflag [#allocation9], %s805
          %s807 = sand.u32 %s99, 1
          %s808 = smul.addr %s807, 8
          %s809 = scalar_lea.vmem [#allocation8], %s808
          %s811 = ssub.s32 128, 128
          %812 = vsyncadd %s806, %s811
          %s813 = smul.addr %s58, 128
          %s814 = scalar_lea.hbm %s1, %s813
          %s816 = sshll.u32 %s809, 4
          %s817 = int_to_ptr.vmem [resolvable:$true] %s816
          %819 = dma.hbm_to_vmem [thread:$0]  %s814, 128, %s817, %s806
        $region32: #{tpu_custom_call.1} parent=23 // pred_fallthru
          _
        // Predicated region
        $region33: #{tpu_custom_call.1} parent=23 // pred_check
          %p820 = pneg %p135
        $region34: #{tpu_custom_call.1} parent=23 // pred_check_branch
          %822 = sbr.rel (%p820) target = $region36
        $region35: #{tpu_custom_call.1} parent=23 // pred_region
          %p823 = scmp.lt.s32.totalorder %s58, 1
          %s824 = scalar_select %p823, %s58, 1
          %s825 = smul.addr %s824, 2
          %s826 = smul.addr %s825, 8
          %s827 = scalar_lea.vmem %s2, %s826
        $region36: #{tpu_custom_call.1} parent=23 // pred_fallthru
          _
        // Predicated region
        $region37: #{tpu_custom_call.1} parent=23 // pred_check
          %p828 = pneg %p161
        $region38: #{tpu_custom_call.1} parent=23 // pred_check_branch
          %830 = sbr.rel (%p828) target = $region40
        $region39: #{tpu_custom_call.1} parent=23 // pred_region
          %p831 = scmp.lt.s32.totalorder %s58, 1
          %s832 = scalar_select %p831, %s58, 1
          %s833 = smul.addr %s832, 2
          %s834 = smul.addr %s833, 8
          %s835 = scalar_lea.vmem %s3, %s834
        $region40: #{tpu_custom_call.1} parent=23 // pred_fallthru
          _
        // Predicated region
        $region41: #{tpu_custom_call.1} parent=23 // pred_check
          %p836 = pneg %p187
        $region42: #{tpu_custom_call.1} parent=23 // pred_check_branch
          %838 = sbr.rel (%p836) target = $region44
        $region43: #{tpu_custom_call.1} parent=23 // pred_region
          %p839 = scmp.lt.s32.totalorder %s59, 1
          %s840 = scalar_select %p839, %s59, 1
          %s841 = smul.addr %s840, 4
          %s842 = smul.addr %s841, 4
          %s843 = scalar_lea.vmem %s4, %s842
        $region44: #{tpu_custom_call.1} parent=23 // pred_fallthru
          _
        // Predicated region
        $region45: #{tpu_custom_call.1} parent=23 // pred_check
          %p844 = pneg %p213
        $region46: #{tpu_custom_call.1} parent=23 // pred_check_branch
          %846 = sbr.rel (%p844) target = $region48
        $region47: #{tpu_custom_call.1} parent=23 // pred_region
          %p847 = scmp.lt.s32.totalorder %s59, 1
          %s848 = scalar_select %p847, %s59, 1
          %s849 = scalar_lea.vmem %s5, %s848
        $region48: #{tpu_custom_call.1} parent=23 // pred_fallthru
          _
        // Predicated region
        $region49: #{tpu_custom_call.1} parent=23 // pred_check
          %p850 = pneg %p239
        $region50: #{tpu_custom_call.1} parent=23 // pred_check_branch
          %852 = sbr.rel (%p850) target = $region52
        $region51: #{tpu_custom_call.1} parent=23 // pred_region
          %s853 = sand.u32 %s51, 1
          %s854 = scalar_lea.sflag [#allocation9], %s853
          %s855 = sand.u32 %s229, 1
          %s856 = smul.addr %s855, 16
          %s857 = scalar_lea.vmem [#allocation10], %s856
          %s859 = ssub.s32 256, 256
          %860 = vsyncadd %s854, %s859
          %s861 = smul.addr %s59, 4
          %s862 = smul.addr %s861, 64
          %s863 = scalar_lea.hbm %s6, %s862
          %s864 = sshll.u32 %s857, 4
          %s865 = int_to_ptr.vmem [resolvable:$true] %s864
          %870 = dma.hbm_to_vmem [thread:$0]  %s863, 256, %s865, %s854, 64, 64, 4
        $region52: #{tpu_custom_call.1} parent=23 // pred_fallthru
          _
        // Predicated region
        $region53: #{tpu_custom_call.1} parent=23 // pred_check
          %p871 = pneg %p265
        $region54: #{tpu_custom_call.1} parent=23 // pred_check_branch
          %873 = sbr.rel (%p871) target = $region56
        $region55: #{tpu_custom_call.1} parent=23 // pred_region
          %p874 = scmp.lt.s32.totalorder %s59, 1
          %s875 = scalar_select %p874, %s59, 1
          %s876 = scalar_lea.vmem %s7, %s875
        $region56: #{tpu_custom_call.1} parent=23 // pred_fallthru
          _
        // Predicated region
        $region57: #{tpu_custom_call.1} parent=23 // pred_check
          %p877 = pneg %p291
        $region58: #{tpu_custom_call.1} parent=23 // pred_check_branch
          %879 = sbr.rel (%p877) target = $region60
        $region59: #{tpu_custom_call.1} parent=23 // pred_region
          %s880 = sand.u32 %s51, 1
          %s881 = scalar_lea.sflag [#allocation12], %s880
          %s882 = sand.u32 %s281, 1
          %s883 = smul.addr %s882, 16
          %s884 = scalar_lea.vmem [#allocation11], %s883
          %s886 = ssub.s32 256, 256
          %887 = vsyncadd %s881, %s886
          %s888 = smul.addr %s59, 4
          %s889 = smul.addr %s888, 64
          %s890 = scalar_lea.hbm %s8, %s889
          %s891 = sshll.u32 %s884, 4
          %s892 = int_to_ptr.vmem [resolvable:$true] %s891
          %897 = dma.hbm_to_vmem [thread:$0]  %s890, 256, %s892, %s881, 64, 64, 4
        $region60: #{tpu_custom_call.1} parent=23 // pred_fallthru
          _
        // Predicated region
        $region61: #{tpu_custom_call.1} parent=23 // pred_check
          %p898 = pneg %p317
        $region62: #{tpu_custom_call.1} parent=23 // pred_check_branch
          %900 = sbr.rel (%p898) target = $region64
        $region63: #{tpu_custom_call.1} parent=23 // pred_region
          %p901 = scmp.lt.s32.totalorder %s59, 1
          %s902 = scalar_select %p901, %s59, 1
          %s903 = scalar_lea.vmem %s9, %s902
        $region64: #{tpu_custom_call.1} parent=23 // pred_fallthru
          _
        // Predicated region
        $region65: #{tpu_custom_call.1} parent=23 // pred_check
          %p904 = pneg %p343
        $region66: #{tpu_custom_call.1} parent=23 // pred_check_branch
          %906 = sbr.rel (%p904) target = $region68
        $region67: #{tpu_custom_call.1} parent=23 // pred_region
          %s907 = sand.u32 %s51, 1
          %s908 = scalar_lea.sflag [#allocation12], %s907
          %s909 = sand.u32 %s333, 1
          %s910 = smul.addr %s909, 16
          %s911 = scalar_lea.vmem [#allocation13], %s910
          %s913 = ssub.s32 256, 256
          %914 = vsyncadd %s908, %s913
          %s915 = smul.addr %s59, 4
          %s916 = smul.addr %s915, 64
          %s917 = scalar_lea.hbm %s10, %s916
          %s918 = sshll.u32 %s911, 4
          %s919 = int_to_ptr.vmem [resolvable:$true] %s918
          %924 = dma.hbm_to_vmem [thread:$0]  %s917, 256, %s919, %s908, 64, 64, 4
        $region68: #{tpu_custom_call.1} parent=23 // pred_fallthru
          _
        // Predicated region
        $region69: #{tpu_custom_call.1} parent=23 // pred_check
          %p925 = pneg %p369
        $region70: #{tpu_custom_call.1} parent=23 // pred_check_branch
          %927 = sbr.rel (%p925) target = $region72
        $region71: #{tpu_custom_call.1} parent=23 // pred_region
          %p928 = scmp.lt.s32.totalorder %s59, 1
          %s929 = scalar_select %p928, %s59, 1
          %s930 = scalar_lea.vmem %s11, %s929
        $region72: #{tpu_custom_call.1} parent=23 // pred_fallthru
          _
        // Predicated region
        $region73: #{tpu_custom_call.1} parent=23 // pred_check
          %p931 = pneg %p395
        $region74: #{tpu_custom_call.1} parent=23 // pred_check_branch
          %933 = sbr.rel (%p931) target = $region76
        $region75: #{tpu_custom_call.1} parent=23 // pred_region
          %s934 = sand.u32 %s385, 1
          %s935 = scalar_lea.sflag [#allocation15], %s934
          %s936 = sand.u32 %s385, 1
          %s937 = smul.addr %s936, 16
          %s938 = scalar_lea.vmem [#allocation14], %s937
          %s940 = ssub.s32 256, 256
          %941 = vsyncadd %s935, %s940
          %s942 = smul.addr %s59, 4
          %s943 = smul.addr %s942, 64
          %s944 = scalar_lea.hbm %s12, %s943
          %s945 = sshll.u32 %s938, 4
          %s946 = int_to_ptr.vmem [resolvable:$true] %s945
          %951 = dma.hbm_to_vmem [thread:$0]  %s944, 256, %s946, %s935, 64, 64, 4
        $region76: #{tpu_custom_call.1} parent=23 // pred_fallthru
          _
        // Predicated region
        $region77: #{tpu_custom_call.1} parent=23 // pred_check
          %p952 = pneg %p421
        $region78: #{tpu_custom_call.1} parent=23 // pred_check_branch
          %954 = sbr.rel (%p952) target = $region80
        $region79: #{tpu_custom_call.1} parent=23 // pred_region
          %p955 = scmp.lt.s32.totalorder %s59, 1
          %s956 = scalar_select %p955, %s59, 1
          %s957 = scalar_lea.vmem %s13, %s956
        $region80: #{tpu_custom_call.1} parent=23 // pred_fallthru
          _
        // Predicated region
        $region81: #{tpu_custom_call.1} parent=23 // pred_check
          %p958 = pneg %p447
        $region82: #{tpu_custom_call.1} parent=23 // pred_check_branch
          %960 = sbr.rel (%p958) target = $region84
        $region83: #{tpu_custom_call.1} parent=23 // pred_region
          %p961 = scmp.lt.s32.totalorder %s59, 1
          %s962 = scalar_select %p961, %s59, 1
          %s963 = smul.addr %s962, 8
          %s964 = smul.addr %s963, 4
          %s965 = scalar_lea.vmem %s14, %s964
        $region84: #{tpu_custom_call.1} parent=23 // pred_fallthru
          _
        // Predicated region
        $region85: #{tpu_custom_call.1} parent=23 // pred_check
          %p966 = pneg %p473
        $region86: #{tpu_custom_call.1} parent=23 // pred_check_branch
          %968 = sbr.rel (%p966) target = $region88
        $region87: #{tpu_custom_call.1} parent=23 // pred_region
          %p969 = scmp.lt.s32.totalorder %s59, 1
          %s970 = scalar_select %p969, %s59, 1
          %s971 = scalar_lea.vmem %s15, %s970
        $region88: #{tpu_custom_call.1} parent=23 // pred_fallthru
          _
        // Predicated region
        $region89: #{tpu_custom_call.1} parent=23 // pred_check
          %p972 = pneg %p499
        $region90: #{tpu_custom_call.1} parent=23 // pred_check_branch
          %974 = sbr.rel (%p972) target = $region92
        $region91: #{tpu_custom_call.1} parent=23 // pred_region
          %p975 = scmp.lt.s32.totalorder %s59, 1
          %s976 = scalar_select %p975, %s59, 1
          %s977 = scalar_lea.vmem %s16, %s976
        $region92: #{tpu_custom_call.1} parent=23 // pred_fallthru
          _
        // Predicated region
        $region93: #{tpu_custom_call.1} parent=23 // pred_check
          %p978 = pneg %p525
        $region94: #{tpu_custom_call.1} parent=23 // pred_check_branch
          %980 = sbr.rel (%p978) target = $region96
        $region95: #{tpu_custom_call.1} parent=23 // pred_region
          %p981 = scmp.lt.s32.totalorder %s59, 1
          %s982 = scalar_select %p981, %s59, 1
          %s983 = scalar_lea.vmem %s17, %s982
        $region96: #{tpu_custom_call.1} parent=23 // pred_fallthru
          _
        // Predicated region
        $region97: #{tpu_custom_call.1} parent=23 // pred_check
          %p984 = pneg %p551
        $region98: #{tpu_custom_call.1} parent=23 // pred_check_branch
          %986 = sbr.rel (%p984) target = $region100
        $region99: #{tpu_custom_call.1} parent=23 // pred_region
          %p987 = scmp.lt.s32.totalorder %s59, 1
          %s988 = scalar_select %p987, %s59, 1
          %s989 = scalar_lea.vmem %s18, %s988
        $region100: #{tpu_custom_call.1} parent=23 // pred_fallthru
          _
        // Predicated region
        $region101: #{tpu_custom_call.1} parent=23 // pred_check
          %p990 = pneg %p577
        $region102: #{tpu_custom_call.1} parent=23 // pred_check_branch
          %992 = sbr.rel (%p990) target = $region104
        $region103: #{tpu_custom_call.1} parent=23 // pred_region
          %p993 = scmp.lt.s32.totalorder %s59, 1
          %s994 = scalar_select %p993, %s59, 1
          %s995 = scalar_lea.vmem %s19, %s994
        $region104: #{tpu_custom_call.1} parent=23 // pred_fallthru
          _
        // Predicated region
        $region105: #{tpu_custom_call.1} parent=23 // pred_check
          %p996 = pneg %p603
        $region106: #{tpu_custom_call.1} parent=23 // pred_check_branch
          %998 = sbr.rel (%p996) target = $region108
        $region107: #{tpu_custom_call.1} parent=23 // pred_region
          %p999 = scmp.lt.s32.totalorder %s59, 1
          %s1000 = scalar_select %p999, %s59, 1
          %s1001 = scalar_lea.vmem %s20, %s1000
        $region108: #{tpu_custom_call.1} parent=23 // pred_fallthru
          _
        // Predicated region
        $region109: #{tpu_custom_call.1} parent=23 // pred_check
          %p1002 = pneg %p629
        $region110: #{tpu_custom_call.1} parent=23 // pred_check_branch
          %1004 = sbr.rel (%p1002) target = $region112
        $region111: #{tpu_custom_call.1} parent=23 // pred_region
          %p1005 = scmp.lt.s32.totalorder %s59, 1
          %s1006 = scalar_select %p1005, %s59, 1
          %s1007 = scalar_lea.vmem %s21, %s1006
        $region112: #{tpu_custom_call.1} parent=23 // pred_fallthru
          _
      $region24: #{tpu_custom_call.1} parent=5 // pred_fallthru
        _
      %p1008 = scmp.le.s32.totalorder 1, %s51
      %p1009 = scmp.lt.s32.totalorder %s51, 5
      %p1010 = pnand %p1008, %p1009
      %p1011 = pneg %p1010
      // Predicated region
      $region113: #{tpu_custom_call.1} parent=5 // pred_check
        _
      $region114: #{tpu_custom_call.1} parent=5 // pred_check_branch
        %1013 = sbr.rel (%p1010) target = $region116
      $region115: #{tpu_custom_call.1} parent=5 // pred_region
        %s1014 = ssub.s32 %s51, 1
        %s1015 = sand.u32 %s76, 1
        %s1016 = scalar_lea.sflag [#allocation6], %s1015
        %s1017 = sand.u32 %s76, 1
        %s1018 = smul.addr %s1017, 8
        %s1019 = scalar_lea.vmem [#allocation5], %s1018
        // Predicated region
        $region117: #{tpu_custom_call.1} parent=115 // pred_check
          %p1020 = pneg %p89
        $region118: #{tpu_custom_call.1} parent=115 // pred_check_branch
          %1022 = sbr.rel (%p1020) target = $region120
        $region119: #{tpu_custom_call.1} parent=115 // pred_region
          %1023 = dma.done %s1016, 128
        $region120: #{tpu_custom_call.1} parent=115 // pred_fallthru
          _
        %s1024 = sand.u32 %s56, 1
        %s1025 = scalar_lea.sflag [#allocation9], %s1024
        %s1026 = sand.u32 %s102, 1
        %s1027 = smul.addr %s1026, 8
        %s1028 = scalar_lea.vmem [#allocation8], %s1027
        // Predicated region
        $region121: #{tpu_custom_call.1} parent=115 // pred_check
          %p1029 = pneg %p115
        $region122: #{tpu_custom_call.1} parent=115 // pred_check_branch
          %1031 = sbr.rel (%p1029) target = $region124
        $region123: #{tpu_custom_call.1} parent=115 // pred_region
          %1032 = dma.done %s1025, 128
        $region124: #{tpu_custom_call.1} parent=115 // pred_fallthru
          _
        %s1033 = sand.u32 %s56, 1
        %s1034 = scalar_lea.sflag [#allocation9], %s1033
        %s1035 = sand.u32 %s232, 1
        %s1036 = smul.addr %s1035, 16
        %s1037 = scalar_lea.vmem [#allocation10], %s1036
        // Predicated region
        $region125: #{tpu_custom_call.1} parent=115 // pred_check
          %p1038 = pneg %p245
        $region126: #{tpu_custom_call.1} parent=115 // pred_check_branch
          %1040 = sbr.rel (%p1038) target = $region128
        $region127: #{tpu_custom_call.1} parent=115 // pred_region
          %1041 = dma.done %s1034, 256
        $region128: #{tpu_custom_call.1} parent=115 // pred_fallthru
          _
        %s1042 = sand.u32 %s56, 1
        %s1043 = scalar_lea.sflag [#allocation12], %s1042
        %s1044 = sand.u32 %s284, 1
        %s1045 = smul.addr %s1044, 16
        %s1046 = scalar_lea.vmem [#allocation11], %s1045
        // Predicated region
        $region129: #{tpu_custom_call.1} parent=115 // pred_check
          %p1047 = pneg %p297
        $region130: #{tpu_custom_call.1} parent=115 // pred_check_branch
          %1049 = sbr.rel (%p1047) target = $region132
        $region131: #{tpu_custom_call.1} parent=115 // pred_region
          %1050 = dma.done %s1043, 256
        $region132: #{tpu_custom_call.1} parent=115 // pred_fallthru
          _
        %s1051 = sand.u32 %s56, 1
        %s1052 = scalar_lea.sflag [#allocation12], %s1051
        %s1053 = sand.u32 %s336, 1
        %s1054 = smul.addr %s1053, 16
        %s1055 = scalar_lea.vmem [#allocation13], %s1054
        // Predicated region
        $region133: #{tpu_custom_call.1} parent=115 // pred_check
          %p1056 = pneg %p349
        $region134: #{tpu_custom_call.1} parent=115 // pred_check_branch
          %1058 = sbr.rel (%p1056) target = $region136
        $region135: #{tpu_custom_call.1} parent=115 // pred_region
          %1059 = dma.done %s1052, 256
        $region136: #{tpu_custom_call.1} parent=115 // pred_fallthru
          _
        %s1060 = sand.u32 %s388, 1
        %s1061 = scalar_lea.sflag [#allocation15], %s1060
        %s1062 = sand.u32 %s388, 1
        %s1063 = smul.addr %s1062, 16
        %s1064 = scalar_lea.vmem [#allocation14], %s1063
        // Predicated region
        $region137: #{tpu_custom_call.1} parent=115 // pred_check
          %p1065 = pneg %p401
        $region138: #{tpu_custom_call.1} parent=115 // pred_check_branch
          %1067 = sbr.rel (%p1065) target = $region140
        $region139: #{tpu_custom_call.1} parent=115 // pred_region
          %1068 = dma.done %s1061, 256
        $region140: #{tpu_custom_call.1} parent=115 // pred_fallthru
          _
        %s1069 = sand.u32 %s76, 1
        %s1070 = scalar_lea.sflag [#allocation6], %s1069
        %s1071 = sand.u32 %s76, 1
        %s1072 = smul.addr %s1071, 8
        %s1073 = scalar_lea.vmem [#allocation5], %s1072
        %p1074 = pneg %p89
        %p1075 = pneg %p86
        %s1076 = sand.u32 %s56, 1
        %s1077 = scalar_lea.sflag [#allocation9], %s1076
        %s1078 = sand.u32 %s102, 1
        %s1079 = smul.addr %s1078, 8
        %s1080 = scalar_lea.vmem [#allocation8], %s1079
        %p1081 = pneg %p115
        %p1082 = pneg %p112
        %p1083 = scmp.lt.s32.totalorder %s60, 1
        %s1084 = scalar_select %p1083, %s60, 1
        %s1085 = smul.addr %s1084, 2
        %s1086 = smul.addr %s1085, 8
        %s1087 = scalar_lea.vmem %s2, %s1086
        %p1088 = pneg %p141
        %p1089 = pneg %p138
        %p1090 = scmp.lt.s32.totalorder %s60, 1
        %s1091 = scalar_select %p1090, %s60, 1
        %s1092 = smul.addr %s1091, 2
        %s1093 = smul.addr %s1092, 8
        %s1094 = scalar_lea.vmem %s3, %s1093
        %p1095 = pneg %p167
        %p1096 = pneg %p164
        %p1097 = scmp.lt.s32.totalorder %s61, 1
        %s1098 = scalar_select %p1097, %s61, 1
        %s1099 = smul.addr %s1098, 4
        %s1100 = smul.addr %s1099, 4
        %s1101 = scalar_lea.vmem %s4, %s1100
        %p1102 = pneg %p193
        %p1103 = pneg %p190
        %p1104 = scmp.lt.s32.totalorder %s61, 1
        %s1105 = scalar_select %p1104, %s61, 1
        %s1106 = scalar_lea.vmem %s5, %s1105
        %p1107 = pneg %p219
        %p1108 = pneg %p216
        %s1109 = sand.u32 %s56, 1
        %s1110 = scalar_lea.sflag [#allocation9], %s1109
        %s1111 = sand.u32 %s232, 1
        %s1112 = smul.addr %s1111, 16
        %s1113 = scalar_lea.vmem [#allocation10], %s1112
        %p1114 = pneg %p245
        %p1115 = pneg %p242
        %p1116 = scmp.lt.s32.totalorder %s61, 1
        %s1117 = scalar_select %p1116, %s61, 1
        %s1118 = scalar_lea.vmem %s7, %s1117
        %p1119 = pneg %p271
        %p1120 = pneg %p268
        %s1121 = sand.u32 %s56, 1
        %s1122 = scalar_lea.sflag [#allocation12], %s1121
        %s1123 = sand.u32 %s284, 1
        %s1124 = smul.addr %s1123, 16
        %s1125 = scalar_lea.vmem [#allocation11], %s1124
        %p1126 = pneg %p297
        %p1127 = pneg %p294
        %p1128 = scmp.lt.s32.totalorder %s61, 1
        %s1129 = scalar_select %p1128, %s61, 1
        %s1130 = scalar_lea.vmem %s9, %s1129
        %p1131 = pneg %p323
        %p1132 = pneg %p320
        %s1133 = sand.u32 %s56, 1
        %s1134 = scalar_lea.sflag [#allocation12], %s1133
        %s1135 = sand.u32 %s336, 1
        %s1136 = smul.addr %s1135, 16
        %s1137 = scalar_lea.vmem [#allocation13], %s1136
        %p1138 = pneg %p349
        %p1139 = pneg %p346
        %p1140 = scmp.lt.s32.totalorder %s61, 1
        %s1141 = scalar_select %p1140, %s61, 1
        %s1142 = scalar_lea.vmem %s11, %s1141
        %p1143 = pneg %p375
        %p1144 = pneg %p372
        %s1145 = sand.u32 %s388, 1
        %s1146 = scalar_lea.sflag [#allocation15], %s1145
        %s1147 = sand.u32 %s388, 1
        %s1148 = smul.addr %s1147, 16
        %s1149 = scalar_lea.vmem [#allocation14], %s1148
        %p1150 = pneg %p401
        %p1151 = pneg %p398
        %p1152 = scmp.lt.s32.totalorder %s61, 1
        %s1153 = scalar_select %p1152, %s61, 1
        %s1154 = scalar_lea.vmem %s13, %s1153
        %p1155 = pneg %p427
        %p1156 = pneg %p424
        %p1157 = scmp.lt.s32.totalorder %s61, 1
        %s1158 = scalar_select %p1157, %s61, 1
        %s1159 = smul.addr %s1158, 8
        %s1160 = smul.addr %s1159, 4
        %s1161 = scalar_lea.vmem %s14, %s1160
        %p1162 = pneg %p453
        %p1163 = pneg %p450
        %p1164 = scmp.lt.s32.totalorder %s61, 1
        %s1165 = scalar_select %p1164, %s61, 1
        %s1166 = scalar_lea.vmem %s15, %s1165
        %p1167 = pneg %p479
        %p1168 = pneg %p476
        %p1169 = scmp.lt.s32.totalorder %s61, 1
        %s1170 = scalar_select %p1169, %s61, 1
        %s1171 = scalar_lea.vmem %s16, %s1170
        %p1172 = pneg %p505
        %p1173 = pneg %p502
        %p1174 = scmp.lt.s32.totalorder %s61, 1
        %s1175 = scalar_select %p1174, %s61, 1
        %s1176 = scalar_lea.vmem %s17, %s1175
        %p1177 = pneg %p531
        %p1178 = pneg %p528
        %p1179 = scmp.lt.s32.totalorder %s61, 1
        %s1180 = scalar_select %p1179, %s61, 1
        %s1181 = scalar_lea.vmem %s18, %s1180
        %p1182 = pneg %p557
        %p1183 = pneg %p554
        %p1184 = scmp.lt.s32.totalorder %s61, 1
        %s1185 = scalar_select %p1184, %s61, 1
        %s1186 = scalar_lea.vmem %s19, %s1185
        %p1187 = pneg %p583
        %p1188 = pneg %p580
        %p1189 = scmp.lt.s32.totalorder %s61, 1
        %s1190 = scalar_select %p1189, %s61, 1
        %s1191 = scalar_lea.vmem %s20, %s1190
        %p1192 = pneg %p609
        %p1193 = pneg %p606
        %p1194 = scmp.lt.s32.totalorder %s61, 1
        %s1195 = scalar_select %p1194, %s61, 1
        %s1196 = scalar_lea.vmem %s21, %s1195
        %p1197 = pneg %p635
        %p1198 = pneg %p632
        %p1199 = pneg %p656
        %p1200 = pneg %p653
        %p1201 = pneg %p677
        %p1202 = pneg %p674
        %p1203 = pneg %p703
        %p1204 = pneg %p700
        %s1205 = sand.u32 %s690, 1
        %s1206 = scalar_lea.sflag [#allocation7], %s1205
        %s1207 = sand.u32 %s690, 1
        %s1208 = smul.addr %s1207, 8
        %s1209 = scalar_lea.vmem [#allocation16], %s1208
        %p1210 = pneg %p731
        %p1211 = pneg %p728
        %s1212 = sand.u32 %s56, 1
        %s1213 = scalar_lea.sflag [#allocation18], %s1212
        %s1214 = sand.u32 %s718, 1
        %s1215 = smul.addr %s1214, 4
        %s1216 = scalar_lea.vmem [#allocation17], %s1215
        %p1217 = pneg %p759
        %p1218 = pneg %p756
        %s1219 = sand.u32 %s56, 1
        %s1220 = scalar_lea.sflag [#allocation18], %s1219
        %s1221 = sand.u32 %s746, 1
        %s1222 = smul.addr %s1221, 4
        %s1223 = scalar_lea.vmem [#allocation19], %s1222
        %p1224 = scmp.lt.s32.totalorder %s60, 1
        %s1225 = scalar_select %p1224, %s60, 1
        %s1226 = smul.addr %s1225, 2
        %s1227 = smul.addr %s1226, 8
        %s1228 = scalar_lea.vmem %s2, %s1227
        %p1229 = scmp.lt.s32.totalorder %s60, 1
        %s1230 = scalar_select %p1229, %s60, 1
        %s1231 = smul.addr %s1230, 2
        %s1232 = smul.addr %s1231, 8
        %s1233 = scalar_lea.vmem %s3, %s1232
        %p1234 = scmp.lt.s32.totalorder %s61, 1
        %s1235 = scalar_select %p1234, %s61, 1
        %s1236 = smul.addr %s1235, 4
        %s1237 = smul.addr %s1236, 4
        %s1238 = scalar_lea.vmem %s4, %s1237
        %p1239 = scmp.lt.s32.totalorder %s61, 1
        %s1240 = scalar_select %p1239, %s61, 1
        %s1241 = scalar_lea.vmem %s5, %s1240
        %p1242 = scmp.lt.s32.totalorder %s61, 1
        %s1243 = scalar_select %p1242, %s61, 1
        %s1244 = scalar_lea.vmem %s7, %s1243
        %p1245 = scmp.lt.s32.totalorder %s61, 1
        %s1246 = scalar_select %p1245, %s61, 1
        %s1247 = scalar_lea.vmem %s9, %s1246
        %p1248 = scmp.lt.s32.totalorder %s61, 1
        %s1249 = scalar_select %p1248, %s61, 1
        %s1250 = scalar_lea.vmem %s11, %s1249
        %p1251 = scmp.lt.s32.totalorder %s61, 1
        %s1252 = scalar_select %p1251, %s61, 1
        %s1253 = scalar_lea.vmem %s13, %s1252
        %p1254 = scmp.lt.s32.totalorder %s61, 1
        %s1255 = scalar_select %p1254, %s61, 1
        %s1256 = smul.addr %s1255, 8
        %s1257 = smul.addr %s1256, 4
        %s1258 = scalar_lea.vmem %s14, %s1257
        %p1259 = scmp.lt.s32.totalorder %s61, 1
        %s1260 = scalar_select %p1259, %s61, 1
        %s1261 = scalar_lea.vmem %s15, %s1260
        %p1262 = scmp.lt.s32.totalorder %s61, 1
        %s1263 = scalar_select %p1262, %s61, 1
        %s1264 = scalar_lea.vmem %s16, %s1263
        %p1265 = scmp.lt.s32.totalorder %s61, 1
        %s1266 = scalar_select %p1265, %s61, 1
        %s1267 = scalar_lea.vmem %s17, %s1266
        %p1268 = scmp.lt.s32.totalorder %s61, 1
        %s1269 = scalar_select %p1268, %s61, 1
        %s1270 = scalar_lea.vmem %s18, %s1269
        %p1271 = scmp.lt.s32.totalorder %s61, 1
        %s1272 = scalar_select %p1271, %s61, 1
        %s1273 = scalar_lea.vmem %s19, %s1272
        %p1274 = scmp.lt.s32.totalorder %s61, 1
        %s1275 = scalar_select %p1274, %s61, 1
        %s1276 = scalar_lea.vmem %s20, %s1275
        %p1277 = scmp.lt.s32.totalorder %s61, 1
        %s1278 = scalar_select %p1277, %s61, 1
        %s1279 = scalar_lea.vmem %s21, %s1278
        %p1281 = scmp.eq.s32.totalorder %s61, 0
        // Predicated region
        $region141: #{tpu_custom_call.1} parent=115 // pred_check
          %p1282 = pneg %p1281
        $region142: #{tpu_custom_call.1} parent=115 // pred_check_branch
          %1284 = sbr.rel (%p1282) target = $region144
        $region143: #{tpu_custom_call.1} parent=115 // pred_region
          %v1285 = vld [vmem:[%s1019] sm:$0xff]
          %vm1286 = vcmask 261120
          %1287 = vst.msk [vmem:[#allocation2] sm:$0xff] %vm1286, %v1285
          %v1288 = vld [vmem:[%s1228] sm:$0xff]
          %v1289 = vld [vmem:[%s1228 + $0x8] sm:$0xff]
          %v1290 = vld [vmem:[%s1233] sm:$0xff]
          %v1291 = vld [vmem:[%s1233 + $0x8] sm:$0xff]
          %v1292 = vadd.f32 %v1288, %v1290
          %v1293 = vadd.f32 %v1289, %v1291
          %v1294 = vpack.c.bf16 %v1293, %v1292
          %1295 = vst.msk [vmem:[#allocation3] sm:$0xff] %vm1286, %v1294
          %v1296 = vpack.c.bf16 %v1289, %v1288
          %1297 = vst.msk [vmem:[#allocation4] sm:$0xff] %vm1286, %v1296
        $region144: #{tpu_custom_call.1} parent=115 // pred_fallthru
          _
        %v1298 = vld [vmem:[#allocation2] sm:$0xff]
        %v1299 = vld [vmem:[%s1028] sm:$0xff]
        %v1300 = vld [vmem:[%s1238] sm:$0xf]
        %v1301 = vld [vmem:[%s1238 + $0x4] sm:$0xf]
        %v1302 = vld [vmem:[%s1238 + $0x8] sm:$0xf]
        %v1303 = vld [vmem:[%s1238 + $0xc] sm:$0xf]
        %v1304 = vld [vmem:[%s1241] sm:$0x1]
        %v1305 = vadd.f32 %v1298, %v1299
        %v1306 = vpack.c.bf16 %v1305, %v1305
        %v1308 = vlaneseq
        %v1309 = vshrl.u32 %v1308, 7
        %v1310 = vsub.s32 0, %v1309
        %v1311 = vrot.slane %v1304, %v1310
        %v1317 = vunpack.c.l.b16 %v1300
        %v1318 = vunpack.c.l.b16 %v1301
        %v1319 = vunpack.c.l.b16 %v1302
        %v1320 = vunpack.c.l.b16 %v1303
        %v1321 = vpack.c.b16 %v1318, %v1317
        %v1322 = vpack.c.b16 %v1320, %v1319
        %vm1325 = vcmask 261120
        %v1327 = vsel %vm1325, %v1306, 0
        %1329 = vmatprep.subr.bf16.mxu0 0
        %1330 = vmatpush1.bf16.msra.mxu0 %v1321
        %1331 = vmatprep.subr.bf16.mxu0 0
        %1332 = vmatpush1.bf16.msra.mxu0 %v1322
        %1333 = vmatprep.subr.bf16.mxu0 0
        %1334 = vmatpush1.bf16.msra.mxu0 0
        %1335 = vmatprep.subr.bf16.mxu0 0
        %1336 = vmatpush1.bf16.msra.mxu0 0
        %1337 = vmatprep.subr.bf16.mxu0 0
        %1338 = vmatpush1.bf16.msra.mxu0 0
        %1339 = vmatprep.subr.bf16.mxu0 0
        %1340 = vmatpush1.bf16.msra.mxu0 0
        %1341 = vmatprep.subr.bf16.mxu0 0
        %1342 = vmatpush1.bf16.msra.mxu0 0
        %1343 = vmatprep.subr.bf16.mxu0 0
        %1344 = vmatpush1.bf16.msra.mxu0 0
        %1345 = vmatprep.subr.bf16.mxu0 0
        %1346 = vmatpush1.bf16.msra.mxu0 0
        %1347 = vmatprep.subr.bf16.mxu0 0
        %1348 = vmatpush1.bf16.msra.mxu0 0
        %1349 = vmatprep.subr.bf16.mxu0 0
        %1350 = vmatpush1.bf16.msra.mxu0 0
        %1351 = vmatprep.subr.bf16.mxu0 0
        %1352 = vmatpush1.bf16.msra.mxu0 0
        %1353 = vmatprep.subr.bf16.mxu0 0
        %1354 = vmatpush1.bf16.msra.mxu0 0
        %1355 = vmatprep.subr.bf16.mxu0 0
        %1356 = vmatpush1.bf16.msra.mxu0 0
        %1357 = vmatprep.subr.bf16.mxu0 0
        %1358 = vmatpush1.bf16.msra.mxu0 0
        %1359 = vmatprep.subr.bf16.mxu0 0
        %1360 = vmatpush1.bf16.msra.mxu0 0
        %1361 = vmatprep.mubr.bf16.mxu0 0
        %1362 = vmatmul.mubr.bf16.gmra.mrb[0].mxu0 %v1327
        %v1363 = vpop.f32.mrb[0].mxu0
        %v1364 = vadd.f32 %v1311, %v1363
        %v1365 = vpop.f32.mrb[0].mxu0
        %v1366 = vpop.f32.mrb[0].mxu0
        %v1367 = vpop.f32.mrb[0].mxu0
        %1368 = vdwg.mxu0
        %v1369 = vpack.c.bf16 %v1298, %v1298
        %1370 = vrot.lane.b32.xlu0 %v1321, 64
        %v1371 = vpop.permute.xlu0 %1370
        %1372 = vrot.lane.b32.xlu0 %v1322, 64
        %v1373 = vpop.permute.xlu0 %1372
        %1376 = vrot.lane.b32.xlu0 %v1311, 64
        %v1377 = vpop.permute.xlu0 %1376
        %v1380 = vsel %vm1325, %v1369, 0
        %1382 = vmatprep.subr.bf16.mxu0 0
        %1383 = vmatpush1.bf16.msra.mxu0 %v1371
        %1384 = vmatprep.subr.bf16.mxu0 0
        %1385 = vmatpush1.bf16.msra.mxu0 %v1373
        %1386 = vmatprep.subr.bf16.mxu0 0
        %1387 = vmatpush1.bf16.msra.mxu0 0
        %1388 = vmatprep.subr.bf16.mxu0 0
        %1389 = vmatpush1.bf16.msra.mxu0 0
        %1390 = vmatprep.subr.bf16.mxu0 0
        %1391 = vmatpush1.bf16.msra.mxu0 0
        %1392 = vmatprep.subr.bf16.mxu0 0
        %1393 = vmatpush1.bf16.msra.mxu0 0
        %1394 = vmatprep.subr.bf16.mxu0 0
        %1395 = vmatpush1.bf16.msra.mxu0 0
        %1396 = vmatprep.subr.bf16.mxu0 0
        %1397 = vmatpush1.bf16.msra.mxu0 0
        %1398 = vmatprep.subr.bf16.mxu0 0
        %1399 = vmatpush1.bf16.msra.mxu0 0
        %1400 = vmatprep.subr.bf16.mxu0 0
        %1401 = vmatpush1.bf16.msra.mxu0 0
        %1402 = vmatprep.subr.bf16.mxu0 0
        %1403 = vmatpush1.bf16.msra.mxu0 0
        %1404 = vmatprep.subr.bf16.mxu0 0
        %1405 = vmatpush1.bf16.msra.mxu0 0
        %1406 = vmatprep.subr.bf16.mxu0 0
        %1407 = vmatpush1.bf16.msra.mxu0 0
        %1408 = vmatprep.subr.bf16.mxu0 0
        %1409 = vmatpush1.bf16.msra.mxu0 0
        %1410 = vmatprep.subr.bf16.mxu0 0
        %1411 = vmatpush1.bf16.msra.mxu0 0
        %1412 = vmatprep.subr.bf16.mxu0 0
        %1413 = vmatpush1.bf16.msra.mxu0 0
        %1414 = vmatprep.mubr.bf16.mxu0 0
        %1415 = vmatmul.mubr.bf16.gmra.mrb[0].mxu0 %v1380
        %v1416 = vpop.f32.mrb[0].mxu0
        %v1417 = vadd.f32 %v1377, %v1416
        %v1418 = vpop.f32.mrb[0].mxu0
        %v1419 = vpop.f32.mrb[0].mxu0
        %v1420 = vpop.f32.mrb[0].mxu0
        %1421 = vdwg.mxu0
        %1423 = vrot.lane.b32.xlu0 %v1364, 120
        %v1424 = vpop.permute.xlu0 %1423
        %1426 = vrot.lane.b32.xlu0 %v1364, 112
        %v1427 = vpop.permute.xlu0 %1426
        %1429 = vrot.lane.b32.xlu0 %v1364, 104
        %v1430 = vpop.permute.xlu0 %1429
        %1433 = vrot.lane.b32.xlu0 %v1417, 120
        %v1434 = vpop.permute.xlu0 %1433
        %1436 = vrot.lane.b32.xlu0 %v1417, 112
        %v1437 = vpop.permute.xlu0 %1436
        %1439 = vrot.lane.b32.xlu0 %v1417, 104
        %v1440 = vpop.permute.xlu0 %1439
        %v1442 = vpack.c.bf16 %v1364, %v1364
        %v1443 = vpack.c.bf16 %v1424, %v1424
        %v1444 = vpack.c.bf16 %v1427, %v1427
        %v1445 = vpack.c.bf16 %v1430, %v1430
        %1447 = vrot.lane.b32.xlu0 %v1442, 96
        %v1448 = vpop.permute.xlu0 %1447
        %vm1449 = vcmask 64512
        %v1451 = vsel %vm1449, %v1442, 0
        %v1454 = vsel %vm1449, %v1448, 0
        %1456 = vmatprep.subr.bf16.mxu0 0
        %1457 = vmatpush1.bf16.xpose.msra.mxu0 %v1454
        %1458 = vmatprep.subr.bf16.mxu0 0
        %1459 = vmatpush1.bf16.xpose.msra.mxu0 0
        %1460 = vmatprep.subr.bf16.mxu0 0
        %1461 = vmatpush1.bf16.xpose.msra.mxu0 0
        %1462 = vmatprep.subr.bf16.mxu0 0
        %1463 = vmatpush1.bf16.xpose.msra.mxu0 0
        %1464 = vmatprep.subr.bf16.mxu0 0
        %1465 = vmatpush1.bf16.xpose.msra.mxu0 0
        %1466 = vmatprep.subr.bf16.mxu0 0
        %1467 = vmatpush1.bf16.xpose.msra.mxu0 0
        %1468 = vmatprep.subr.bf16.mxu0 0
        %1469 = vmatpush1.bf16.xpose.msra.mxu0 0
        %1470 = vmatprep.subr.bf16.mxu0 0
        %1471 = vmatpush1.bf16.xpose.msra.mxu0 0
        %1472 = vmatprep.subr.bf16.mxu0 0
        %1473 = vmatpush1.bf16.xpose.msra.mxu0 0
        %1474 = vmatprep.subr.bf16.mxu0 0
        %1475 = vmatpush1.bf16.xpose.msra.mxu0 0
        %1476 = vmatprep.subr.bf16.mxu0 0
        %1477 = vmatpush1.bf16.xpose.msra.mxu0 0
        %1478 = vmatprep.subr.bf16.mxu0 0
        %1479 = vmatpush1.bf16.xpose.msra.mxu0 0
        %1480 = vmatprep.subr.bf16.mxu0 0
        %1481 = vmatpush1.bf16.xpose.msra.mxu0 0
        %1482 = vmatprep.subr.bf16.mxu0 0
        %1483 = vmatpush1.bf16.xpose.msra.mxu0 0
        %1484 = vmatprep.subr.bf16.mxu0 0
        %1485 = vmatpush1.bf16.xpose.msra.mxu0 0
        %1486 = vmatprep.subr.bf16.mxu0 0
        %1487 = vmatpush1.bf16.xpose.msra.mxu0 0
        %1488 = vmatprep.mubr.bf16.mxu0 0
        %1489 = vmatmul.mubr.bf16.gmra.mrb[0].mxu0 %v1451
        %v1490 = vpop.f32.mrb[0].mxu0
        %v1491 = vadd.f32 0.0, %v1490
        %v1492 = vpop.f32.mrb[0].mxu0
        %v1493 = vpop.f32.mrb[0].mxu0
        %v1494 = vpop.f32.mrb[0].mxu0
        %1495 = vdwg.mxu0
        %1497 = vrot.lane.b32.xlu0 %v1443, 96
        %v1498 = vpop.permute.xlu0 %1497
        %v1500 = vsel %vm1449, %v1443, 0
        %v1503 = vsel %vm1449, %v1498, 0
        %1505 = vmatprep.subr.bf16.mxu0 0
        %1506 = vmatpush1.bf16.xpose.msra.mxu0 %v1503
        %1507 = vmatprep.subr.bf16.mxu0 0
        %1508 = vmatpush1.bf16.xpose.msra.mxu0 0
        %1509 = vmatprep.subr.bf16.mxu0 0
        %1510 = vmatpush1.bf16.xpose.msra.mxu0 0
        %1511 = vmatprep.subr.bf16.mxu0 0
        %1512 = vmatpush1.bf16.xpose.msra.mxu0 0
        %1513 = vmatprep.subr.bf16.mxu0 0
        %1514 = vmatpush1.bf16.xpose.msra.mxu0 0
        %1515 = vmatprep.subr.bf16.mxu0 0
        %1516 = vmatpush1.bf16.xpose.msra.mxu0 0
        %1517 = vmatprep.subr.bf16.mxu0 0
        %1518 = vmatpush1.bf16.xpose.msra.mxu0 0
        %1519 = vmatprep.subr.bf16.mxu0 0
        %1520 = vmatpush1.bf16.xpose.msra.mxu0 0
        %1521 = vmatprep.subr.bf16.mxu0 0
        %1522 = vmatpush1.bf16.xpose.msra.mxu0 0
        %1523 = vmatprep.subr.bf16.mxu0 0
        %1524 = vmatpush1.bf16.xpose.msra.mxu0 0
        %1525 = vmatprep.subr.bf16.mxu0 0
        %1526 = vmatpush1.bf16.xpose.msra.mxu0 0
        %1527 = vmatprep.subr.bf16.mxu0 0
        %1528 = vmatpush1.bf16.xpose.msra.mxu0 0
        %1529 = vmatprep.subr.bf16.mxu0 0
        %1530 = vmatpush1.bf16.xpose.msra.mxu0 0
        %1531 = vmatprep.subr.bf16.mxu0 0
        %1532 = vmatpush1.bf16.xpose.msra.mxu0 0
        %1533 = vmatprep.subr.bf16.mxu0 0
        %1534 = vmatpush1.bf16.xpose.msra.mxu0 0
        %1535 = vmatprep.subr.bf16.mxu0 0
        %1536 = vmatpush1.bf16.xpose.msra.mxu0 0
        %1537 = vmatprep.mubr.bf16.mxu0 0
        %1538 = vmatmul.mubr.bf16.gmra.mrb[0].mxu0 %v1500
        %v1539 = vpop.f32.mrb[0].mxu0
        %v1540 = vadd.f32 0.0, %v1539
        %v1541 = vpop.f32.mrb[0].mxu0
        %v1542 = vpop.f32.mrb[0].mxu0
        %v1543 = vpop.f32.mrb[0].mxu0
        %1544 = vdwg.mxu0
        %1546 = vrot.lane.b32.xlu0 %v1444, 96
        %v1547 = vpop.permute.xlu0 %1546
        %v1549 = vsel %vm1449, %v1444, 0
        %v1552 = vsel %vm1449, %v1547, 0
        %1554 = vmatprep.subr.bf16.mxu0 0
        %1555 = vmatpush1.bf16.xpose.msra.mxu0 %v1552
        %1556 = vmatprep.subr.bf16.mxu0 0
        %1557 = vmatpush1.bf16.xpose.msra.mxu0 0
        %1558 = vmatprep.subr.bf16.mxu0 0
        %1559 = vmatpush1.bf16.xpose.msra.mxu0 0
        %1560 = vmatprep.subr.bf16.mxu0 0
        %1561 = vmatpush1.bf16.xpose.msra.mxu0 0
        %1562 = vmatprep.subr.bf16.mxu0 0
        %1563 = vmatpush1.bf16.xpose.msra.mxu0 0
        %1564 = vmatprep.subr.bf16.mxu0 0
        %1565 = vmatpush1.bf16.xpose.msra.mxu0 0
        %1566 = vmatprep.subr.bf16.mxu0 0
        %1567 = vmatpush1.bf16.xpose.msra.mxu0 0
        %1568 = vmatprep.subr.bf16.mxu0 0
        %1569 = vmatpush1.bf16.xpose.msra.mxu0 0
        %1570 = vmatprep.subr.bf16.mxu0 0
        %1571 = vmatpush1.bf16.xpose.msra.mxu0 0
        %1572 = vmatprep.subr.bf16.mxu0 0
        %1573 = vmatpush1.bf16.xpose.msra.mxu0 0
        %1574 = vmatprep.subr.bf16.mxu0 0
        %1575 = vmatpush1.bf16.xpose.msra.mxu0 0
        %1576 = vmatprep.subr.bf16.mxu0 0
        %1577 = vmatpush1.bf16.xpose.msra.mxu0 0
        %1578 = vmatprep.subr.bf16.mxu0 0
        %1579 = vmatpush1.bf16.xpose.msra.mxu0 0
        %1580 = vmatprep.subr.bf16.mxu0 0
        %1581 = vmatpush1.bf16.xpose.msra.mxu0 0
        %1582 = vmatprep.subr.bf16.mxu0 0
        %1583 = vmatpush1.bf16.xpose.msra.mxu0 0
        %1584 = vmatprep.subr.bf16.mxu0 0
        %1585 = vmatpush1.bf16.xpose.msra.mxu0 0
        %1586 = vmatprep.mubr.bf16.mxu0 0
        %1587 = vmatmul.mubr.bf16.gmra.mrb[0].mxu0 %v1549
        %v1588 = vpop.f32.mrb[0].mxu0
        %v1589 = vadd.f32 0.0, %v1588
        %v1590 = vpop.f32.mrb[0].mxu0
        %v1591 = vpop.f32.mrb[0].mxu0
        %v1592 = vpop.f32.mrb[0].mxu0
        %1593 = vdwg.mxu0
        %1595 = vrot.lane.b32.xlu0 %v1445, 96
        %v1596 = vpop.permute.xlu0 %1595
        %v1598 = vsel %vm1449, %v1445, 0
        %v1601 = vsel %vm1449, %v1596, 0
        %1603 = vmatprep.subr.bf16.mxu0 0
        %1604 = vmatpush1.bf16.xpose.msra.mxu0 %v1601
        %1605 = vmatprep.subr.bf16.mxu0 0
        %1606 = vmatpush1.bf16.xpose.msra.mxu0 0
        %1607 = vmatprep.subr.bf16.mxu0 0
        %1608 = vmatpush1.bf16.xpose.msra.mxu0 0
        %1609 = vmatprep.subr.bf16.mxu0 0
        %1610 = vmatpush1.bf16.xpose.msra.mxu0 0
        %1611 = vmatprep.subr.bf16.mxu0 0
        %1612 = vmatpush1.bf16.xpose.msra.mxu0 0
        %1613 = vmatprep.subr.bf16.mxu0 0
        %1614 = vmatpush1.bf16.xpose.msra.mxu0 0
        %1615 = vmatprep.subr.bf16.mxu0 0
        %1616 = vmatpush1.bf16.xpose.msra.mxu0 0
        %1617 = vmatprep.subr.bf16.mxu0 0
        %1618 = vmatpush1.bf16.xpose.msra.mxu0 0
        %1619 = vmatprep.subr.bf16.mxu0 0
        %1620 = vmatpush1.bf16.xpose.msra.mxu0 0
        %1621 = vmatprep.subr.bf16.mxu0 0
        %1622 = vmatpush1.bf16.xpose.msra.mxu0 0
        %1623 = vmatprep.subr.bf16.mxu0 0
        %1624 = vmatpush1.bf16.xpose.msra.mxu0 0
        %1625 = vmatprep.subr.bf16.mxu0 0
        %1626 = vmatpush1.bf16.xpose.msra.mxu0 0
        %1627 = vmatprep.subr.bf16.mxu0 0
        %1628 = vmatpush1.bf16.xpose.msra.mxu0 0
        %1629 = vmatprep.subr.bf16.mxu0 0
        %1630 = vmatpush1.bf16.xpose.msra.mxu0 0
        %1631 = vmatprep.subr.bf16.mxu0 0
        %1632 = vmatpush1.bf16.xpose.msra.mxu0 0
        %1633 = vmatprep.subr.bf16.mxu0 0
        %1634 = vmatpush1.bf16.xpose.msra.mxu0 0
        %1635 = vmatprep.mubr.bf16.mxu0 0
        %1636 = vmatmul.mubr.bf16.gmra.mrb[0].mxu0 %v1598
        %v1637 = vpop.f32.mrb[0].mxu0
        %v1638 = vadd.f32 0.0, %v1637
        %v1639 = vpop.f32.mrb[0].mxu0
        %v1640 = vpop.f32.mrb[0].mxu0
        %v1641 = vpop.f32.mrb[0].mxu0
        %1642 = vdwg.mxu0
        %v1643 = vsel %vm1449, %v1491, -inf
        %1644 = vmax.xlane.f32.xlu0 %v1643
        %v1645 = vpop.xlane.xlu0 %1644
        %v1646 = vsel %vm1449, %v1540, -inf
        %1647 = vmax.xlane.f32.xlu0 %v1646
        %v1648 = vpop.xlane.xlu0 %1647
        %v1649 = vsel %vm1449, %v1589, -inf
        %1650 = vmax.xlane.f32.xlu0 %v1649
        %v1651 = vpop.xlane.xlu0 %1650
        %v1652 = vsel %vm1449, %v1638, -inf
        %1653 = vmax.xlane.f32.xlu0 %v1652
        %v1654 = vpop.xlane.xlu0 %1653
        %v1655 = vsub.f32 %v1491, %v1645
        %v1656 = vsub.f32 %v1540, %v1648
        %v1657 = vsub.f32 %v1589, %v1651
        %v1658 = vsub.f32 %v1638, %v1654
        %v1659 = vmul.f32 %v1655, 1.442695
        %v1660 = vpow.pop %v1659
        %v1661 = vmul.f32 %v1656, 1.442695
        %v1662 = vpow.pop %v1661
        %v1663 = vmul.f32 %v1657, 1.442695
        %v1664 = vpow.pop %v1663
        %v1665 = vmul.f32 %v1658, 1.442695
        %v1666 = vpow.pop %v1665
        %v1667 = vsel %vm1449, %v1660, 0.0
        %1668 = vadd.xlane.f32.xlu0 %v1667
        %v1669 = vpop.xlane.xlu0 %1668
        %v1670 = vsel %vm1449, %v1662, 0.0
        %1671 = vadd.xlane.f32.xlu0 %v1670
        %v1672 = vpop.xlane.xlu0 %1671
        %v1673 = vsel %vm1449, %v1664, 0.0
        %1674 = vadd.xlane.f32.xlu0 %v1673
        %v1675 = vpop.xlane.xlu0 %1674
        %v1676 = vsel %vm1449, %v1666, 0.0
        %1677 = vadd.xlane.f32.xlu0 %v1676
        %v1678 = vpop.xlane.xlu0 %1677
        %v1679 = vrcp.pop %v1669
        %v1680 = vrcp.pop %v1672
        %v1681 = vrcp.pop %v1675
        %v1682 = vrcp.pop %v1678
        %v1683 = vmul.f32 %v1660, %v1679
        %v1684 = vmul.f32 %v1662, %v1680
        %v1685 = vmul.f32 %v1664, %v1681
        %v1686 = vmul.f32 %v1666, %v1682
        %v1687 = vpack.c.bf16 %v1683, %v1683
        %v1688 = vpack.c.bf16 %v1684, %v1684
        %v1689 = vpack.c.bf16 %v1685, %v1685
        %v1690 = vpack.c.bf16 %v1686, %v1686
        %v1691 = vpack.c.bf16 %v1417, %v1417
        %v1692 = vpack.c.bf16 %v1434, %v1434
        %v1693 = vpack.c.bf16 %v1437, %v1437
        %v1694 = vpack.c.bf16 %v1440, %v1440
        %v1696 = vsel %vm1449, %v1687, 0
        %vm1698 = vcmask 1043456
        %v1700 = vsel %vm1698, %v1691, 0
        %1702 = vmatprep.subr.bf16.mxu0 0
        %1703 = vmatpush1.bf16.msra.mxu0 %v1700
        %1704 = vmatprep.subr.bf16.mxu0 0
        %1705 = vmatpush1.bf16.msra.mxu0 0
        %1706 = vmatprep.subr.bf16.mxu0 0
        %1707 = vmatpush1.bf16.msra.mxu0 0
        %1708 = vmatprep.subr.bf16.mxu0 0
        %1709 = vmatpush1.bf16.msra.mxu0 0
        %1710 = vmatprep.subr.bf16.mxu0 0
        %1711 = vmatpush1.bf16.msra.mxu0 0
        %1712 = vmatprep.subr.bf16.mxu0 0
        %1713 = vmatpush1.bf16.msra.mxu0 0
        %1714 = vmatprep.subr.bf16.mxu0 0
        %1715 = vmatpush1.bf16.msra.mxu0 0
        %1716 = vmatprep.subr.bf16.mxu0 0
        %1717 = vmatpush1.bf16.msra.mxu0 0
        %1718 = vmatprep.subr.bf16.mxu0 0
        %1719 = vmatpush1.bf16.msra.mxu0 0
        %1720 = vmatprep.subr.bf16.mxu0 0
        %1721 = vmatpush1.bf16.msra.mxu0 0
        %1722 = vmatprep.subr.bf16.mxu0 0
        %1723 = vmatpush1.bf16.msra.mxu0 0
        %1724 = vmatprep.subr.bf16.mxu0 0
        %1725 = vmatpush1.bf16.msra.mxu0 0
        %1726 = vmatprep.subr.bf16.mxu0 0
        %1727 = vmatpush1.bf16.msra.mxu0 0
        %1728 = vmatprep.subr.bf16.mxu0 0
        %1729 = vmatpush1.bf16.msra.mxu0 0
        %1730 = vmatprep.subr.bf16.mxu0 0
        %1731 = vmatpush1.bf16.msra.mxu0 0
        %1732 = vmatprep.subr.bf16.mxu0 0
        %1733 = vmatpush1.bf16.msra.mxu0 0
        %1734 = vmatprep.mubr.bf16.mxu0 0
        %1735 = vmatmul.mubr.bf16.gmra.mrb[0].mxu0 %v1696
        %v1736 = vpop.f32.mrb[0].mxu0
        %v1737 = vadd.f32 0.0, %v1736
        %v1738 = vpop.f32.mrb[0].mxu0
        %v1739 = vpop.f32.mrb[0].mxu0
        %v1740 = vpop.f32.mrb[0].mxu0
        %1741 = vdwg.mxu0
        %v1743 = vsel %vm1449, %v1688, 0
        %v1746 = vsel %vm1698, %v1692, 0
        %1748 = vmatprep.subr.bf16.mxu0 0
        %1749 = vmatpush1.bf16.msra.mxu0 %v1746
        %1750 = vmatprep.subr.bf16.mxu0 0
        %1751 = vmatpush1.bf16.msra.mxu0 0
        %1752 = vmatprep.subr.bf16.mxu0 0
        %1753 = vmatpush1.bf16.msra.mxu0 0
        %1754 = vmatprep.subr.bf16.mxu0 0
        %1755 = vmatpush1.bf16.msra.mxu0 0
        %1756 = vmatprep.subr.bf16.mxu0 0
        %1757 = vmatpush1.bf16.msra.mxu0 0
        %1758 = vmatprep.subr.bf16.mxu0 0
        %1759 = vmatpush1.bf16.msra.mxu0 0
        %1760 = vmatprep.subr.bf16.mxu0 0
        %1761 = vmatpush1.bf16.msra.mxu0 0
        %1762 = vmatprep.subr.bf16.mxu0 0
        %1763 = vmatpush1.bf16.msra.mxu0 0
        %1764 = vmatprep.subr.bf16.mxu0 0
        %1765 = vmatpush1.bf16.msra.mxu0 0
        %1766 = vmatprep.subr.bf16.mxu0 0
        %1767 = vmatpush1.bf16.msra.mxu0 0
        %1768 = vmatprep.subr.bf16.mxu0 0
        %1769 = vmatpush1.bf16.msra.mxu0 0
        %1770 = vmatprep.subr.bf16.mxu0 0
        %1771 = vmatpush1.bf16.msra.mxu0 0
        %1772 = vmatprep.subr.bf16.mxu0 0
        %1773 = vmatpush1.bf16.msra.mxu0 0
        %1774 = vmatprep.subr.bf16.mxu0 0
        %1775 = vmatpush1.bf16.msra.mxu0 0
        %1776 = vmatprep.subr.bf16.mxu0 0
        %1777 = vmatpush1.bf16.msra.mxu0 0
        %1778 = vmatprep.subr.bf16.mxu0 0
        %1779 = vmatpush1.bf16.msra.mxu0 0
        %1780 = vmatprep.mubr.bf16.mxu0 0
        %1781 = vmatmul.mubr.bf16.gmra.mrb[0].mxu0 %v1743
        %v1782 = vpop.f32.mrb[0].mxu0
        %v1783 = vadd.f32 0.0, %v1782
        %v1784 = vpop.f32.mrb[0].mxu0
        %v1785 = vpop.f32.mrb[0].mxu0
        %v1786 = vpop.f32.mrb[0].mxu0
        %1787 = vdwg.mxu0
        %v1789 = vsel %vm1449, %v1689, 0
        %v1792 = vsel %vm1698, %v1693, 0
        %1794 = vmatprep.subr.bf16.mxu0 0
        %1795 = vmatpush1.bf16.msra.mxu0 %v1792
        %1796 = vmatprep.subr.bf16.mxu0 0
        %1797 = vmatpush1.bf16.msra.mxu0 0
        %1798 = vmatprep.subr.bf16.mxu0 0
        %1799 = vmatpush1.bf16.msra.mxu0 0
        %1800 = vmatprep.subr.bf16.mxu0 0
        %1801 = vmatpush1.bf16.msra.mxu0 0
        %1802 = vmatprep.subr.bf16.mxu0 0
        %1803 = vmatpush1.bf16.msra.mxu0 0
        %1804 = vmatprep.subr.bf16.mxu0 0
        %1805 = vmatpush1.bf16.msra.mxu0 0
        %1806 = vmatprep.subr.bf16.mxu0 0
        %1807 = vmatpush1.bf16.msra.mxu0 0
        %1808 = vmatprep.subr.bf16.mxu0 0
        %1809 = vmatpush1.bf16.msra.mxu0 0
        %1810 = vmatprep.subr.bf16.mxu0 0
        %1811 = vmatpush1.bf16.msra.mxu0 0
        %1812 = vmatprep.subr.bf16.mxu0 0
        %1813 = vmatpush1.bf16.msra.mxu0 0
        %1814 = vmatprep.subr.bf16.mxu0 0
        %1815 = vmatpush1.bf16.msra.mxu0 0
        %1816 = vmatprep.subr.bf16.mxu0 0
        %1817 = vmatpush1.bf16.msra.mxu0 0
        %1818 = vmatprep.subr.bf16.mxu0 0
        %1819 = vmatpush1.bf16.msra.mxu0 0
        %1820 = vmatprep.subr.bf16.mxu0 0
        %1821 = vmatpush1.bf16.msra.mxu0 0
        %1822 = vmatprep.subr.bf16.mxu0 0
        %1823 = vmatpush1.bf16.msra.mxu0 0
        %1824 = vmatprep.subr.bf16.mxu0 0
        %1825 = vmatpush1.bf16.msra.mxu0 0
        %1826 = vmatprep.mubr.bf16.mxu0 0
        %1827 = vmatmul.mubr.bf16.gmra.mrb[0].mxu0 %v1789
        %v1828 = vpop.f32.mrb[0].mxu0
        %v1829 = vadd.f32 0.0, %v1828
        %v1830 = vpop.f32.mrb[0].mxu0
        %v1831 = vpop.f32.mrb[0].mxu0
        %v1832 = vpop.f32.mrb[0].mxu0
        %1833 = vdwg.mxu0
        %v1835 = vsel %vm1449, %v1690, 0
        %v1838 = vsel %vm1698, %v1694, 0
        %1840 = vmatprep.subr.bf16.mxu0 0
        %1841 = vmatpush1.bf16.msra.mxu0 %v1838
        %1842 = vmatprep.subr.bf16.mxu0 0
        %1843 = vmatpush1.bf16.msra.mxu0 0
        %1844 = vmatprep.subr.bf16.mxu0 0
        %1845 = vmatpush1.bf16.msra.mxu0 0
        %1846 = vmatprep.subr.bf16.mxu0 0
        %1847 = vmatpush1.bf16.msra.mxu0 0
        %1848 = vmatprep.subr.bf16.mxu0 0
        %1849 = vmatpush1.bf16.msra.mxu0 0
        %1850 = vmatprep.subr.bf16.mxu0 0
        %1851 = vmatpush1.bf16.msra.mxu0 0
        %1852 = vmatprep.subr.bf16.mxu0 0
        %1853 = vmatpush1.bf16.msra.mxu0 0
        %1854 = vmatprep.subr.bf16.mxu0 0
        %1855 = vmatpush1.bf16.msra.mxu0 0
        %1856 = vmatprep.subr.bf16.mxu0 0
        %1857 = vmatpush1.bf16.msra.mxu0 0
        %1858 = vmatprep.subr.bf16.mxu0 0
        %1859 = vmatpush1.bf16.msra.mxu0 0
        %1860 = vmatprep.subr.bf16.mxu0 0
        %1861 = vmatpush1.bf16.msra.mxu0 0
        %1862 = vmatprep.subr.bf16.mxu0 0
        %1863 = vmatpush1.bf16.msra.mxu0 0
        %1864 = vmatprep.subr.bf16.mxu0 0
        %1865 = vmatpush1.bf16.msra.mxu0 0
        %1866 = vmatprep.subr.bf16.mxu0 0
        %1867 = vmatpush1.bf16.msra.mxu0 0
        %1868 = vmatprep.subr.bf16.mxu0 0
        %1869 = vmatpush1.bf16.msra.mxu0 0
        %1870 = vmatprep.subr.bf16.mxu0 0
        %1871 = vmatpush1.bf16.msra.mxu0 0
        %1872 = vmatprep.mubr.bf16.mxu0 0
        %1873 = vmatmul.mubr.bf16.gmra.mrb[0].mxu0 %v1835
        %v1874 = vpop.f32.mrb[0].mxu0
        %v1875 = vadd.f32 0.0, %v1874
        %v1876 = vpop.f32.mrb[0].mxu0
        %v1877 = vpop.f32.mrb[0].mxu0
        %v1878 = vpop.f32.mrb[0].mxu0
        %1879 = vdwg.mxu0
        %1881 = vrot.lane.b32.xlu0 %v1783, 8
        %v1882 = vpop.permute.xlu0 %1881
        %1885 = vrot.lane.b32.xlu0 %v1829, 16
        %v1886 = vpop.permute.xlu0 %1885
        %1889 = vrot.lane.b32.xlu0 %v1875, 24
        %v1890 = vpop.permute.xlu0 %1889
        %v1892 = vsel %vm1449, %v1737, %v1882
        %vm1893 = vcmask 130048
        %v1894 = vsel %vm1893, %v1892, %v1886
        %vm1895 = vcmask 195584
        %v1896 = vsel %vm1895, %v1894, %v1890
        %v1897 = vsel %vm1449, %v1683, 0.0
        %v1898 = vsel %vm1449, %v1684, 0.0
        %v1899 = vadd.f32 %v1897, %v1898
        %v1900 = vsel %vm1449, %v1685, 0.0
        %v1901 = vadd.f32 %v1899, %v1900
        %v1902 = vsel %vm1449, %v1686, 0.0
        %v1903 = vadd.f32 %v1901, %v1902
        %v1904 = vrcp.pop 4.0
        %v1905 = vmul.f32 %v1903, %v1904
        %v1906 = vpack.c.bf16 %v1896, %v1896
        %v1907 = vld [vmem:[%s1037] sm:$0xf]
        %v1908 = vld [vmem:[%s1037 + $0x4] sm:$0xf]
        %v1909 = vld [vmem:[%s1037 + $0x8] sm:$0xf]
        %v1910 = vld [vmem:[%s1037 + $0xc] sm:$0xf]
        %v1911 = vld [vmem:[%s1244] sm:$0x1]
        %v1913 = vlaneseq
        %v1914 = vshrl.u32 %v1913, 7
        %v1915 = vsub.s32 0, %v1914
        %v1916 = vrot.slane %v1911, %v1915
        %v1922 = vunpack.c.l.b16 %v1907
        %v1923 = vunpack.c.l.b16 %v1908
        %v1924 = vunpack.c.l.b16 %v1909
        %v1925 = vunpack.c.l.b16 %v1910
        %v1926 = vpack.c.b16 %v1923, %v1922
        %v1927 = vpack.c.b16 %v1925, %v1924
        %v1931 = vsel %vm1325, %v1906, 0
        %1933 = vmatprep.subr.bf16.mxu0 0
        %1934 = vmatpush1.bf16.msra.mxu0 %v1926
        %1935 = vmatprep.subr.bf16.mxu0 0
        %1936 = vmatpush1.bf16.msra.mxu0 %v1927
        %1937 = vmatprep.subr.bf16.mxu0 0
        %1938 = vmatpush1.bf16.msra.mxu0 0
        %1939 = vmatprep.subr.bf16.mxu0 0
        %1940 = vmatpush1.bf16.msra.mxu0 0
        %1941 = vmatprep.subr.bf16.mxu0 0
        %1942 = vmatpush1.bf16.msra.mxu0 0
        %1943 = vmatprep.subr.bf16.mxu0 0
        %1944 = vmatpush1.bf16.msra.mxu0 0
        %1945 = vmatprep.subr.bf16.mxu0 0
        %1946 = vmatpush1.bf16.msra.mxu0 0
        %1947 = vmatprep.subr.bf16.mxu0 0
        %1948 = vmatpush1.bf16.msra.mxu0 0
        %1949 = vmatprep.subr.bf16.mxu0 0
        %1950 = vmatpush1.bf16.msra.mxu0 0
        %1951 = vmatprep.subr.bf16.mxu0 0
        %1952 = vmatpush1.bf16.msra.mxu0 0
        %1953 = vmatprep.subr.bf16.mxu0 0
        %1954 = vmatpush1.bf16.msra.mxu0 0
        %1955 = vmatprep.subr.bf16.mxu0 0
        %1956 = vmatpush1.bf16.msra.mxu0 0
        %1957 = vmatprep.subr.bf16.mxu0 0
        %1958 = vmatpush1.bf16.msra.mxu0 0
        %1959 = vmatprep.subr.bf16.mxu0 0
        %1960 = vmatpush1.bf16.msra.mxu0 0
        %1961 = vmatprep.subr.bf16.mxu0 0
        %1962 = vmatpush1.bf16.msra.mxu0 0
        %1963 = vmatprep.subr.bf16.mxu0 0
        %1964 = vmatpush1.bf16.msra.mxu0 0
        %1965 = vmatprep.mubr.bf16.mxu0 0
        %1966 = vmatmul.mubr.bf16.gmra.mrb[0].mxu0 %v1931
        %v1967 = vpop.f32.mrb[0].mxu0
        %v1968 = vadd.f32 %v1916, %v1967
        %v1969 = vpop.f32.mrb[0].mxu0
        %v1970 = vpop.f32.mrb[0].mxu0
        %v1971 = vpop.f32.mrb[0].mxu0
        %1972 = vdwg.mxu0
        %v1973 = vadd.f32 %v1298, %v1968
        %v1974 = vld [vmem:[%s1264] sm:$0x1]
        %v1975 = vld [vmem:[%s1267] sm:$0x1]
        %v1976 = vsel %vm1325, %v1973, 0.0
        %1977 = vadd.xlane.f32.xlu0 %v1976
        %v1978 = vpop.xlane.xlu0 %1977
        %v1979 = vrcp.pop 32.0
        %v1980 = vmul.f32 %v1978, %v1979
        %v1981 = vsub.f32 %v1973, %v1980
        %v1982 = vmul.f32 %v1981, %v1981
        %v1983 = vsel %vm1325, %v1982, 0.0
        %1984 = vadd.xlane.f32.xlu0 %v1983
        %v1985 = vpop.xlane.xlu0 %1984
        %v1986 = vmul.f32 %v1985, %v1979
        %v1987 = vadd.f32 %v1986, 1e-05
        %v1988 = vrsqrt.pop %v1987
        %v1989 = vmul.f32 %v1981, %v1988
        %v1991 = vlaneseq
        %v1992 = vshrl.u32 %v1991, 7
        %v1993 = vsub.s32 0, %v1992
        %v1994 = vrot.slane %v1974, %v1993
        %v1996 = vmul.f32 %v1989, %v1994
        %v1998 = vlaneseq
        %v1999 = vshrl.u32 %v1998, 7
        %v2000 = vsub.s32 0, %v1999
        %v2001 = vrot.slane %v1975, %v2000
        %v2003 = vadd.f32 %v1996, %v2001
        %v2004 = vpack.c.bf16 %v1905, %v1905
        %vm2005 = vcmask 60416
        %2006 = vst.msk [vmem:[%s1216] sm:$0xf] %vm2005, %v2004
        %v2007 = vld [vmem:[%s1046] sm:$0xf]
        %v2008 = vld [vmem:[%s1046 + $0x4] sm:$0xf]
        %v2009 = vld [vmem:[%s1046 + $0x8] sm:$0xf]
        %v2010 = vld [vmem:[%s1046 + $0xc] sm:$0xf]
        %v2011 = vld [vmem:[%s1247] sm:$0x1]
        %v2012 = vadd.f32 %v2003, %v1299
        %v2013 = vpack.c.bf16 %v2012, %v2012
        %v2015 = vlaneseq
        %v2016 = vshrl.u32 %v2015, 7
        %v2017 = vsub.s32 0, %v2016
        %v2018 = vrot.slane %v2011, %v2017
        %v2024 = vunpack.c.l.b16 %v2007
        %v2025 = vunpack.c.l.b16 %v2008
        %v2026 = vunpack.c.l.b16 %v2009
        %v2027 = vunpack.c.l.b16 %v2010
        %v2028 = vpack.c.b16 %v2025, %v2024
        %v2029 = vpack.c.b16 %v2027, %v2026
        %v2033 = vsel %vm1325, %v2013, 0
        %2035 = vmatprep.subr.bf16.mxu0 0
        %2036 = vmatpush1.bf16.msra.mxu0 %v2028
        %2037 = vmatprep.subr.bf16.mxu0 0
        %2038 = vmatpush1.bf16.msra.mxu0 %v2029
        %2039 = vmatprep.subr.bf16.mxu0 0
        %2040 = vmatpush1.bf16.msra.mxu0 0
        %2041 = vmatprep.subr.bf16.mxu0 0
        %2042 = vmatpush1.bf16.msra.mxu0 0
        %2043 = vmatprep.subr.bf16.mxu0 0
        %2044 = vmatpush1.bf16.msra.mxu0 0
        %2045 = vmatprep.subr.bf16.mxu0 0
        %2046 = vmatpush1.bf16.msra.mxu0 0
        %2047 = vmatprep.subr.bf16.mxu0 0
        %2048 = vmatpush1.bf16.msra.mxu0 0
        %2049 = vmatprep.subr.bf16.mxu0 0
        %2050 = vmatpush1.bf16.msra.mxu0 0
        %2051 = vmatprep.subr.bf16.mxu0 0
        %2052 = vmatpush1.bf16.msra.mxu0 0
        %2053 = vmatprep.subr.bf16.mxu0 0
        %2054 = vmatpush1.bf16.msra.mxu0 0
        %2055 = vmatprep.subr.bf16.mxu0 0
        %2056 = vmatpush1.bf16.msra.mxu0 0
        %2057 = vmatprep.subr.bf16.mxu0 0
        %2058 = vmatpush1.bf16.msra.mxu0 0
        %2059 = vmatprep.subr.bf16.mxu0 0
        %2060 = vmatpush1.bf16.msra.mxu0 0
        %2061 = vmatprep.subr.bf16.mxu0 0
        %2062 = vmatpush1.bf16.msra.mxu0 0
        %2063 = vmatprep.subr.bf16.mxu0 0
        %2064 = vmatpush1.bf16.msra.mxu0 0
        %2065 = vmatprep.subr.bf16.mxu0 0
        %2066 = vmatpush1.bf16.msra.mxu0 0
        %2067 = vmatprep.mubr.bf16.mxu0 0
        %2068 = vmatmul.mubr.bf16.gmra.mrb[0].mxu0 %v2033
        %v2069 = vpop.f32.mrb[0].mxu0
        %v2070 = vadd.f32 %v2018, %v2069
        %v2071 = vpop.f32.mrb[0].mxu0
        %v2072 = vpop.f32.mrb[0].mxu0
        %v2073 = vpop.f32.mrb[0].mxu0
        %2074 = vdwg.mxu0
        %v2075 = vld [vmem:[#allocation3] sm:$0xff]
        %2076 = vrot.lane.b32.xlu0 %v2028, 96
        %v2077 = vpop.permute.xlu0 %2076
        %2078 = vrot.lane.b32.xlu0 %v2029, 96
        %v2079 = vpop.permute.xlu0 %2078
        %2082 = vrot.lane.b32.xlu0 %v2018, 96
        %v2083 = vpop.permute.xlu0 %2082
        %v2086 = vsel %vm1325, %v2075, 0
        %2088 = vmatprep.subr.bf16.mxu0 0
        %2089 = vmatpush1.bf16.msra.mxu0 %v2077
        %2090 = vmatprep.subr.bf16.mxu0 0
        %2091 = vmatpush1.bf16.msra.mxu0 %v2079
        %2092 = vmatprep.subr.bf16.mxu0 0
        %2093 = vmatpush1.bf16.msra.mxu0 0
        %2094 = vmatprep.subr.bf16.mxu0 0
        %2095 = vmatpush1.bf16.msra.mxu0 0
        %2096 = vmatprep.subr.bf16.mxu0 0
        %2097 = vmatpush1.bf16.msra.mxu0 0
        %2098 = vmatprep.subr.bf16.mxu0 0
        %2099 = vmatpush1.bf16.msra.mxu0 0
        %2100 = vmatprep.subr.bf16.mxu0 0
        %2101 = vmatpush1.bf16.msra.mxu0 0
        %2102 = vmatprep.subr.bf16.mxu0 0
        %2103 = vmatpush1.bf16.msra.mxu0 0
        %2104 = vmatprep.subr.bf16.mxu0 0
        %2105 = vmatpush1.bf16.msra.mxu0 0
        %2106 = vmatprep.subr.bf16.mxu0 0
        %2107 = vmatpush1.bf16.msra.mxu0 0
        %2108 = vmatprep.subr.bf16.mxu0 0
        %2109 = vmatpush1.bf16.msra.mxu0 0
        %2110 = vmatprep.subr.bf16.mxu0 0
        %2111 = vmatpush1.bf16.msra.mxu0 0
        %2112 = vmatprep.subr.bf16.mxu0 0
        %2113 = vmatpush1.bf16.msra.mxu0 0
        %2114 = vmatprep.subr.bf16.mxu0 0
        %2115 = vmatpush1.bf16.msra.mxu0 0
        %2116 = vmatprep.subr.bf16.mxu0 0
        %2117 = vmatpush1.bf16.msra.mxu0 0
        %2118 = vmatprep.subr.bf16.mxu0 0
        %2119 = vmatpush1.bf16.msra.mxu0 0
        %2120 = vmatprep.mubr.bf16.mxu0 0
        %2121 = vmatmul.mubr.bf16.gmra.mrb[0].mxu0 %v2086
        %v2122 = vpop.f32.mrb[0].mxu0
        %v2123 = vadd.f32 %v2083, %v2122
        %v2124 = vpop.f32.mrb[0].mxu0
        %v2125 = vpop.f32.mrb[0].mxu0
        %v2126 = vadd.f32 %v2083, %v2125
        %v2127 = vpop.f32.mrb[0].mxu0
        %2128 = vdwg.mxu0
        %v2129 = vld [vmem:[#allocation4] sm:$0xff]
        %2130 = vrot.lane.b32.xlu0 %v2028, 64
        %v2131 = vpop.permute.xlu0 %2130
        %2132 = vrot.lane.b32.xlu0 %v2029, 64
        %v2133 = vpop.permute.xlu0 %2132
        %2136 = vrot.lane.b32.xlu0 %v2018, 64
        %v2137 = vpop.permute.xlu0 %2136
        %v2140 = vsel %vm1325, %v2129, 0
        %2142 = vmatprep.subr.bf16.mxu0 0
        %2143 = vmatpush1.bf16.msra.mxu0 %v2131
        %2144 = vmatprep.subr.bf16.mxu0 0
        %2145 = vmatpush1.bf16.msra.mxu0 %v2133
        %2146 = vmatprep.subr.bf16.mxu0 0
        %2147 = vmatpush1.bf16.msra.mxu0 0
        %2148 = vmatprep.subr.bf16.mxu0 0
        %2149 = vmatpush1.bf16.msra.mxu0 0
        %2150 = vmatprep.subr.bf16.mxu0 0
        %2151 = vmatpush1.bf16.msra.mxu0 0
        %2152 = vmatprep.subr.bf16.mxu0 0
        %2153 = vmatpush1.bf16.msra.mxu0 0
        %2154 = vmatprep.subr.bf16.mxu0 0
        %2155 = vmatpush1.bf16.msra.mxu0 0
        %2156 = vmatprep.subr.bf16.mxu0 0
        %2157 = vmatpush1.bf16.msra.mxu0 0
        %2158 = vmatprep.subr.bf16.mxu0 0
        %2159 = vmatpush1.bf16.msra.mxu0 0
        %2160 = vmatprep.subr.bf16.mxu0 0
        %2161 = vmatpush1.bf16.msra.mxu0 0
        %2162 = vmatprep.subr.bf16.mxu0 0
        %2163 = vmatpush1.bf16.msra.mxu0 0
        %2164 = vmatprep.subr.bf16.mxu0 0
        %2165 = vmatpush1.bf16.msra.mxu0 0
        %2166 = vmatprep.subr.bf16.mxu0 0
        %2167 = vmatpush1.bf16.msra.mxu0 0
        %2168 = vmatprep.subr.bf16.mxu0 0
        %2169 = vmatpush1.bf16.msra.mxu0 0
        %2170 = vmatprep.subr.bf16.mxu0 0
        %2171 = vmatpush1.bf16.msra.mxu0 0
        %2172 = vmatprep.subr.bf16.mxu0 0
        %2173 = vmatpush1.bf16.msra.mxu0 0
        %2174 = vmatprep.mubr.bf16.mxu0 0
        %2175 = vmatmul.mubr.bf16.gmra.mrb[0].mxu0 %v2140
        %v2176 = vpop.f32.mrb[0].mxu0
        %v2177 = vadd.f32 %v2137, %v2176
        %v2178 = vpop.f32.mrb[0].mxu0
        %v2179 = vpop.f32.mrb[0].mxu0
        %v2180 = vadd.f32 %v2137, %v2179
        %v2181 = vpop.f32.mrb[0].mxu0
        %2182 = vdwg.mxu0
        %2184 = vrot.lane.b32.xlu0 %v2070, 120
        %v2185 = vpop.permute.xlu0 %2184
        %2187 = vrot.lane.b32.xlu0 %v2070, 112
        %v2188 = vpop.permute.xlu0 %2187
        %2190 = vrot.lane.b32.xlu0 %v2070, 104
        %v2191 = vpop.permute.xlu0 %2190
        %2195 = vrot.lane.b32.xlu0 %v2123, 120
        %v2196 = vpop.permute.xlu0 %2195
        %2197 = vrot.lane.b32.xlu0 %v2126, 120
        %v2198 = vpop.permute.xlu0 %2197
        %2201 = vrot.lane.b32.xlu0 %v2123, 112
        %v2202 = vpop.permute.xlu0 %2201
        %2203 = vrot.lane.b32.xlu0 %v2126, 112
        %v2204 = vpop.permute.xlu0 %2203
        %2207 = vrot.lane.b32.xlu0 %v2123, 104
        %v2208 = vpop.permute.xlu0 %2207
        %2209 = vrot.lane.b32.xlu0 %v2126, 104
        %v2210 = vpop.permute.xlu0 %2209
        %2215 = vrot.lane.b32.xlu0 %v2177, 120
        %v2216 = vpop.permute.xlu0 %2215
        %2217 = vrot.lane.b32.xlu0 %v2180, 120
        %v2218 = vpop.permute.xlu0 %2217
        %2221 = vrot.lane.b32.xlu0 %v2177, 112
        %v2222 = vpop.permute.xlu0 %2221
        %2223 = vrot.lane.b32.xlu0 %v2180, 112
        %v2224 = vpop.permute.xlu0 %2223
        %2227 = vrot.lane.b32.xlu0 %v2177, 104
        %v2228 = vpop.permute.xlu0 %2227
        %2229 = vrot.lane.b32.xlu0 %v2180, 104
        %v2230 = vpop.permute.xlu0 %2229
        %v2233 = vpack.c.bf16 %v2070, %v2070
        %v2234 = vpack.c.bf16 %v2185, %v2185
        %v2235 = vpack.c.bf16 %v2188, %v2188
        %v2236 = vpack.c.bf16 %v2191, %v2191
        %v2237 = vpack.c.bf16 %v2126, %v2123
        %v2238 = vpack.c.bf16 %v2198, %v2196
        %v2239 = vpack.c.bf16 %v2204, %v2202
        %v2240 = vpack.c.bf16 %v2210, %v2208
        %v2242 = vsel %vm1449, %v2233, 0
        %v2245 = vsel %vm1449, %v2237, 0
        %2247 = vmatprep.subr.bf16.mxu0 0
        %2248 = vmatpush1.bf16.xpose.msra.mxu0 %v2245
        %2249 = vmatprep.subr.bf16.mxu0 0
        %2250 = vmatpush1.bf16.xpose.msra.mxu0 0
        %2251 = vmatprep.subr.bf16.mxu0 0
        %2252 = vmatpush1.bf16.xpose.msra.mxu0 0
        %2253 = vmatprep.subr.bf16.mxu0 0
        %2254 = vmatpush1.bf16.xpose.msra.mxu0 0
        %2255 = vmatprep.subr.bf16.mxu0 0
        %2256 = vmatpush1.bf16.xpose.msra.mxu0 0
        %2257 = vmatprep.subr.bf16.mxu0 0
        %2258 = vmatpush1.bf16.xpose.msra.mxu0 0
        %2259 = vmatprep.subr.bf16.mxu0 0
        %2260 = vmatpush1.bf16.xpose.msra.mxu0 0
        %2261 = vmatprep.subr.bf16.mxu0 0
        %2262 = vmatpush1.bf16.xpose.msra.mxu0 0
        %2263 = vmatprep.subr.bf16.mxu0 0
        %2264 = vmatpush1.bf16.xpose.msra.mxu0 0
        %2265 = vmatprep.subr.bf16.mxu0 0
        %2266 = vmatpush1.bf16.xpose.msra.mxu0 0
        %2267 = vmatprep.subr.bf16.mxu0 0
        %2268 = vmatpush1.bf16.xpose.msra.mxu0 0
        %2269 = vmatprep.subr.bf16.mxu0 0
        %2270 = vmatpush1.bf16.xpose.msra.mxu0 0
        %2271 = vmatprep.subr.bf16.mxu0 0
        %2272 = vmatpush1.bf16.xpose.msra.mxu0 0
        %2273 = vmatprep.subr.bf16.mxu0 0
        %2274 = vmatpush1.bf16.xpose.msra.mxu0 0
        %2275 = vmatprep.subr.bf16.mxu0 0
        %2276 = vmatpush1.bf16.xpose.msra.mxu0 0
        %2277 = vmatprep.subr.bf16.mxu0 0
        %2278 = vmatpush1.bf16.xpose.msra.mxu0 0
        %2279 = vmatprep.mubr.bf16.mxu0 0
        %2280 = vmatmul.mubr.bf16.gmra.mrb[0].mxu0 %v2242
        %v2281 = vpop.f32.mrb[0].mxu0
        %v2282 = vadd.f32 0.0, %v2281
        %v2283 = vpop.f32.mrb[0].mxu0
        %v2284 = vpop.f32.mrb[0].mxu0
        %v2285 = vpop.f32.mrb[0].mxu0
        %2286 = vdwg.mxu0
        %v2288 = vsel %vm1449, %v2234, 0
        %v2291 = vsel %vm1449, %v2238, 0
        %2293 = vmatprep.subr.bf16.mxu0 0
        %2294 = vmatpush1.bf16.xpose.msra.mxu0 %v2291
        %2295 = vmatprep.subr.bf16.mxu0 0
        %2296 = vmatpush1.bf16.xpose.msra.mxu0 0
        %2297 = vmatprep.subr.bf16.mxu0 0
        %2298 = vmatpush1.bf16.xpose.msra.mxu0 0
        %2299 = vmatprep.subr.bf16.mxu0 0
        %2300 = vmatpush1.bf16.xpose.msra.mxu0 0
        %2301 = vmatprep.subr.bf16.mxu0 0
        %2302 = vmatpush1.bf16.xpose.msra.mxu0 0
        %2303 = vmatprep.subr.bf16.mxu0 0
        %2304 = vmatpush1.bf16.xpose.msra.mxu0 0
        %2305 = vmatprep.subr.bf16.mxu0 0
        %2306 = vmatpush1.bf16.xpose.msra.mxu0 0
        %2307 = vmatprep.subr.bf16.mxu0 0
        %2308 = vmatpush1.bf16.xpose.msra.mxu0 0
        %2309 = vmatprep.subr.bf16.mxu0 0
        %2310 = vmatpush1.bf16.xpose.msra.mxu0 0
        %2311 = vmatprep.subr.bf16.mxu0 0
        %2312 = vmatpush1.bf16.xpose.msra.mxu0 0
        %2313 = vmatprep.subr.bf16.mxu0 0
        %2314 = vmatpush1.bf16.xpose.msra.mxu0 0
        %2315 = vmatprep.subr.bf16.mxu0 0
        %2316 = vmatpush1.bf16.xpose.msra.mxu0 0
        %2317 = vmatprep.subr.bf16.mxu0 0
        %2318 = vmatpush1.bf16.xpose.msra.mxu0 0
        %2319 = vmatprep.subr.bf16.mxu0 0
        %2320 = vmatpush1.bf16.xpose.msra.mxu0 0
        %2321 = vmatprep.subr.bf16.mxu0 0
        %2322 = vmatpush1.bf16.xpose.msra.mxu0 0
        %2323 = vmatprep.subr.bf16.mxu0 0
        %2324 = vmatpush1.bf16.xpose.msra.mxu0 0
        %2325 = vmatprep.mubr.bf16.mxu0 0
        %2326 = vmatmul.mubr.bf16.gmra.mrb[0].mxu0 %v2288
        %v2327 = vpop.f32.mrb[0].mxu0
        %v2328 = vadd.f32 0.0, %v2327
        %v2329 = vpop.f32.mrb[0].mxu0
        %v2330 = vpop.f32.mrb[0].mxu0
        %v2331 = vpop.f32.mrb[0].mxu0
        %2332 = vdwg.mxu0
        %v2334 = vsel %vm1449, %v2235, 0
        %v2337 = vsel %vm1449, %v2239, 0
        %2339 = vmatprep.subr.bf16.mxu0 0
        %2340 = vmatpush1.bf16.xpose.msra.mxu0 %v2337
        %2341 = vmatprep.subr.bf16.mxu0 0
        %2342 = vmatpush1.bf16.xpose.msra.mxu0 0
        %2343 = vmatprep.subr.bf16.mxu0 0
        %2344 = vmatpush1.bf16.xpose.msra.mxu0 0
        %2345 = vmatprep.subr.bf16.mxu0 0
        %2346 = vmatpush1.bf16.xpose.msra.mxu0 0
        %2347 = vmatprep.subr.bf16.mxu0 0
        %2348 = vmatpush1.bf16.xpose.msra.mxu0 0
        %2349 = vmatprep.subr.bf16.mxu0 0
        %2350 = vmatpush1.bf16.xpose.msra.mxu0 0
        %2351 = vmatprep.subr.bf16.mxu0 0
        %2352 = vmatpush1.bf16.xpose.msra.mxu0 0
        %2353 = vmatprep.subr.bf16.mxu0 0
        %2354 = vmatpush1.bf16.xpose.msra.mxu0 0
        %2355 = vmatprep.subr.bf16.mxu0 0
        %2356 = vmatpush1.bf16.xpose.msra.mxu0 0
        %2357 = vmatprep.subr.bf16.mxu0 0
        %2358 = vmatpush1.bf16.xpose.msra.mxu0 0
        %2359 = vmatprep.subr.bf16.mxu0 0
        %2360 = vmatpush1.bf16.xpose.msra.mxu0 0
        %2361 = vmatprep.subr.bf16.mxu0 0
        %2362 = vmatpush1.bf16.xpose.msra.mxu0 0
        %2363 = vmatprep.subr.bf16.mxu0 0
        %2364 = vmatpush1.bf16.xpose.msra.mxu0 0
        %2365 = vmatprep.subr.bf16.mxu0 0
        %2366 = vmatpush1.bf16.xpose.msra.mxu0 0
        %2367 = vmatprep.subr.bf16.mxu0 0
        %2368 = vmatpush1.bf16.xpose.msra.mxu0 0
        %2369 = vmatprep.subr.bf16.mxu0 0
        %2370 = vmatpush1.bf16.xpose.msra.mxu0 0
        %2371 = vmatprep.mubr.bf16.mxu0 0
        %2372 = vmatmul.mubr.bf16.gmra.mrb[0].mxu0 %v2334
        %v2373 = vpop.f32.mrb[0].mxu0
        %v2374 = vadd.f32 0.0, %v2373
        %v2375 = vpop.f32.mrb[0].mxu0
        %v2376 = vpop.f32.mrb[0].mxu0
        %v2377 = vpop.f32.mrb[0].mxu0
        %2378 = vdwg.mxu0
        %v2380 = vsel %vm1449, %v2236, 0
        %v2383 = vsel %vm1449, %v2240, 0
        %2385 = vmatprep.subr.bf16.mxu0 0
        %2386 = vmatpush1.bf16.xpose.msra.mxu0 %v2383
        %2387 = vmatprep.subr.bf16.mxu0 0
        %2388 = vmatpush1.bf16.xpose.msra.mxu0 0
        %2389 = vmatprep.subr.bf16.mxu0 0
        %2390 = vmatpush1.bf16.xpose.msra.mxu0 0
        %2391 = vmatprep.subr.bf16.mxu0 0
        %2392 = vmatpush1.bf16.xpose.msra.mxu0 0
        %2393 = vmatprep.subr.bf16.mxu0 0
        %2394 = vmatpush1.bf16.xpose.msra.mxu0 0
        %2395 = vmatprep.subr.bf16.mxu0 0
        %2396 = vmatpush1.bf16.xpose.msra.mxu0 0
        %2397 = vmatprep.subr.bf16.mxu0 0
        %2398 = vmatpush1.bf16.xpose.msra.mxu0 0
        %2399 = vmatprep.subr.bf16.mxu0 0
        %2400 = vmatpush1.bf16.xpose.msra.mxu0 0
        %2401 = vmatprep.subr.bf16.mxu0 0
        %2402 = vmatpush1.bf16.xpose.msra.mxu0 0
        %2403 = vmatprep.subr.bf16.mxu0 0
        %2404 = vmatpush1.bf16.xpose.msra.mxu0 0
        %2405 = vmatprep.subr.bf16.mxu0 0
        %2406 = vmatpush1.bf16.xpose.msra.mxu0 0
        %2407 = vmatprep.subr.bf16.mxu0 0
        %2408 = vmatpush1.bf16.xpose.msra.mxu0 0
        %2409 = vmatprep.subr.bf16.mxu0 0
        %2410 = vmatpush1.bf16.xpose.msra.mxu0 0
        %2411 = vmatprep.subr.bf16.mxu0 0
        %2412 = vmatpush1.bf16.xpose.msra.mxu0 0
        %2413 = vmatprep.subr.bf16.mxu0 0
        %2414 = vmatpush1.bf16.xpose.msra.mxu0 0
        %2415 = vmatprep.subr.bf16.mxu0 0
        %2416 = vmatpush1.bf16.xpose.msra.mxu0 0
        %2417 = vmatprep.mubr.bf16.mxu0 0
        %2418 = vmatmul.mubr.bf16.gmra.mrb[0].mxu0 %v2380
        %v2419 = vpop.f32.mrb[0].mxu0
        %v2420 = vadd.f32 0.0, %v2419
        %v2421 = vpop.f32.mrb[0].mxu0
        %v2422 = vpop.f32.mrb[0].mxu0
        %v2423 = vpop.f32.mrb[0].mxu0
        %2424 = vdwg.mxu0
        %v2425 = vsel %vm1893, %v2282, -inf
        %2426 = vmax.xlane.f32.xlu0 %v2425
        %v2427 = vpop.xlane.xlu0 %2426
        %v2428 = vsel %vm1893, %v2328, -inf
        %2429 = vmax.xlane.f32.xlu0 %v2428
        %v2430 = vpop.xlane.xlu0 %2429
        %v2431 = vsel %vm1893, %v2374, -inf
        %2432 = vmax.xlane.f32.xlu0 %v2431
        %v2433 = vpop.xlane.xlu0 %2432
        %v2434 = vsel %vm1893, %v2420, -inf
        %2435 = vmax.xlane.f32.xlu0 %v2434
        %v2436 = vpop.xlane.xlu0 %2435
        %v2437 = vsub.f32 %v2282, %v2427
        %v2438 = vsub.f32 %v2328, %v2430
        %v2439 = vsub.f32 %v2374, %v2433
        %v2440 = vsub.f32 %v2420, %v2436
        %v2441 = vmul.f32 %v2437, 1.442695
        %v2442 = vpow.pop %v2441
        %v2443 = vmul.f32 %v2438, 1.442695
        %v2444 = vpow.pop %v2443
        %v2445 = vmul.f32 %v2439, 1.442695
        %v2446 = vpow.pop %v2445
        %v2447 = vmul.f32 %v2440, 1.442695
        %v2448 = vpow.pop %v2447
        %v2449 = vsel %vm1893, %v2442, 0.0
        %2450 = vadd.xlane.f32.xlu0 %v2449
        %v2451 = vpop.xlane.xlu0 %2450
        %v2452 = vsel %vm1893, %v2444, 0.0
        %2453 = vadd.xlane.f32.xlu0 %v2452
        %v2454 = vpop.xlane.xlu0 %2453
        %v2455 = vsel %vm1893, %v2446, 0.0
        %2456 = vadd.xlane.f32.xlu0 %v2455
        %v2457 = vpop.xlane.xlu0 %2456
        %v2458 = vsel %vm1893, %v2448, 0.0
        %2459 = vadd.xlane.f32.xlu0 %v2458
        %v2460 = vpop.xlane.xlu0 %2459
        %v2461 = vrcp.pop %v2451
        %v2462 = vrcp.pop %v2454
        %v2463 = vrcp.pop %v2457
        %v2464 = vrcp.pop %v2460
        %v2465 = vmul.f32 %v2442, %v2461
        %v2466 = vmul.f32 %v2444, %v2462
        %v2467 = vmul.f32 %v2446, %v2463
        %v2468 = vmul.f32 %v2448, %v2464
        %v2469 = vpack.c.bf16 %v2465, %v2465
        %v2470 = vpack.c.bf16 %v2466, %v2466
        %v2471 = vpack.c.bf16 %v2467, %v2467
        %v2472 = vpack.c.bf16 %v2468, %v2468
        %v2473 = vpack.c.bf16 %v2180, %v2177
        %v2474 = vpack.c.bf16 %v2218, %v2216
        %v2475 = vpack.c.bf16 %v2224, %v2222
        %v2476 = vpack.c.bf16 %v2230, %v2228
        %v2478 = vsel %vm1893, %v2469, 0
        %2480 = vmatprep.subr.bf16.mxu0 0
        %2481 = vmatpush1.bf16.msra.mxu0 %v2473
        %2482 = vmatprep.subr.bf16.mxu0 0
        %2483 = vmatpush1.bf16.msra.mxu0 0
        %2484 = vmatprep.subr.bf16.mxu0 0
        %2485 = vmatpush1.bf16.msra.mxu0 0
        %2486 = vmatprep.subr.bf16.mxu0 0
        %2487 = vmatpush1.bf16.msra.mxu0 0
        %2488 = vmatprep.subr.bf16.mxu0 0
        %2489 = vmatpush1.bf16.msra.mxu0 0
        %2490 = vmatprep.subr.bf16.mxu0 0
        %2491 = vmatpush1.bf16.msra.mxu0 0
        %2492 = vmatprep.subr.bf16.mxu0 0
        %2493 = vmatpush1.bf16.msra.mxu0 0
        %2494 = vmatprep.subr.bf16.mxu0 0
        %2495 = vmatpush1.bf16.msra.mxu0 0
        %2496 = vmatprep.subr.bf16.mxu0 0
        %2497 = vmatpush1.bf16.msra.mxu0 0
        %2498 = vmatprep.subr.bf16.mxu0 0
        %2499 = vmatpush1.bf16.msra.mxu0 0
        %2500 = vmatprep.subr.bf16.mxu0 0
        %2501 = vmatpush1.bf16.msra.mxu0 0
        %2502 = vmatprep.subr.bf16.mxu0 0
        %2503 = vmatpush1.bf16.msra.mxu0 0
        %2504 = vmatprep.subr.bf16.mxu0 0
        %2505 = vmatpush1.bf16.msra.mxu0 0
        %2506 = vmatprep.subr.bf16.mxu0 0
        %2507 = vmatpush1.bf16.msra.mxu0 0
        %2508 = vmatprep.subr.bf16.mxu0 0
        %2509 = vmatpush1.bf16.msra.mxu0 0
        %2510 = vmatprep.subr.bf16.mxu0 0
        %2511 = vmatpush1.bf16.msra.mxu0 0
        %2512 = vmatprep.mubr.bf16.mxu0 0
        %2513 = vmatmul.mubr.bf16.gmra.mrb[0].mxu0 %v2478
        %v2514 = vpop.f32.mrb[0].mxu0
        %v2515 = vadd.f32 0.0, %v2514
        %v2516 = vpop.f32.mrb[0].mxu0
        %v2517 = vpop.f32.mrb[0].mxu0
        %v2518 = vpop.f32.mrb[0].mxu0
        %2519 = vdwg.mxu0
        %v2521 = vsel %vm1893, %v2470, 0
        %2523 = vmatprep.subr.bf16.mxu0 0
        %2524 = vmatpush1.bf16.msra.mxu0 %v2474
        %2525 = vmatprep.subr.bf16.mxu0 0
        %2526 = vmatpush1.bf16.msra.mxu0 0
        %2527 = vmatprep.subr.bf16.mxu0 0
        %2528 = vmatpush1.bf16.msra.mxu0 0
        %2529 = vmatprep.subr.bf16.mxu0 0
        %2530 = vmatpush1.bf16.msra.mxu0 0
        %2531 = vmatprep.subr.bf16.mxu0 0
        %2532 = vmatpush1.bf16.msra.mxu0 0
        %2533 = vmatprep.subr.bf16.mxu0 0
        %2534 = vmatpush1.bf16.msra.mxu0 0
        %2535 = vmatprep.subr.bf16.mxu0 0
        %2536 = vmatpush1.bf16.msra.mxu0 0
        %2537 = vmatprep.subr.bf16.mxu0 0
        %2538 = vmatpush1.bf16.msra.mxu0 0
        %2539 = vmatprep.subr.bf16.mxu0 0
        %2540 = vmatpush1.bf16.msra.mxu0 0
        %2541 = vmatprep.subr.bf16.mxu0 0
        %2542 = vmatpush1.bf16.msra.mxu0 0
        %2543 = vmatprep.subr.bf16.mxu0 0
        %2544 = vmatpush1.bf16.msra.mxu0 0
        %2545 = vmatprep.subr.bf16.mxu0 0
        %2546 = vmatpush1.bf16.msra.mxu0 0
        %2547 = vmatprep.subr.bf16.mxu0 0
        %2548 = vmatpush1.bf16.msra.mxu0 0
        %2549 = vmatprep.subr.bf16.mxu0 0
        %2550 = vmatpush1.bf16.msra.mxu0 0
        %2551 = vmatprep.subr.bf16.mxu0 0
        %2552 = vmatpush1.bf16.msra.mxu0 0
        %2553 = vmatprep.subr.bf16.mxu0 0
        %2554 = vmatpush1.bf16.msra.mxu0 0
        %2555 = vmatprep.mubr.bf16.mxu0 0
        %2556 = vmatmul.mubr.bf16.gmra.mrb[0].mxu0 %v2521
        %v2557 = vpop.f32.mrb[0].mxu0
        %v2558 = vadd.f32 0.0, %v2557
        %v2559 = vpop.f32.mrb[0].mxu0
        %v2560 = vpop.f32.mrb[0].mxu0
        %v2561 = vpop.f32.mrb[0].mxu0
        %2562 = vdwg.mxu0
        %v2564 = vsel %vm1893, %v2471, 0
        %2566 = vmatprep.subr.bf16.mxu0 0
        %2567 = vmatpush1.bf16.msra.mxu0 %v2475
        %2568 = vmatprep.subr.bf16.mxu0 0
        %2569 = vmatpush1.bf16.msra.mxu0 0
        %2570 = vmatprep.subr.bf16.mxu0 0
        %2571 = vmatpush1.bf16.msra.mxu0 0
        %2572 = vmatprep.subr.bf16.mxu0 0
        %2573 = vmatpush1.bf16.msra.mxu0 0
        %2574 = vmatprep.subr.bf16.mxu0 0
        %2575 = vmatpush1.bf16.msra.mxu0 0
        %2576 = vmatprep.subr.bf16.mxu0 0
        %2577 = vmatpush1.bf16.msra.mxu0 0
        %2578 = vmatprep.subr.bf16.mxu0 0
        %2579 = vmatpush1.bf16.msra.mxu0 0
        %2580 = vmatprep.subr.bf16.mxu0 0
        %2581 = vmatpush1.bf16.msra.mxu0 0
        %2582 = vmatprep.subr.bf16.mxu0 0
        %2583 = vmatpush1.bf16.msra.mxu0 0
        %2584 = vmatprep.subr.bf16.mxu0 0
        %2585 = vmatpush1.bf16.msra.mxu0 0
        %2586 = vmatprep.subr.bf16.mxu0 0
        %2587 = vmatpush1.bf16.msra.mxu0 0
        %2588 = vmatprep.subr.bf16.mxu0 0
        %2589 = vmatpush1.bf16.msra.mxu0 0
        %2590 = vmatprep.subr.bf16.mxu0 0
        %2591 = vmatpush1.bf16.msra.mxu0 0
        %2592 = vmatprep.subr.bf16.mxu0 0
        %2593 = vmatpush1.bf16.msra.mxu0 0
        %2594 = vmatprep.subr.bf16.mxu0 0
        %2595 = vmatpush1.bf16.msra.mxu0 0
        %2596 = vmatprep.subr.bf16.mxu0 0
        %2597 = vmatpush1.bf16.msra.mxu0 0
        %2598 = vmatprep.mubr.bf16.mxu0 0
        %2599 = vmatmul.mubr.bf16.gmra.mrb[0].mxu0 %v2564
        %v2600 = vpop.f32.mrb[0].mxu0
        %v2601 = vadd.f32 0.0, %v2600
        %v2602 = vpop.f32.mrb[0].mxu0
        %v2603 = vpop.f32.mrb[0].mxu0
        %v2604 = vpop.f32.mrb[0].mxu0
        %2605 = vdwg.mxu0
        %v2607 = vsel %vm1893, %v2472, 0
        %2609 = vmatprep.subr.bf16.mxu0 0
        %2610 = vmatpush1.bf16.msra.mxu0 %v2476
        %2611 = vmatprep.subr.bf16.mxu0 0
        %2612 = vmatpush1.bf16.msra.mxu0 0
        %2613 = vmatprep.subr.bf16.mxu0 0
        %2614 = vmatpush1.bf16.msra.mxu0 0
        %2615 = vmatprep.subr.bf16.mxu0 0
        %2616 = vmatpush1.bf16.msra.mxu0 0
        %2617 = vmatprep.subr.bf16.mxu0 0
        %2618 = vmatpush1.bf16.msra.mxu0 0
        %2619 = vmatprep.subr.bf16.mxu0 0
        %2620 = vmatpush1.bf16.msra.mxu0 0
        %2621 = vmatprep.subr.bf16.mxu0 0
        %2622 = vmatpush1.bf16.msra.mxu0 0
        %2623 = vmatprep.subr.bf16.mxu0 0
        %2624 = vmatpush1.bf16.msra.mxu0 0
        %2625 = vmatprep.subr.bf16.mxu0 0
        %2626 = vmatpush1.bf16.msra.mxu0 0
        %2627 = vmatprep.subr.bf16.mxu0 0
        %2628 = vmatpush1.bf16.msra.mxu0 0
        %2629 = vmatprep.subr.bf16.mxu0 0
        %2630 = vmatpush1.bf16.msra.mxu0 0
        %2631 = vmatprep.subr.bf16.mxu0 0
        %2632 = vmatpush1.bf16.msra.mxu0 0
        %2633 = vmatprep.subr.bf16.mxu0 0
        %2634 = vmatpush1.bf16.msra.mxu0 0
        %2635 = vmatprep.subr.bf16.mxu0 0
        %2636 = vmatpush1.bf16.msra.mxu0 0
        %2637 = vmatprep.subr.bf16.mxu0 0
        %2638 = vmatpush1.bf16.msra.mxu0 0
        %2639 = vmatprep.subr.bf16.mxu0 0
        %2640 = vmatpush1.bf16.msra.mxu0 0
        %2641 = vmatprep.mubr.bf16.mxu0 0
        %2642 = vmatmul.mubr.bf16.gmra.mrb[0].mxu0 %v2607
        %v2643 = vpop.f32.mrb[0].mxu0
        %v2644 = vadd.f32 0.0, %v2643
        %v2645 = vpop.f32.mrb[0].mxu0
        %v2646 = vpop.f32.mrb[0].mxu0
        %v2647 = vpop.f32.mrb[0].mxu0
        %2648 = vdwg.mxu0
        %2650 = vrot.lane.b32.xlu0 %v2558, 8
        %v2651 = vpop.permute.xlu0 %2650
        %2654 = vrot.lane.b32.xlu0 %v2601, 16
        %v2655 = vpop.permute.xlu0 %2654
        %2658 = vrot.lane.b32.xlu0 %v2644, 24
        %v2659 = vpop.permute.xlu0 %2658
        %v2661 = vsel %vm1449, %v2515, %v2651
        %v2662 = vsel %vm1893, %v2661, %v2655
        %v2663 = vsel %vm1895, %v2662, %v2659
        %v2664 = vsel %vm1893, %v2465, 0.0
        %v2665 = vsel %vm1893, %v2466, 0.0
        %v2666 = vadd.f32 %v2664, %v2665
        %v2667 = vsel %vm1893, %v2467, 0.0
        %v2668 = vadd.f32 %v2666, %v2667
        %v2669 = vsel %vm1893, %v2468, 0.0
        %v2670 = vadd.f32 %v2668, %v2669
        %v2671 = vmul.f32 %v2670, %v1904
        %v2672 = vpack.c.bf16 %v2663, %v2663
        %v2673 = vld [vmem:[%s1055] sm:$0xf]
        %v2674 = vld [vmem:[%s1055 + $0x4] sm:$0xf]
        %v2675 = vld [vmem:[%s1055 + $0x8] sm:$0xf]
        %v2676 = vld [vmem:[%s1055 + $0xc] sm:$0xf]
        %v2677 = vld [vmem:[%s1250] sm:$0x1]
        %v2679 = vlaneseq
        %v2680 = vshrl.u32 %v2679, 7
        %v2681 = vsub.s32 0, %v2680
        %v2682 = vrot.slane %v2677, %v2681
        %v2688 = vunpack.c.l.b16 %v2673
        %v2689 = vunpack.c.l.b16 %v2674
        %v2690 = vunpack.c.l.b16 %v2675
        %v2691 = vunpack.c.l.b16 %v2676
        %v2692 = vpack.c.b16 %v2689, %v2688
        %v2693 = vpack.c.b16 %v2691, %v2690
        %v2697 = vsel %vm1325, %v2672, 0
        %2699 = vmatprep.subr.bf16.mxu0 0
        %2700 = vmatpush1.bf16.msra.mxu0 %v2692
        %2701 = vmatprep.subr.bf16.mxu0 0
        %2702 = vmatpush1.bf16.msra.mxu0 %v2693
        %2703 = vmatprep.subr.bf16.mxu0 0
        %2704 = vmatpush1.bf16.msra.mxu0 0
        %2705 = vmatprep.subr.bf16.mxu0 0
        %2706 = vmatpush1.bf16.msra.mxu0 0
        %2707 = vmatprep.subr.bf16.mxu0 0
        %2708 = vmatpush1.bf16.msra.mxu0 0
        %2709 = vmatprep.subr.bf16.mxu0 0
        %2710 = vmatpush1.bf16.msra.mxu0 0
        %2711 = vmatprep.subr.bf16.mxu0 0
        %2712 = vmatpush1.bf16.msra.mxu0 0
        %2713 = vmatprep.subr.bf16.mxu0 0
        %2714 = vmatpush1.bf16.msra.mxu0 0
        %2715 = vmatprep.subr.bf16.mxu0 0
        %2716 = vmatpush1.bf16.msra.mxu0 0
        %2717 = vmatprep.subr.bf16.mxu0 0
        %2718 = vmatpush1.bf16.msra.mxu0 0
        %2719 = vmatprep.subr.bf16.mxu0 0
        %2720 = vmatpush1.bf16.msra.mxu0 0
        %2721 = vmatprep.subr.bf16.mxu0 0
        %2722 = vmatpush1.bf16.msra.mxu0 0
        %2723 = vmatprep.subr.bf16.mxu0 0
        %2724 = vmatpush1.bf16.msra.mxu0 0
        %2725 = vmatprep.subr.bf16.mxu0 0
        %2726 = vmatpush1.bf16.msra.mxu0 0
        %2727 = vmatprep.subr.bf16.mxu0 0
        %2728 = vmatpush1.bf16.msra.mxu0 0
        %2729 = vmatprep.subr.bf16.mxu0 0
        %2730 = vmatpush1.bf16.msra.mxu0 0
        %2731 = vmatprep.mubr.bf16.mxu0 0
        %2732 = vmatmul.mubr.bf16.gmra.mrb[0].mxu0 %v2697
        %v2733 = vpop.f32.mrb[0].mxu0
        %v2734 = vadd.f32 %v2682, %v2733
        %v2735 = vpop.f32.mrb[0].mxu0
        %v2736 = vpop.f32.mrb[0].mxu0
        %v2737 = vpop.f32.mrb[0].mxu0
        %2738 = vdwg.mxu0
        %v2739 = vadd.f32 %v2003, %v2734
        %v2740 = vld [vmem:[%s1270] sm:$0x1]
        %v2741 = vld [vmem:[%s1273] sm:$0x1]
        %v2742 = vsel %vm1325, %v2739, 0.0
        %2743 = vadd.xlane.f32.xlu0 %v2742
        %v2744 = vpop.xlane.xlu0 %2743
        %v2745 = vmul.f32 %v2744, %v1979
        %v2746 = vsub.f32 %v2739, %v2745
        %v2747 = vmul.f32 %v2746, %v2746
        %v2748 = vsel %vm1325, %v2747, 0.0
        %2749 = vadd.xlane.f32.xlu0 %v2748
        %v2750 = vpop.xlane.xlu0 %2749
        %v2751 = vmul.f32 %v2750, %v1979
        %v2752 = vadd.f32 %v2751, 1e-05
        %v2753 = vrsqrt.pop %v2752
        %v2754 = vmul.f32 %v2746, %v2753
        %v2756 = vlaneseq
        %v2757 = vshrl.u32 %v2756, 7
        %v2758 = vsub.s32 0, %v2757
        %v2759 = vrot.slane %v2740, %v2758
        %v2761 = vmul.f32 %v2754, %v2759
        %v2763 = vlaneseq
        %v2764 = vshrl.u32 %v2763, 7
        %v2765 = vsub.s32 0, %v2764
        %v2766 = vrot.slane %v2741, %v2765
        %v2768 = vadd.f32 %v2761, %v2766
        %v2769 = vpack.c.bf16 %v2671, %v2671
        %vm2770 = vcmask 125952
        %2771 = vst.msk [vmem:[%s1223] sm:$0xf] %vm2770, %v2769
        %v2772 = vpack.c.bf16 %v2768, %v2768
        %v2773 = vld [vmem:[%s1064] sm:$0xf]
        %v2774 = vld [vmem:[%s1064 + $0x4] sm:$0xf]
        %v2775 = vld [vmem:[%s1064 + $0x8] sm:$0xf]
        %v2776 = vld [vmem:[%s1064 + $0xc] sm:$0xf]
        %v2777 = vld [vmem:[%s1253] sm:$0x1]
        %v2779 = vlaneseq
        %v2780 = vshrl.u32 %v2779, 7
        %v2781 = vsub.s32 0, %v2780
        %v2782 = vrot.slane %v2777, %v2781
        %v2788 = vunpack.c.l.b16 %v2773
        %v2789 = vunpack.c.l.b16 %v2774
        %v2790 = vunpack.c.l.b16 %v2775
        %v2791 = vunpack.c.l.b16 %v2776
        %v2792 = vpack.c.b16 %v2789, %v2788
        %v2793 = vpack.c.b16 %v2791, %v2790
        %v2797 = vsel %vm1325, %v2772, 0
        %2799 = vmatprep.subr.bf16.mxu0 0
        %2800 = vmatpush1.bf16.msra.mxu0 %v2792
        %2801 = vmatprep.subr.bf16.mxu0 0
        %2802 = vmatpush1.bf16.msra.mxu0 %v2793
        %2803 = vmatprep.subr.bf16.mxu0 0
        %2804 = vmatpush1.bf16.msra.mxu0 0
        %2805 = vmatprep.subr.bf16.mxu0 0
        %2806 = vmatpush1.bf16.msra.mxu0 0
        %2807 = vmatprep.subr.bf16.mxu0 0
        %2808 = vmatpush1.bf16.msra.mxu0 0
        %2809 = vmatprep.subr.bf16.mxu0 0
        %2810 = vmatpush1.bf16.msra.mxu0 0
        %2811 = vmatprep.subr.bf16.mxu0 0
        %2812 = vmatpush1.bf16.msra.mxu0 0
        %2813 = vmatprep.subr.bf16.mxu0 0
        %2814 = vmatpush1.bf16.msra.mxu0 0
        %2815 = vmatprep.subr.bf16.mxu0 0
        %2816 = vmatpush1.bf16.msra.mxu0 0
        %2817 = vmatprep.subr.bf16.mxu0 0
        %2818 = vmatpush1.bf16.msra.mxu0 0
        %2819 = vmatprep.subr.bf16.mxu0 0
        %2820 = vmatpush1.bf16.msra.mxu0 0
        %2821 = vmatprep.subr.bf16.mxu0 0
        %2822 = vmatpush1.bf16.msra.mxu0 0
        %2823 = vmatprep.subr.bf16.mxu0 0
        %2824 = vmatpush1.bf16.msra.mxu0 0
        %2825 = vmatprep.subr.bf16.mxu0 0
        %2826 = vmatpush1.bf16.msra.mxu0 0
        %2827 = vmatprep.subr.bf16.mxu0 0
        %2828 = vmatpush1.bf16.msra.mxu0 0
        %2829 = vmatprep.subr.bf16.mxu0 0
        %2830 = vmatpush1.bf16.msra.mxu0 0
        %2831 = vmatprep.mubr.bf16.mxu0 0
        %2832 = vmatmul.mubr.bf16.gmra.mrb[0].mxu0 %v2797
        %v2833 = vpop.f32.mrb[0].mxu0
        %v2834 = vadd.f32 %v2782, %v2833
        %v2835 = vpop.f32.mrb[0].mxu0
        %v2836 = vpop.f32.mrb[0].mxu0
        %v2837 = vpop.f32.mrb[0].mxu0
        %2838 = vdwg.mxu0
        %v2839 = vmax.f32 %v2834, 0.0
        %v2840 = vpack.c.bf16 %v2839, %v2839
        %v2841 = vld [vmem:[%s1258] sm:$0xf]
        %v2842 = vld [vmem:[%s1258 + $0x4] sm:$0xf]
        %v2843 = vld [vmem:[%s1258 + $0x8] sm:$0xf]
        %v2844 = vld [vmem:[%s1258 + $0xc] sm:$0xf]
        %v2845 = vld [vmem:[%s1258 + $0x10] sm:$0xf]
        %v2846 = vld [vmem:[%s1258 + $0x14] sm:$0xf]
        %v2847 = vld [vmem:[%s1258 + $0x18] sm:$0xf]
        %v2848 = vld [vmem:[%s1258 + $0x1c] sm:$0xf]
        %v2849 = vld [vmem:[%s1261] sm:$0x1]
        %v2851 = vlaneseq
        %v2852 = vshrl.u32 %v2851, 7
        %v2853 = vsub.s32 0, %v2852
        %v2854 = vrot.slane %v2849, %v2853
        %v2864 = vunpack.c.l.b16 %v2841
        %v2865 = vunpack.c.l.b16 %v2842
        %v2866 = vunpack.c.l.b16 %v2843
        %v2867 = vunpack.c.l.b16 %v2844
        %v2868 = vunpack.c.l.b16 %v2845
        %v2869 = vunpack.c.l.b16 %v2846
        %v2870 = vunpack.c.l.b16 %v2847
        %v2871 = vunpack.c.l.b16 %v2848
        %v2872 = vpack.c.b16 %v2865, %v2864
        %v2873 = vpack.c.b16 %v2867, %v2866
        %v2874 = vpack.c.b16 %v2869, %v2868
        %v2875 = vpack.c.b16 %v2871, %v2870
        %vm2880 = vcmask 523264
        %v2882 = vsel %vm2880, %v2840, 0
        %2884 = vmatprep.subr.bf16.mxu0 0
        %2885 = vmatpush1.bf16.msra.mxu0 %v2872
        %2886 = vmatprep.subr.bf16.mxu0 0
        %2887 = vmatpush1.bf16.msra.mxu0 %v2873
        %2888 = vmatprep.subr.bf16.mxu0 0
        %2889 = vmatpush1.bf16.msra.mxu0 %v2874
        %2890 = vmatprep.subr.bf16.mxu0 0
        %2891 = vmatpush1.bf16.msra.mxu0 %v2875
        %2892 = vmatprep.subr.bf16.mxu0 0
        %2893 = vmatpush1.bf16.msra.mxu0 0
        %2894 = vmatprep.subr.bf16.mxu0 0
        %2895 = vmatpush1.bf16.msra.mxu0 0
        %2896 = vmatprep.subr.bf16.mxu0 0
        %2897 = vmatpush1.bf16.msra.mxu0 0
        %2898 = vmatprep.subr.bf16.mxu0 0
        %2899 = vmatpush1.bf16.msra.mxu0 0
        %2900 = vmatprep.subr.bf16.mxu0 0
        %2901 = vmatpush1.bf16.msra.mxu0 0
        %2902 = vmatprep.subr.bf16.mxu0 0
        %2903 = vmatpush1.bf16.msra.mxu0 0
        %2904 = vmatprep.subr.bf16.mxu0 0
        %2905 = vmatpush1.bf16.msra.mxu0 0
        %2906 = vmatprep.subr.bf16.mxu0 0
        %2907 = vmatpush1.bf16.msra.mxu0 0
        %2908 = vmatprep.subr.bf16.mxu0 0
        %2909 = vmatpush1.bf16.msra.mxu0 0
        %2910 = vmatprep.subr.bf16.mxu0 0
        %2911 = vmatpush1.bf16.msra.mxu0 0
        %2912 = vmatprep.subr.bf16.mxu0 0
        %2913 = vmatpush1.bf16.msra.mxu0 0
        %2914 = vmatprep.subr.bf16.mxu0 0
        %2915 = vmatpush1.bf16.msra.mxu0 0
        %2916 = vmatprep.mubr.bf16.mxu0 0
        %2917 = vmatmul.mubr.bf16.gmra.mrb[0].mxu0 %v2882
        %v2918 = vpop.f32.mrb[0].mxu0
        %v2919 = vadd.f32 %v2854, %v2918
        %v2920 = vpop.f32.mrb[0].mxu0
        %v2921 = vpop.f32.mrb[0].mxu0
        %v2922 = vpop.f32.mrb[0].mxu0
        %2923 = vdwg.mxu0
        %v2924 = vadd.f32 %v2768, %v2919
        %v2925 = vld [vmem:[%s1276] sm:$0x1]
        %v2926 = vld [vmem:[%s1279] sm:$0x1]
        %v2927 = vsel %vm1325, %v2924, 0.0
        %2928 = vadd.xlane.f32.xlu0 %v2927
        %v2929 = vpop.xlane.xlu0 %2928
        %v2930 = vmul.f32 %v2929, %v1979
        %v2931 = vsub.f32 %v2924, %v2930
        %v2932 = vmul.f32 %v2931, %v2931
        %v2933 = vsel %vm1325, %v2932, 0.0
        %2934 = vadd.xlane.f32.xlu0 %v2933
        %v2935 = vpop.xlane.xlu0 %2934
        %v2936 = vmul.f32 %v2935, %v1979
        %v2937 = vadd.f32 %v2936, 1e-05
        %v2938 = vrsqrt.pop %v2937
        %v2939 = vmul.f32 %v2931, %v2938
        %v2941 = vlaneseq
        %v2942 = vshrl.u32 %v2941, 7
        %v2943 = vsub.s32 0, %v2942
        %v2944 = vrot.slane %v2925, %v2943
        %v2946 = vmul.f32 %v2939, %v2944
        %v2948 = vlaneseq
        %v2949 = vshrl.u32 %v2948, 7
        %v2950 = vsub.s32 0, %v2949
        %v2951 = vrot.slane %v2926, %v2950
        %v2953 = vadd.f32 %v2946, %v2951
        %2954 = vst.msk [vmem:[#allocation2] sm:$0xff] %vm1325, %v2953
        %p2955 = scmp.eq.s32.totalorder %s61, 1
        // Predicated region
        $region145: #{tpu_custom_call.1} parent=115 // pred_check
          %p2956 = pneg %p2955
        $region146: #{tpu_custom_call.1} parent=115 // pred_check_branch
          %2958 = sbr.rel (%p2956) target = $region148
        $region147: #{tpu_custom_call.1} parent=115 // pred_region
          %v2959 = vld [vmem:[%s22] sm:$0x1]
          %v2960 = vld [vmem:[%s23] sm:$0x1]
          %v2961 = vsel %vm1325, %v2953, 0.0
          %2962 = vadd.xlane.f32.xlu0 %v2961
          %v2963 = vpop.xlane.xlu0 %2962
          %v2964 = vmul.f32 %v2963, %v1979
          %v2965 = vsub.f32 %v2953, %v2964
          %v2966 = vmul.f32 %v2965, %v2965
          %v2967 = vsel %vm1325, %v2966, 0.0
          %2968 = vadd.xlane.f32.xlu0 %v2967
          %v2969 = vpop.xlane.xlu0 %2968
          %v2970 = vmul.f32 %v2969, %v1979
          %v2971 = vadd.f32 %v2970, 1e-05
          %v2972 = vrsqrt.pop %v2971
          %v2973 = vmul.f32 %v2965, %v2972
          %v2975 = vlaneseq
          %v2976 = vshrl.u32 %v2975, 7
          %v2977 = vsub.s32 0, %v2976
          %v2978 = vrot.slane %v2959, %v2977
          %v2980 = vmul.f32 %v2973, %v2978
          %v2982 = vlaneseq
          %v2983 = vshrl.u32 %v2982, 7
          %v2984 = vsub.s32 0, %v2983
          %v2985 = vrot.slane %v2960, %v2984
          %v2987 = vadd.f32 %v2980, %v2985
          %2988 = vst.msk [vmem:[%s1209] sm:$0xff] %vm1325, %v2987
        $region148: #{tpu_custom_call.1} parent=115 // pred_fallthru
          _
        %s2989 = sand.u32 %s690, 1
        %s2990 = scalar_lea.sflag [#allocation7], %s2989
        %s2991 = sand.u32 %s690, 1
        %s2992 = smul.addr %s2991, 8
        %s2993 = scalar_lea.vmem [#allocation16], %s2992
        %s2994 = sand.u32 %s56, 1
        %s2995 = scalar_lea.sflag [#allocation18], %s2994
        %s2996 = sand.u32 %s718, 1
        %s2997 = smul.addr %s2996, 4
        %s2998 = scalar_lea.vmem [#allocation17], %s2997
        %s2999 = sand.u32 %s56, 1
        %s3000 = scalar_lea.sflag [#allocation18], %s2999
        %s3001 = sand.u32 %s746, 1
        %s3002 = smul.addr %s3001, 4
        %s3003 = scalar_lea.vmem [#allocation19], %s3002
        // Predicated region
        $region149: #{tpu_custom_call.1} parent=115 // pred_check
          %p3004 = pneg %p700
        $region150: #{tpu_custom_call.1} parent=115 // pred_check_branch
          %3006 = sbr.rel (%p3004) target = $region152
        $region151: #{tpu_custom_call.1} parent=115 // pred_region
          %s3008 = ssub.s32 128, 128
          %3009 = vsyncadd %s2990, %s3008
          %s3010 = smul.addr %s60, 128
          %s3011 = scalar_lea.hbm %s24, %s3010
          %s3013 = sshll.u32 %s2993, 4
          %s3014 = int_to_ptr.vmem [resolvable:$true] %s3013
          %3016 = dma.vmem_to_hbm [thread:$0]  %s3014, 128, %s3011, %s2990
        $region152: #{tpu_custom_call.1} parent=115 // pred_fallthru
          _
        // Predicated region
        $region153: #{tpu_custom_call.1} parent=115 // pred_check
          %p3017 = pneg %p728
        $region154: #{tpu_custom_call.1} parent=115 // pred_check_branch
          %3019 = sbr.rel (%p3017) target = $region156
        $region155: #{tpu_custom_call.1} parent=115 // pred_region
          %s3021 = ssub.s32 64, 64
          %3022 = vsyncadd %s2995, %s3021
          %s3023 = smul.addr %s60, 2
          %s3024 = sadd.s32 %s61, %s3023
          %s3025 = smul.addr %s3024, 64
          %s3026 = scalar_lea.hbm %s25, %s3025
          %s3028 = sshll.u32 %s2998, 4
          %s3029 = int_to_ptr.vmem [resolvable:$true] %s3028
          %3031 = dma.vmem_to_hbm [thread:$0]  %s3029, 64, %s3026, %s2995
        $region156: #{tpu_custom_call.1} parent=115 // pred_fallthru
          _
        // Predicated region
        $region157: #{tpu_custom_call.1} parent=115 // pred_check
          %p3032 = pneg %p756
        $region158: #{tpu_custom_call.1} parent=115 // pred_check_branch
          %3034 = sbr.rel (%p3032) target = $region160
        $region159: #{tpu_custom_call.1} parent=115 // pred_region
          %s3036 = ssub.s32 64, 64
          %3037 = vsyncadd %s3000, %s3036
          %s3038 = smul.addr %s60, 2
          %s3039 = sadd.s32 %s61, %s3038
          %s3040 = smul.addr %s3039, 64
          %s3041 = scalar_lea.hbm %s26, %s3040
          %s3043 = sshll.u32 %s3003, 4
          %s3044 = int_to_ptr.vmem [resolvable:$true] %s3043
          %3046 = dma.vmem_to_hbm [thread:$0]  %s3044, 64, %s3041, %s3000
        $region160: #{tpu_custom_call.1} parent=115 // pred_fallthru
          _
      $region116: #{tpu_custom_call.1} parent=5 // pred_fallthru
        _
      %p3047 = scmp.le.s32.totalorder 2, %s51
      // Predicated region
      $region161: #{tpu_custom_call.1} parent=5 // pred_check
        %p3048 = pneg %p3047
      $region162: #{tpu_custom_call.1} parent=5 // pred_check_branch
        %3050 = sbr.rel (%p3048) target = $region164
      $region163: #{tpu_custom_call.1} parent=5 // pred_region
        %s3051 = ssub.s32 %s51, 2
        // Predicated region
        $region165: #{tpu_custom_call.1} parent=163 // pred_check
          %p3052 = pneg %p706
        $region166: #{tpu_custom_call.1} parent=163 // pred_check_branch
          %3054 = sbr.rel (%p3052) target = $region168
        $region167: #{tpu_custom_call.1} parent=163 // pred_region
          %s3055 = sand.u32 %s691, 1
          %s3056 = scalar_lea.sflag [#allocation7], %s3055
          %s3057 = sand.u32 %s691, 1
          %s3058 = smul.addr %s3057, 8
          %s3059 = scalar_lea.vmem [#allocation16], %s3058
          %3060 = dma.done %s3056, 128
        $region168: #{tpu_custom_call.1} parent=163 // pred_fallthru
          _
        // Predicated region
        $region169: #{tpu_custom_call.1} parent=163 // pred_check
          %p3061 = pneg %p734
        $region170: #{tpu_custom_call.1} parent=163 // pred_check_branch
          %3063 = sbr.rel (%p3061) target = $region172
        $region171: #{tpu_custom_call.1} parent=163 // pred_region
          %s3064 = sand.u32 %s57, 1
          %s3065 = scalar_lea.sflag [#allocation18], %s3064
          %s3066 = sand.u32 %s719, 1
          %s3067 = smul.addr %s3066, 4
          %s3068 = scalar_lea.vmem [#allocation17], %s3067
          %3069 = dma.done %s3065, 64
        $region172: #{tpu_custom_call.1} parent=163 // pred_fallthru
          _
        // Predicated region
        $region173: #{tpu_custom_call.1} parent=163 // pred_check
          %p3070 = pneg %p762
        $region174: #{tpu_custom_call.1} parent=163 // pred_check_branch
          %3072 = sbr.rel (%p3070) target = $region176
        $region175: #{tpu_custom_call.1} parent=163 // pred_region
          %s3073 = sand.u32 %s57, 1
          %s3074 = scalar_lea.sflag [#allocation18], %s3073
          %s3075 = sand.u32 %s747, 1
          %s3076 = smul.addr %s3075, 4
          %s3077 = scalar_lea.vmem [#allocation19], %s3076
          %3078 = dma.done %s3074, 64
        $region176: #{tpu_custom_call.1} parent=163 // pred_fallthru
          _
      $region164: #{tpu_custom_call.1} parent=5 // pred_fallthru
        _
    $region6: #{tpu_custom_call.1} parent=1 // loop_footer
      %s55 = sadd.s32 1, %s51
    $region7: #{tpu_custom_call.1} parent=1 // loop_footer_branch
      %50 = sbr.rel target = $region3
    $region8: #{tpu_custom_call.1} parent=1 // loop_exit
      _
    %3079 = vsyncpa [#allocation6], 1
    %s3080 = scalar_lea.sflag [#allocation6], 1
    %3081 = vsyncpa %s3080, 1
    %3082 = vsyncpa [#allocation9], 1
    %s3083 = scalar_lea.sflag [#allocation9], 1
    %3084 = vsyncpa %s3083, 1
    %3085 = vsyncpa [#allocation12], 1
    %s3086 = scalar_lea.sflag [#allocation12], 1
    %3087 = vsyncpa %s3086, 1
    %3088 = vsyncpa [#allocation15], 1
    %s3089 = scalar_lea.sflag [#allocation15], 1
    %3090 = vsyncpa %s3089, 1
    %3091 = vsyncpa [#allocation7], 1
    %s3092 = scalar_lea.sflag [#allocation7], 1
    %3093 = vsyncpa %s3092, 1
    %3094 = vsyncpa [#allocation18], 1
    %s3095 = scalar_lea.sflag [#allocation18], 1
    %3096 = vsyncpa %s3095, 1

</llo_original>
